<compile_context>
chip_gen: v7x
topology: tpu7x:2x2x1
jax: 0.10.0
libtpu: 0.0.40
codegen_flags: <defaults>
</compile_context>

<pallas_src>
import jax
import jax.numpy as jnp
from jax import lax
from jax.experimental import pallas as pl
from jax.experimental.pallas import tpu as pltpu

# ----------------------------- static config --------------------------------
E = 8                      # number of edges (<= 64 -> reference full-attention path)
N_NODES = 6
HIDDEN = 8
NUM_HEADS = 8              # head_dim = hidden // heads = 1 (required, see assert)
HEAD_DIM = HIDDEN // NUM_HEADS
NUM_RADIAL = 16
CUTOFF = 10.0
B = 2                      # two attention instances: 0 = intra, 1 = inter
P = E * E                  # flattened (i, j) edge pairs
L = B * NUM_HEADS          # lane axis of per-(instance, head) quantities  (16)
F = B * NUM_HEADS * HIDDEN # lane axis of attention-MLP hidden activations (128)
BH = B * HIDDEN            # lane axis of per-(instance, feature) tensors   (16)
BR = B * NUM_RADIAL        # lane axis of per-(instance, radial) rbf        (32)
NEG = -1e30                # stands in for -inf; every softmax row keeps its diagonal
LN_EPS = 1e-5

# The reference `_full_attention` does `updated_features += weighted_v / H`
# with shapes [E, hidden] += [E, head_dim]; that broadcast (and the column-sum
# folding of out_proj below) is only valid when head_dim == 1.
assert HEAD_DIM == 1


# ------------------------------ fused kernel ---------------------------------
def esa3d_fused_kernel(
    ef2_ref, ecoord_ref, cc_ref, mask_ref,
    wq_ref, wk_ref, wv_ref,
    cen_ref, wid_ref,
    w1q_ref, w1k_ref, w1d_ref, w1r_ref, b1_ref,
    w2_ref, b2_ref, w3_ref, b3_ref,
    wg1_ref, bg1_ref, wg2_ref, bg2_ref,
    wo_ref, bo_ref,
    mavg_ref, gamma_ref, beta_ref,
    wf1_ref, bf1_ref, wf2_ref, bf2_ref,
    wc_ref, bc_ref,
    feat_out_ref, coord_out_ref,
):
    f32 = jnp.float32
    NH = NUM_HEADS

    def mm(a, b):
        return jnp.dot(a, b, preferred_element_type=f32)

    def silu(x):
        return x * jax.nn.sigmoid(x)

    ef2 = ef2_ref[...]        # [E, 2H]   edge features tiled (intra | inter lanes)
    ecoord = ecoord_ref[...]  # [E, 3]    equivariant edge feature
    cc = cc_ref[...]          # [E, 3]    edge-center coordinates
    mask_l = mask_ref[...]    # [E, E, L] attention masks expanded to (instance, head)

    # ---- q/k/v for all (instance, head) at once; head_dim == 1 so column
    #      (b*NH + h) is exactly head h of instance b --------------------------
    q = mm(ef2, wq_ref[...])          # [E, L]
    k = mm(ef2, wk_ref[...])          # [E, L]
    v = mm(ef2, wv_ref[...])          # [E, L]

    # ---- pairwise geometry (shared by both instances) -----------------------
    diff = cc[:, None, :] - cc[None, :, :]                            # [E, E, 3]
    dist3 = jnp.sqrt(jnp.sum(diff * diff, axis=2, keepdims=True))     # [E, E, 1]
    within3 = dist3 <= CUTOFF                                         # [E, E, 1]
    dist = dist3.reshape(P, 1)                                        # [P, 1]

    # radial basis, lanes = (instance, radial); RBF cutoff mask applied
    rbf = jnp.exp(-wid_ref[...] * (dist - cen_ref[...]) ** 2)         # [P, BR]
    rbf = rbf * (dist <= CUTOFF).astype(f32)

    # pair-space broadcasts (replaces the old SelI/SelJ one-hot matmuls)
    q_i = jnp.broadcast_to(q[:, None, :], (E, E, L)).reshape(P, L)    # q[i(p)]
    k_j = jnp.broadcast_to(k[None, :, :], (E, E, L)).reshape(P, L)    # k[j(p)]
    qk = q_i * k_j                       # per-head q.k (head_dim == 1)

    # ---- attention MLP, batched over every (pair, instance, head) -----------
    pre1 = (mm(q_i, w1q_ref[...]) + mm(k_j, w1k_ref[...]) + mm(qk, w1d_ref[...])
            + mm(rbf, w1r_ref[...]) + b1_ref[...])                    # [P, F]
    h1 = silu(pre1)
    h2 = silu(mm(h1, w2_ref[...]) + b2_ref[...])                      # [P, F]
    score = mm(h2, w3_ref[...]) + b3_ref[...]                         # [P, L]

    # ---- masking + per-row softmax over j ------------------------------------
    ii = lax.broadcasted_iota(jnp.int32, (E, E, 1), 0)
    jj = lax.broadcasted_iota(jnp.int32, (E, E, 1), 1)
    keep = jnp.logical_and(jnp.logical_or(ii == jj, within3), mask_l > 0.5)
    s3 = jnp.where(keep, score.reshape(E, E, L), NEG)                 # [E, E, L]
    m = jnp.max(s3, axis=1, keepdims=True)                            # [E, 1, L]
    ex = jnp.exp(s3 - m)
    den = jnp.sum(ex, axis=1, keepdims=True)                          # [E, 1, L]
    attn = ex / den                                                   # [E, E, L]

    # ---- feature update + out_proj + residual + LayerNorm + fusion MLP -------
    # weighted_v per (instance, head); softmax rows sum to 1 (diagonal always kept)
    wv_h = jnp.sum(attn * v[None, :, :], axis=1)                      # [E, L]
    # out_proj folded to colsum(wo)/NH (feature accumulator is constant over hidden)
    resid = ef2 + mm(wv_h, wo_ref[...]) + bo_ref[...]                 # [E, 2H]
    mu = mm(resid, mavg_ref[...])             # per-instance block mean
    xc = resid - mu
    var = mm(xc * xc, mavg_ref[...])          # per-instance biased variance
    ln = xc * lax.rsqrt(var + LN_EPS) * gamma_ref[...] + beta_ref[...]  # [E, 2H]

    fh = silu(mm(ln, wf1_ref[...]) + bf1_ref[...])                    # [E, H]
    feat_out_ref[...] = mm(fh, wf2_ref[...]) + bf2_ref[...]

    # ---- equivariant coordinate update + coord fusion -------------------------
    # gate MLP batched over (instance, head); gate is indexed by i (row), as in
    # the reference _full_attention.
    gate = jax.nn.sigmoid(
        mm(silu(mm(v, wg1_ref[...]) + bg1_ref[...]), wg2_ref[...]) + bg2_ref[...]
    )                                                                 # [E, L]
    gated = attn * gate[:, None, :]                                   # [E, E, L]
    g0 = jnp.sum(gate[:, :NH], axis=1, keepdims=True)                 # [E, 1] intra
    g1 = jnp.sum(gate[:, NH:], axis=1, keepdims=True)                 # [E, 1] inter

    wc = wc_ref[...]                                                  # [6, 3]
    # final = (ecoord + cu_intra) @ wc[:3] + (ecoord + cu_inter) @ wc[3:] + bc
    coord_out = jnp.zeros((E, 3), f32) + bc_ref[...]
    coord_out = coord_out + mm(ecoord, wc[0:3, :] + wc[3:6, :])
    inv_h = 1.0 / NH
    for c in range(3):                      # 3 tiny iterations over x/y/z
        ccj = cc[:, c:c + 1]                                          # [E, 1]
        acc_c = jnp.sum(gated * ccj[None, :, :], axis=1)              # [E, L]
        a0 = jnp.sum(acc_c[:, :NH], axis=1, keepdims=True)            # [E, 1]
        a1 = jnp.sum(acc_c[:, NH:], axis=1, keepdims=True)
        cu0 = (g0 * ccj - a0) * inv_h       # intra coord update, column c
        cu1 = (g1 * ccj - a1) * inv_h       # inter coord update, column c
        coord_out = coord_out + cu0 * wc[c:c + 1, :] + cu1 * wc[3 + c:4 + c, :]
    coord_out_ref[...] = coord_out


# ---------------------- host-side weight combination --------------------------
def _blockdiag(a, b):
    za = jnp.zeros((a.shape[0], b.shape[1]), jnp.float32)
    zb = jnp.zeros((b.shape[0], a.shape[1]), jnp.float32)
    return jnp.concatenate(
        [jnp.concatenate([a, za], axis=1), jnp.concatenate([zb, b], axis=1)], axis=0)


def _head_select(col_weights):
    # col_weights [H, NH]  ->  [NH*H, NH] with block (h, h) = col_weights[:, h]
    eye_h = jnp.eye(NUM_HEADS, dtype=jnp.float32)
    m = eye_h[:, None, :] * col_weights.T[:, :, None]          # [NH, H, NH]
    return m.reshape(NUM_HEADS * HIDDEN, NUM_HEADS)


def build_fused_params(intra, inter, fusion):
    """Combine the two attention instances into block-diagonal / tiled weights
    so the kernel works on (instance, head)-packed lanes.  Called once."""
    NH, H = NUM_HEADS, HIDDEN
    eye_nh = jnp.eye(NH, dtype=jnp.float32)

    def per_instance(p):
        return dict(
            wq=p["wq"], wk=p["wk"], wv=p["wv"],
            cen=p["rbf_centers"], wid=p["rbf_widths"],
            w1q=jnp.kron(eye_nh, p["w1q"]),          # [NH, NH*H]
            w1k=jnp.kron(eye_nh, p["w1k"]),
            w1d=jnp.kron(eye_nh, p["w1d"]),
            w1r=jnp.tile(p["w1r"], (1, NH)),         # [R, NH*H]
            b1=jnp.tile(p["b1"], (1, NH)),
            w2=jnp.kron(eye_nh, p["w2"]),            # [NH*H, NH*H]
            b2=jnp.tile(p["b2"], (1, NH)),
            w3=_head_select(p["w3"]),                # [NH*H, NH]
            b3=p["b3"],
            wg1=jnp.kron(eye_nh, p["wg1"]),          # [NH, NH*H]
            bg1=jnp.tile(p["bg1"], (1, NH)),
            wg2=_head_select(jnp.broadcast_to(p["wg2"], (H, NH))),   # [NH*H, NH]
            bg2=jnp.tile(p["bg2"], (1, NH)),
            # out_proj folded: accumulated feature is constant over hidden, so
            # out_proj(acc)[.,f'] = s * colsum(wo)[f'];  /NH hoisted in here too.
            wo=jnp.ones((NH, 1), jnp.float32) @ (jnp.sum(p["wo"], axis=0, keepdims=True) / NH),
            bo=p["bo"], gamma=p["gamma"], beta=p["beta"],
        )

    a, b = per_instance(intra), per_instance(inter)
    cat = lambda x, y: jnp.concatenate([x, y], axis=1)
    mavg_half = jnp.full((H, H), 1.0 / H, jnp.float32)
    return {
        "wq": _blockdiag(a["wq"], b["wq"]), "wk": _blockdiag(a["wk"], b["wk"]),
        "wv": _blockdiag(a["wv"], b["wv"]),
        "cen": cat(a["cen"], b["cen"]), "wid": cat(a["wid"], b["wid"]),
        "w1q": _blockdiag(a["w1q"], b["w1q"]), "w1k": _blockdiag(a["w1k"], b["w1k"]),
        "w1d": _blockdiag(a["w1d"], b["w1d"]), "w1r": _blockdiag(a["w1r"], b["w1r"]),
        "b1": cat(a["b1"], b["b1"]),
        "w2": _blockdiag(a["w2"], b["w2"]), "b2": cat(a["b2"], b["b2"]),
        "w3": _blockdiag(a["w3"], b["w3"]), "b3": cat(a["b3"], b["b3"]),
        "wg1": _blockdiag(a["wg1"], b["wg1"]), "bg1": cat(a["bg1"], b["bg1"]),
        "wg2": _blockdiag(a["wg2"], b["wg2"]), "bg2": cat(a["bg2"], b["bg2"]),
        "wo": _blockdiag(a["wo"], b["wo"]), "bo": cat(a["bo"], b["bo"]),
        "mavg": _blockdiag(mavg_half, mavg_half),
        "gamma": cat(a["gamma"], b["gamma"]), "beta": cat(a["beta"], b["beta"]),
        "wf1": fusion["wf1"], "bf1": fusion["bf1"],
        "wf2": fusion["wf2"], "bf2": fusion["bf2"],
        "wc": fusion["wc"], "bc": fusion["bc"],
    }


# --------------------------------- wrapper ------------------------------------
@jax.jit
def esa3d_forward(fused, edge_features, edge_coords, edge_index, node_coords,
                  intra_mask, inter_mask):
    # tiny XLA prologue: node gather -> edge-center coords, mask expansion,
    # and feature tiling (layout plumbing only).
    cc = (node_coords[edge_index[0]] + node_coords[edge_index[1]]) * 0.5       # [E, 3]
    ef2 = jnp.concatenate([edge_features, edge_features], axis=1)              # [E, 2H]
    mask_stack = jnp.stack([intra_mask, inter_mask], axis=-1).astype(jnp.float32)
    mask_l = jnp.repeat(mask_stack, NUM_HEADS, axis=-1)                        # [E, E, L]

    inputs = (ef2, edge_coords, cc, mask_l,
              fused["wq"], fused["wk"], fused["wv"],
              fused["cen"], fused["wid"],
              fused["w1q"], fused["w1k"], fused["w1d"], fused["w1r"], fused["b1"],
              fused["w2"], fused["b2"], fused["w3"], fused["b3"],
              fused["wg1"], fused["bg1"], fused["wg2"], fused["bg2"],
              fused["wo"], fused["bo"],
              fused["mavg"], fused["gamma"], fused["beta"],
              fused["wf1"], fused["bf1"], fused["wf2"], fused["bf2"],
              fused["wc"], fused["bc"])
    vmem = pl.BlockSpec(memory_space=pltpu.MemorySpace.VMEM)
    return pl.pallas_call(
        esa3d_fused_kernel,
        out_shape=(jax.ShapeDtypeStruct((E, HIDDEN), jnp.float32),
                   jax.ShapeDtypeStruct((E, 3), jnp.float32)),
        in_specs=[vmem] * len(inputs),
        out_specs=(vmem, vmem),
    )(*inputs)


# --------------------------- deterministic init ------------------------------
def _xavier(key, shape):
    fan_in, fan_out = shape
    a = (6.0 / (fan_in + fan_out)) ** 0.5
    return jax.random.uniform(key, shape, jnp.float32, -a, a)


def init_attention_params(key):
    ks = jax.random.split(key, 10)
    D, H, R, NH = HEAD_DIM, HIDDEN, NUM_RADIAL, NUM_HEADS
    w1 = _xavier(ks[3], (2 * D + R + 1, H))    # attention_mlp layer 1, then split
    return {
        "wq": _xavier(ks[0], (H, H)),
        "wk": _xavier(ks[1], (H, H)),
        "wv": _xavier(ks[2], (H, H)),
        "rbf_centers": jnp.linspace(0.0, CUTOFF, R, dtype=jnp.float32).reshape(1, R),
        "rbf_widths": 0.5 * jnp.ones((1, R), jnp.float32),
        "w1q": w1[:D, :], "w1k": w1[D:2 * D, :],
        "w1r": w1[2 * D:2 * D + R, :], "w1d": w1[2 * D + R:, :],
        "b1": jnp.zeros((1, H), jnp.float32),
        "w2": _xavier(ks[4], (H, H)), "b2": jnp.zeros((1, H), jnp.float32),
        "w3": _xavier(ks[5], (H, NH)), "b3": jnp.zeros((1, NH), jnp.float32),
        "wg1": _xavier(ks[6], (D, H)), "bg1": jnp.zeros((1, H), jnp.float32),
        "wg2": _xavier(ks[7], (H, 1)), "bg2": jnp.zeros((1, 1), jnp.float32),
        "wo": _xavier(ks[8], (H, H)), "bo": jnp.zeros((1, H), jnp.float32),
        "gamma": jnp.ones((1, H), jnp.float32), "beta": jnp.zeros((1, H), jnp.float32),
    }


def init_fusion_params(key):
    ks = jax.random.split(key, 3)
    H = HIDDEN
    return {
        "wf1": _xavier(ks[0], (2 * H, H)), "bf1": jnp.zeros((1, H), jnp.float32),
        "wf2": _xavier(ks[1], (H, H)), "bf2": jnp.zeros((1, H), jnp.float32),
        "wc": _xavier(ks[2], (6, 3)), "bc": jnp.zeros((1, 3), jnp.float32),
    }


# ---------------------------------- main -------------------------------------
if __name__ == "__main__":
    key = jax.random.PRNGKey(0)
    k0, k1, k2, k3 = jax.random.split(key, 4)
    edge_features = jax.random.normal(k0, (E, HIDDEN), jnp.float32)
    edge_coords = jax.random.normal(k1, (E, 3), jnp.float32)
    node_coords = jax.random.normal(k2, (N_NODES, 3), jnp.float32)
    edge_index = jax.random.randint(k3, (2, E), 0, N_NODES)

    # boolean [E, E] masks; the diagonal must stay valid so every softmax row is
    # finite (the reference produces NaN otherwise) and rows sum to exactly 1.
    blk = jnp.arange(E) // (E // 2)
    intra_mask = blk[:, None] == blk[None, :]
    inter_mask = jnp.logical_or(~intra_mask, jnp.eye(E, dtype=bool))

    intra_params = init_attention_params(jax.random.PRNGKey(1))
    inter_params = init_attention_params(jax.random.PRNGKey(2))
    fusion_params = init_fusion_params(jax.random.PRNGKey(3))
    fused = build_fused_params(intra_params, inter_params, fusion_params)

    feats, coords = esa3d_forward(fused, edge_features, edge_coords, edge_index,
                                  node_coords, intra_mask, inter_mask)
    jax.block_until_ready((feats, coords))

    assert feats.shape == (E, HIDDEN) and coords.shape == (E, 3)
    assert bool(jnp.all(jnp.isfinite(feats))) and bool(jnp.all(jnp.isfinite(coords)))
    print("KERNEL_OK")
</pallas_src>

<mosaic_0001>
module attributes {stable_mosaic.version = 11 : i64} {
  func.func @esa3d_fused_kernel(%arg0: memref<8x16xf32, #tpu.memory_space<vmem>>, %arg1: memref<8x3xf32, #tpu.memory_space<vmem>>, %arg2: memref<8x3xf32, #tpu.memory_space<vmem>>, %arg3: memref<8x8x16xf32, #tpu.memory_space<vmem>>, %arg4: memref<16x16xf32, #tpu.memory_space<vmem>>, %arg5: memref<16x16xf32, #tpu.memory_space<vmem>>, %arg6: memref<16x16xf32, #tpu.memory_space<vmem>>, %arg7: memref<1x32xf32, #tpu.memory_space<vmem>>, %arg8: memref<1x32xf32, #tpu.memory_space<vmem>>, %arg9: memref<16x128xf32, #tpu.memory_space<vmem>>, %arg10: memref<16x128xf32, #tpu.memory_space<vmem>>, %arg11: memref<16x128xf32, #tpu.memory_space<vmem>>, %arg12: memref<32x128xf32, #tpu.memory_space<vmem>>, %arg13: memref<1x128xf32, #tpu.memory_space<vmem>>, %arg14: memref<128x128xf32, #tpu.memory_space<vmem>>, %arg15: memref<1x128xf32, #tpu.memory_space<vmem>>, %arg16: memref<128x16xf32, #tpu.memory_space<vmem>>, %arg17: memref<1x16xf32, #tpu.memory_space<vmem>>, %arg18: memref<16x128xf32, #tpu.memory_space<vmem>>, %arg19: memref<1x128xf32, #tpu.memory_space<vmem>>, %arg20: memref<128x16xf32, #tpu.memory_space<vmem>>, %arg21: memref<1x16xf32, #tpu.memory_space<vmem>>, %arg22: memref<16x16xf32, #tpu.memory_space<vmem>>, %arg23: memref<1x16xf32, #tpu.memory_space<vmem>>, %arg24: memref<16x16xf32, #tpu.memory_space<vmem>>, %arg25: memref<1x16xf32, #tpu.memory_space<vmem>>, %arg26: memref<1x16xf32, #tpu.memory_space<vmem>>, %arg27: memref<16x8xf32, #tpu.memory_space<vmem>>, %arg28: memref<1x8xf32, #tpu.memory_space<vmem>>, %arg29: memref<8x8xf32, #tpu.memory_space<vmem>>, %arg30: memref<1x8xf32, #tpu.memory_space<vmem>>, %arg31: memref<6x3xf32, #tpu.memory_space<vmem>>, %arg32: memref<1x3xf32, #tpu.memory_space<vmem>>, %arg33: memref<8x8xf32, #tpu.memory_space<vmem>>, %arg34: memref<8x3xf32, #tpu.memory_space<vmem>>) attributes {dimension_semantics = [], scalar_prefetch = 0 : i64, scratch_operands = 0 : i64, tpu.core_type = #tpu.core_type<tc>} {
    %c0 = arith.constant 0 : index
    %c0_0 = arith.constant 0 : index
    %0 = vector.load %arg0[%c0, %c0_0] : memref<8x16xf32, #tpu.memory_space<vmem>>, vector<8x16xf32>
    %c0_1 = arith.constant 0 : index
    %c0_2 = arith.constant 0 : index
    %1 = vector.load %arg1[%c0_1, %c0_2] : memref<8x3xf32, #tpu.memory_space<vmem>>, vector<8x3xf32>
    %c0_3 = arith.constant 0 : index
    %c0_4 = arith.constant 0 : index
    %2 = vector.load %arg2[%c0_3, %c0_4] : memref<8x3xf32, #tpu.memory_space<vmem>>, vector<8x3xf32>
    %c0_5 = arith.constant 0 : index
    %c0_6 = arith.constant 0 : index
    %c0_7 = arith.constant 0 : index
    %3 = vector.load %arg3[%c0_5, %c0_6, %c0_7] : memref<8x8x16xf32, #tpu.memory_space<vmem>>, vector<8x8x16xf32>
    %c0_8 = arith.constant 0 : index
    %c0_9 = arith.constant 0 : index
    %4 = vector.load %arg4[%c0_8, %c0_9] : memref<16x16xf32, #tpu.memory_space<vmem>>, vector<16x16xf32>
    %cst = arith.constant dense<0.000000e+00> : vector<8x16xf32>
    %5 = tpu.matmul %0, %4, %cst {dimension_numbers = #tpu.dot_dimension_numbers<[1], [0], [0], [1], [0, 0, 1, 1], [], []>} : vector<8x16xf32>, vector<16x16xf32>, vector<8x16xf32> -> vector<8x16xf32>
    %c0_10 = arith.constant 0 : index
    %c0_11 = arith.constant 0 : index
    %6 = vector.load %arg5[%c0_10, %c0_11] : memref<16x16xf32, #tpu.memory_space<vmem>>, vector<16x16xf32>
    %cst_12 = arith.constant dense<0.000000e+00> : vector<8x16xf32>
    %7 = tpu.matmul %0, %6, %cst_12 {dimension_numbers = #tpu.dot_dimension_numbers<[1], [0], [0], [1], [0, 0, 1, 1], [], []>} : vector<8x16xf32>, vector<16x16xf32>, vector<8x16xf32> -> vector<8x16xf32>
    %c0_13 = arith.constant 0 : index
    %c0_14 = arith.constant 0 : index
    %8 = vector.load %arg6[%c0_13, %c0_14] : memref<16x16xf32, #tpu.memory_space<vmem>>, vector<16x16xf32>
    %cst_15 = arith.constant dense<0.000000e+00> : vector<8x16xf32>
    %9 = tpu.matmul %0, %8, %cst_15 {dimension_numbers = #tpu.dot_dimension_numbers<[1], [0], [0], [1], [0, 0, 1, 1], [], []>} : vector<8x16xf32>, vector<16x16xf32>, vector<8x16xf32> -> vector<8x16xf32>
    %10 = vector.shape_cast %2 : vector<8x3xf32> to vector<8x1x3xf32>
    %11 = vector.shape_cast %2 : vector<8x3xf32> to vector<1x8x3xf32>
    %12 = vector.broadcast %10 : vector<8x1x3xf32> to vector<8x8x3xf32>
    %13 = vector.broadcast %11 : vector<1x8x3xf32> to vector<8x8x3xf32>
    %14 = arith.subf %12, %13 : vector<8x8x3xf32>
    %15 = arith.mulf %14, %14 : vector<8x8x3xf32>
    %cst_16 = arith.constant dense<0.000000e+00> : vector<8x8xf32>
    %16 = vector.multi_reduction <add>, %15, %cst_16 [2] : vector<8x8x3xf32> to vector<8x8xf32>
    %17 = vector.shape_cast %16 : vector<8x8xf32> to vector<8x8x1xf32>
    %18 = math.sqrt %17 : vector<8x8x1xf32>
    %cst_17 = arith.constant 1.000000e+01 : f32
    %19 = vector.broadcast %cst_17 : f32 to vector<8x8x1xf32>
    %20 = arith.cmpf ole, %18, %19 : vector<8x8x1xf32>
    %21 = vector.shape_cast %18 : vector<8x8x1xf32> to vector<64x1xf32>
    %c0_18 = arith.constant 0 : index
    %c0_19 = arith.constant 0 : index
    %22 = vector.load %arg8[%c0_18, %c0_19] : memref<1x32xf32, #tpu.memory_space<vmem>>, vector<1x32xf32>
    %cst_20 = arith.constant 0.000000e+00 : f32
    %23 = vector.broadcast %cst_20 : f32 to vector<1x32xf32>
    %24 = arith.subf %23, %22 : vector<1x32xf32>
    %c0_21 = arith.constant 0 : index
    %c0_22 = arith.constant 0 : index
    %25 = vector.load %arg7[%c0_21, %c0_22] : memref<1x32xf32, #tpu.memory_space<vmem>>, vector<1x32xf32>
    %26 = vector.broadcast %21 : vector<64x1xf32> to vector<64x32xf32>
    %27 = vector.broadcast %25 : vector<1x32xf32> to vector<64x32xf32>
    %28 = arith.subf %26, %27 : vector<64x32xf32>
    %29 = arith.mulf %28, %28 : vector<64x32xf32>
    %30 = vector.broadcast %24 : vector<1x32xf32> to vector<64x32xf32>
    %31 = arith.mulf %30, %29 : vector<64x32xf32>
    %32 = math.exp %31 : vector<64x32xf32>
    %cst_23 = arith.constant 1.000000e+01 : f32
    %33 = vector.broadcast %cst_23 : f32 to vector<64x1xf32>
    %34 = arith.cmpf ole, %21, %33 : vector<64x1xf32>
    %35 = arith.extui %34 : vector<64x1xi1> to vector<64x1xi32>
    %36 = arith.sitofp %35 : vector<64x1xi32> to vector<64x1xf32>
    %37 = vector.broadcast %36 : vector<64x1xf32> to vector<64x32xf32>
    %38 = arith.mulf %32, %37 : vector<64x32xf32>
    %39 = vector.shape_cast %5 : vector<8x16xf32> to vector<8x1x16xf32>
    %40 = vector.shape_cast %39 : vector<8x1x16xf32> to vector<8x1x16xf32>
    %41 = vector.broadcast %40 : vector<8x1x16xf32> to vector<8x8x16xf32>
    %42 = vector.shape_cast %41 : vector<8x8x16xf32> to vector<64x16xf32>
    %43 = vector.shape_cast %7 : vector<8x16xf32> to vector<1x8x16xf32>
    %44 = vector.shape_cast %43 : vector<1x8x16xf32> to vector<1x8x16xf32>
    %45 = vector.broadcast %44 : vector<1x8x16xf32> to vector<8x8x16xf32>
    %46 = vector.shape_cast %45 : vector<8x8x16xf32> to vector<64x16xf32>
    %47 = arith.mulf %42, %46 : vector<64x16xf32>
    %c0_24 = arith.constant 0 : index
    %c0_25 = arith.constant 0 : index
    %48 = vector.load %arg9[%c0_24, %c0_25] : memref<16x128xf32, #tpu.memory_space<vmem>>, vector<16x128xf32>
    %cst_26 = arith.constant dense<0.000000e+00> : vector<64x128xf32>
    %49 = tpu.matmul %42, %48, %cst_26 {dimension_numbers = #tpu.dot_dimension_numbers<[1], [0], [0], [1], [0, 0, 1, 1], [], []>} : vector<64x16xf32>, vector<16x128xf32>, vector<64x128xf32> -> vector<64x128xf32>
    %c0_27 = arith.constant 0 : index
    %c0_28 = arith.constant 0 : index
    %50 = vector.load %arg10[%c0_27, %c0_28] : memref<16x128xf32, #tpu.memory_space<vmem>>, vector<16x128xf32>
    %cst_29 = arith.constant dense<0.000000e+00> : vector<64x128xf32>
    %51 = tpu.matmul %46, %50, %cst_29 {dimension_numbers = #tpu.dot_dimension_numbers<[1], [0], [0], [1], [0, 0, 1, 1], [], []>} : vector<64x16xf32>, vector<16x128xf32>, vector<64x128xf32> -> vector<64x128xf32>
    %52 = arith.addf %49, %51 : vector<64x128xf32>
    %c0_30 = arith.constant 0 : index
    %c0_31 = arith.constant 0 : index
    %53 = vector.load %arg11[%c0_30, %c0_31] : memref<16x128xf32, #tpu.memory_space<vmem>>, vector<16x128xf32>
    %cst_32 = arith.constant dense<0.000000e+00> : vector<64x128xf32>
    %54 = tpu.matmul %47, %53, %cst_32 {dimension_numbers = #tpu.dot_dimension_numbers<[1], [0], [0], [1], [0, 0, 1, 1], [], []>} : vector<64x16xf32>, vector<16x128xf32>, vector<64x128xf32> -> vector<64x128xf32>
    %55 = arith.addf %52, %54 : vector<64x128xf32>
    %c0_33 = arith.constant 0 : index
    %c0_34 = arith.constant 0 : index
    %56 = vector.load %arg12[%c0_33, %c0_34] : memref<32x128xf32, #tpu.memory_space<vmem>>, vector<32x128xf32>
    %cst_35 = arith.constant dense<0.000000e+00> : vector<64x128xf32>
    %57 = tpu.matmul %38, %56, %cst_35 {dimension_numbers = #tpu.dot_dimension_numbers<[1], [0], [0], [1], [0, 0, 1, 1], [], []>} : vector<64x32xf32>, vector<32x128xf32>, vector<64x128xf32> -> vector<64x128xf32>
    %58 = arith.addf %55, %57 : vector<64x128xf32>
    %c0_36 = arith.constant 0 : index
    %c0_37 = arith.constant 0 : index
    %59 = vector.load %arg13[%c0_36, %c0_37] : memref<1x128xf32, #tpu.memory_space<vmem>>, vector<1x128xf32>
    %60 = vector.broadcast %59 : vector<1x128xf32> to vector<64x128xf32>
    %61 = arith.addf %58, %60 : vector<64x128xf32>
    %62 = arith.negf %61 : vector<64x128xf32>
    %63 = math.exp %62 : vector<64x128xf32>
    %cst_38 = arith.constant 1.000000e+00 : f32
    %64 = vector.broadcast %cst_38 : f32 to vector<64x128xf32>
    %65 = arith.addf %64, %63 : vector<64x128xf32>
    %66 = arith.divf %64, %65 : vector<64x128xf32>
    %67 = arith.mulf %61, %66 : vector<64x128xf32>
    %c0_39 = arith.constant 0 : index
    %c0_40 = arith.constant 0 : index
    %68 = vector.load %arg14[%c0_39, %c0_40] : memref<128x128xf32, #tpu.memory_space<vmem>>, vector<128x128xf32>
    %cst_41 = arith.constant dense<0.000000e+00> : vector<64x128xf32>
    %69 = tpu.matmul %67, %68, %cst_41 {dimension_numbers = #tpu.dot_dimension_numbers<[1], [0], [0], [1], [0, 0, 1, 1], [], []>} : vector<64x128xf32>, vector<128x128xf32>, vector<64x128xf32> -> vector<64x128xf32>
    %c0_42 = arith.constant 0 : index
    %c0_43 = arith.constant 0 : index
    %70 = vector.load %arg15[%c0_42, %c0_43] : memref<1x128xf32, #tpu.memory_space<vmem>>, vector<1x128xf32>
    %71 = vector.broadcast %70 : vector<1x128xf32> to vector<64x128xf32>
    %72 = arith.addf %69, %71 : vector<64x128xf32>
    %73 = arith.negf %72 : vector<64x128xf32>
    %74 = math.exp %73 : vector<64x128xf32>
    %cst_44 = arith.constant 1.000000e+00 : f32
    %75 = vector.broadcast %cst_44 : f32 to vector<64x128xf32>
    %76 = arith.addf %75, %74 : vector<64x128xf32>
    %77 = arith.divf %75, %76 : vector<64x128xf32>
    %78 = arith.mulf %72, %77 : vector<64x128xf32>
    %c0_45 = arith.constant 0 : index
    %c0_46 = arith.constant 0 : index
    %79 = vector.load %arg16[%c0_45, %c0_46] : memref<128x16xf32, #tpu.memory_space<vmem>>, vector<128x16xf32>
    %cst_47 = arith.constant dense<0.000000e+00> : vector<64x16xf32>
    %80 = tpu.matmul %78, %79, %cst_47 {dimension_numbers = #tpu.dot_dimension_numbers<[1], [0], [0], [1], [0, 0, 1, 1], [], []>} : vector<64x128xf32>, vector<128x16xf32>, vector<64x16xf32> -> vector<64x16xf32>
    %c0_48 = arith.constant 0 : index
    %c0_49 = arith.constant 0 : index
    %81 = vector.load %arg17[%c0_48, %c0_49] : memref<1x16xf32, #tpu.memory_space<vmem>>, vector<1x16xf32>
    %82 = vector.broadcast %81 : vector<1x16xf32> to vector<64x16xf32>
    %83 = arith.addf %80, %82 : vector<64x16xf32>
    %84 = tpu.iota {dimensions = array<i32: 0>} : vector<8x8x1xi32>
    %85 = tpu.iota {dimensions = array<i32: 1>} : vector<8x8x1xi32>
    %86 = arith.cmpi eq, %84, %85 : vector<8x8x1xi32>
    %87 = arith.ori %86, %20 : vector<8x8x1xi1>
    %cst_50 = arith.constant 5.000000e-01 : f32
    %88 = vector.broadcast %cst_50 : f32 to vector<8x8x16xf32>
    %89 = arith.cmpf ogt, %3, %88 : vector<8x8x16xf32>
    %90 = vector.broadcast %87 : vector<8x8x1xi1> to vector<8x8x16xi1>
    %91 = arith.andi %90, %89 : vector<8x8x16xi1>
    %92 = vector.shape_cast %83 : vector<64x16xf32> to vector<8x8x16xf32>
    %cst_51 = arith.constant -1.000000e+30 : f32
    %93 = vector.broadcast %cst_51 : f32 to vector<8x8x16xf32>
    %94 = arith.select %91, %92, %93 : vector<8x8x16xi1>, vector<8x8x16xf32>
    %cst_52 = arith.constant dense<0xFF800000> : vector<8x16xf32>
    %95 = vector.multi_reduction <maximumf>, %94, %cst_52 [1] : vector<8x8x16xf32> to vector<8x16xf32>
    %96 = vector.shape_cast %95 : vector<8x16xf32> to vector<8x1x16xf32>
    %97 = vector.broadcast %96 : vector<8x1x16xf32> to vector<8x8x16xf32>
    %98 = arith.subf %94, %97 : vector<8x8x16xf32>
    %99 = math.exp %98 : vector<8x8x16xf32>
    %cst_53 = arith.constant dense<0.000000e+00> : vector<8x16xf32>
    %100 = vector.multi_reduction <add>, %99, %cst_53 [1] : vector<8x8x16xf32> to vector<8x16xf32>
    %101 = vector.shape_cast %100 : vector<8x16xf32> to vector<8x1x16xf32>
    %102 = vector.broadcast %101 : vector<8x1x16xf32> to vector<8x8x16xf32>
    %103 = arith.divf %99, %102 : vector<8x8x16xf32>
    %104 = vector.shape_cast %9 : vector<8x16xf32> to vector<1x8x16xf32>
    %105 = vector.broadcast %104 : vector<1x8x16xf32> to vector<8x8x16xf32>
    %106 = arith.mulf %103, %105 : vector<8x8x16xf32>
    %cst_54 = arith.constant dense<0.000000e+00> : vector<8x16xf32>
    %107 = vector.multi_reduction <add>, %106, %cst_54 [1] : vector<8x8x16xf32> to vector<8x16xf32>
    %c0_55 = arith.constant 0 : index
    %c0_56 = arith.constant 0 : index
    %108 = vector.load %arg22[%c0_55, %c0_56] : memref<16x16xf32, #tpu.memory_space<vmem>>, vector<16x16xf32>
    %cst_57 = arith.constant dense<0.000000e+00> : vector<8x16xf32>
    %109 = tpu.matmul %107, %108, %cst_57 {dimension_numbers = #tpu.dot_dimension_numbers<[1], [0], [0], [1], [0, 0, 1, 1], [], []>} : vector<8x16xf32>, vector<16x16xf32>, vector<8x16xf32> -> vector<8x16xf32>
    %110 = arith.addf %0, %109 : vector<8x16xf32>
    %c0_58 = arith.constant 0 : index
    %c0_59 = arith.constant 0 : index
    %111 = vector.load %arg23[%c0_58, %c0_59] : memref<1x16xf32, #tpu.memory_space<vmem>>, vector<1x16xf32>
    %112 = vector.broadcast %111 : vector<1x16xf32> to vector<8x16xf32>
    %113 = arith.addf %110, %112 : vector<8x16xf32>
    %c0_60 = arith.constant 0 : index
    %c0_61 = arith.constant 0 : index
    %114 = vector.load %arg24[%c0_60, %c0_61] : memref<16x16xf32, #tpu.memory_space<vmem>>, vector<16x16xf32>
    %cst_62 = arith.constant dense<0.000000e+00> : vector<8x16xf32>
    %115 = tpu.matmul %113, %114, %cst_62 {dimension_numbers = #tpu.dot_dimension_numbers<[1], [0], [0], [1], [0, 0, 1, 1], [], []>} : vector<8x16xf32>, vector<16x16xf32>, vector<8x16xf32> -> vector<8x16xf32>
    %116 = arith.subf %113, %115 : vector<8x16xf32>
    %117 = arith.mulf %116, %116 : vector<8x16xf32>
    %c0_63 = arith.constant 0 : index
    %c0_64 = arith.constant 0 : index
    %118 = vector.load %arg24[%c0_63, %c0_64] : memref<16x16xf32, #tpu.memory_space<vmem>>, vector<16x16xf32>
    %cst_65 = arith.constant dense<0.000000e+00> : vector<8x16xf32>
    %119 = tpu.matmul %117, %118, %cst_65 {dimension_numbers = #tpu.dot_dimension_numbers<[1], [0], [0], [1], [0, 0, 1, 1], [], []>} : vector<8x16xf32>, vector<16x16xf32>, vector<8x16xf32> -> vector<8x16xf32>
    %cst_66 = arith.constant 9.99999974E-6 : f32
    %120 = vector.broadcast %cst_66 : f32 to vector<8x16xf32>
    %121 = arith.addf %119, %120 : vector<8x16xf32>
    %122 = math.rsqrt %121 : vector<8x16xf32>
    %123 = arith.mulf %116, %122 : vector<8x16xf32>
    %c0_67 = arith.constant 0 : index
    %c0_68 = arith.constant 0 : index
    %124 = vector.load %arg25[%c0_67, %c0_68] : memref<1x16xf32, #tpu.memory_space<vmem>>, vector<1x16xf32>
    %125 = vector.broadcast %124 : vector<1x16xf32> to vector<8x16xf32>
    %126 = arith.mulf %123, %125 : vector<8x16xf32>
    %c0_69 = arith.constant 0 : index
    %c0_70 = arith.constant 0 : index
    %127 = vector.load %arg26[%c0_69, %c0_70] : memref<1x16xf32, #tpu.memory_space<vmem>>, vector<1x16xf32>
    %128 = vector.broadcast %127 : vector<1x16xf32> to vector<8x16xf32>
    %129 = arith.addf %126, %128 : vector<8x16xf32>
    %c0_71 = arith.constant 0 : index
    %c0_72 = arith.constant 0 : index
    %130 = vector.load %arg27[%c0_71, %c0_72] : memref<16x8xf32, #tpu.memory_space<vmem>>, vector<16x8xf32>
    %cst_73 = arith.constant dense<0.000000e+00> : vector<8x8xf32>
    %131 = tpu.matmul %129, %130, %cst_73 {dimension_numbers = #tpu.dot_dimension_numbers<[1], [0], [0], [1], [0, 0, 1, 1], [], []>} : vector<8x16xf32>, vector<16x8xf32>, vector<8x8xf32> -> vector<8x8xf32>
    %c0_74 = arith.constant 0 : index
    %c0_75 = arith.constant 0 : index
    %132 = vector.load %arg28[%c0_74, %c0_75] : memref<1x8xf32, #tpu.memory_space<vmem>>, vector<1x8xf32>
    %133 = vector.broadcast %132 : vector<1x8xf32> to vector<8x8xf32>
    %134 = arith.addf %131, %133 : vector<8x8xf32>
    %135 = arith.negf %134 : vector<8x8xf32>
    %136 = math.exp %135 : vector<8x8xf32>
    %cst_76 = arith.constant 1.000000e+00 : f32
    %137 = vector.broadcast %cst_76 : f32 to vector<8x8xf32>
    %138 = arith.addf %137, %136 : vector<8x8xf32>
    %139 = arith.divf %137, %138 : vector<8x8xf32>
    %140 = arith.mulf %134, %139 : vector<8x8xf32>
    %c0_77 = arith.constant 0 : index
    %c0_78 = arith.constant 0 : index
    %141 = vector.load %arg29[%c0_77, %c0_78] : memref<8x8xf32, #tpu.memory_space<vmem>>, vector<8x8xf32>
    %cst_79 = arith.constant dense<0.000000e+00> : vector<8x8xf32>
    %142 = tpu.matmul %140, %141, %cst_79 {dimension_numbers = #tpu.dot_dimension_numbers<[1], [0], [0], [1], [0, 0, 1, 1], [], []>} : vector<8x8xf32>, vector<8x8xf32>, vector<8x8xf32> -> vector<8x8xf32>
    %c0_80 = arith.constant 0 : index
    %c0_81 = arith.constant 0 : index
    %143 = vector.load %arg30[%c0_80, %c0_81] : memref<1x8xf32, #tpu.memory_space<vmem>>, vector<1x8xf32>
    %144 = vector.broadcast %143 : vector<1x8xf32> to vector<8x8xf32>
    %145 = arith.addf %142, %144 : vector<8x8xf32>
    %c0_82 = arith.constant 0 : index
    %c0_83 = arith.constant 0 : index
    %146 = vector.load %arg33[%c0_82, %c0_83] : memref<8x8xf32, #tpu.memory_space<vmem>>, vector<8x8xf32>
    tpu.vector_store %arg33[%c0_82, %c0_83], %145 {strides = array<i32>} : memref<8x8xf32, #tpu.memory_space<vmem>>, vector<8x8xf32>,
    %c0_84 = arith.constant 0 : index
    %c0_85 = arith.constant 0 : index
    %147 = vector.load %arg18[%c0_84, %c0_85] : memref<16x128xf32, #tpu.memory_space<vmem>>, vector<16x128xf32>
    %cst_86 = arith.constant dense<0.000000e+00> : vector<8x128xf32>
    %148 = tpu.matmul %9, %147, %cst_86 {dimension_numbers = #tpu.dot_dimension_numbers<[1], [0], [0], [1], [0, 0, 1, 1], [], []>} : vector<8x16xf32>, vector<16x128xf32>, vector<8x128xf32> -> vector<8x128xf32>
    %c0_87 = arith.constant 0 : index
    %c0_88 = arith.constant 0 : index
    %149 = vector.load %arg19[%c0_87, %c0_88] : memref<1x128xf32, #tpu.memory_space<vmem>>, vector<1x128xf32>
    %150 = vector.broadcast %149 : vector<1x128xf32> to vector<8x128xf32>
    %151 = arith.addf %148, %150 : vector<8x128xf32>
    %152 = arith.negf %151 : vector<8x128xf32>
    %153 = math.exp %152 : vector<8x128xf32>
    %cst_89 = arith.constant 1.000000e+00 : f32
    %154 = vector.broadcast %cst_89 : f32 to vector<8x128xf32>
    %155 = arith.addf %154, %153 : vector<8x128xf32>
    %156 = arith.divf %154, %155 : vector<8x128xf32>
    %157 = arith.mulf %151, %156 : vector<8x128xf32>
    %c0_90 = arith.constant 0 : index
    %c0_91 = arith.constant 0 : index
    %158 = vector.load %arg20[%c0_90, %c0_91] : memref<128x16xf32, #tpu.memory_space<vmem>>, vector<128x16xf32>
    %cst_92 = arith.constant dense<0.000000e+00> : vector<8x16xf32>
    %159 = tpu.matmul %157, %158, %cst_92 {dimension_numbers = #tpu.dot_dimension_numbers<[1], [0], [0], [1], [0, 0, 1, 1], [], []>} : vector<8x128xf32>, vector<128x16xf32>, vector<8x16xf32> -> vector<8x16xf32>
    %c0_93 = arith.constant 0 : index
    %c0_94 = arith.constant 0 : index
    %160 = vector.load %arg21[%c0_93, %c0_94] : memref<1x16xf32, #tpu.memory_space<vmem>>, vector<1x16xf32>
    %161 = vector.broadcast %160 : vector<1x16xf32> to vector<8x16xf32>
    %162 = arith.addf %159, %161 : vector<8x16xf32>
    %163 = arith.negf %162 : vector<8x16xf32>
    %164 = math.exp %163 : vector<8x16xf32>
    %cst_95 = arith.constant 1.000000e+00 : f32
    %165 = vector.broadcast %cst_95 : f32 to vector<8x16xf32>
    %166 = arith.addf %165, %164 : vector<8x16xf32>
    %167 = arith.divf %165, %166 : vector<8x16xf32>
    %168 = vector.shape_cast %167 : vector<8x16xf32> to vector<8x1x16xf32>
    %169 = vector.broadcast %168 : vector<8x1x16xf32> to vector<8x8x16xf32>
    %170 = arith.mulf %103, %169 : vector<8x8x16xf32>
    %171 = vector.extract_strided_slice %167 {offsets = [0, 0], sizes = [8, 8], strides = [1, 1]} : vector<8x16xf32> to vector<8x8xf32>
    %cst_96 = arith.constant dense<0.000000e+00> : vector<8xf32>
    %172 = vector.multi_reduction <add>, %171, %cst_96 [1] : vector<8x8xf32> to vector<8xf32>
    %173 = vector.shape_cast %172 : vector<8xf32> to vector<8x1xf32>
    %174 = vector.extract_strided_slice %167 {offsets = [0, 8], sizes = [8, 8], strides = [1, 1]} : vector<8x16xf32> to vector<8x8xf32>
    %cst_97 = arith.constant dense<0.000000e+00> : vector<8xf32>
    %175 = vector.multi_reduction <add>, %174, %cst_97 [1] : vector<8x8xf32> to vector<8xf32>
    %176 = vector.shape_cast %175 : vector<8xf32> to vector<8x1xf32>
    %c0_98 = arith.constant 0 : index
    %c0_99 = arith.constant 0 : index
    %177 = vector.load %arg31[%c0_98, %c0_99] : memref<6x3xf32, #tpu.memory_space<vmem>>, vector<6x3xf32>
    %cst_100 = arith.constant 0.000000e+00 : f32
    %178 = vector.broadcast %cst_100 : f32 to vector<8x3xf32>
    %c0_101 = arith.constant 0 : index
    %c0_102 = arith.constant 0 : index
    %179 = vector.load %arg32[%c0_101, %c0_102] : memref<1x3xf32, #tpu.memory_space<vmem>>, vector<1x3xf32>
    %180 = vector.broadcast %179 : vector<1x3xf32> to vector<8x3xf32>
    %181 = arith.addf %178, %180 : vector<8x3xf32>
    %182 = vector.extract_strided_slice %177 {offsets = [0, 0], sizes = [3, 3], strides = [1, 1]} : vector<6x3xf32> to vector<3x3xf32>
    %183 = vector.extract_strided_slice %177 {offsets = [3, 0], sizes = [3, 3], strides = [1, 1]} : vector<6x3xf32> to vector<3x3xf32>
    %184 = arith.addf %182, %183 : vector<3x3xf32>
    %cst_103 = arith.constant dense<0.000000e+00> : vector<8x3xf32>
    %185 = tpu.matmul %1, %184, %cst_103 {dimension_numbers = #tpu.dot_dimension_numbers<[1], [0], [0], [1], [0, 0, 1, 1], [], []>} : vector<8x3xf32>, vector<3x3xf32>, vector<8x3xf32> -> vector<8x3xf32>
    %186 = arith.addf %181, %185 : vector<8x3xf32>
    %187 = vector.extract_strided_slice %2 {offsets = [0, 0], sizes = [8, 1], strides = [1, 1]} : vector<8x3xf32> to vector<8x1xf32>
    %188 = vector.shape_cast %187 : vector<8x1xf32> to vector<1x8x1xf32>
    %189 = vector.broadcast %188 : vector<1x8x1xf32> to vector<8x8x16xf32>
    %190 = arith.mulf %170, %189 : vector<8x8x16xf32>
    %cst_104 = arith.constant dense<0.000000e+00> : vector<8x16xf32>
    %191 = vector.multi_reduction <add>, %190, %cst_104 [1] : vector<8x8x16xf32> to vector<8x16xf32>
    %192 = vector.extract_strided_slice %191 {offsets = [0, 0], sizes = [8, 8], strides = [1, 1]} : vector<8x16xf32> to vector<8x8xf32>
    %cst_105 = arith.constant dense<0.000000e+00> : vector<8xf32>
    %193 = vector.multi_reduction <add>, %192, %cst_105 [1] : vector<8x8xf32> to vector<8xf32>
    %194 = vector.shape_cast %193 : vector<8xf32> to vector<8x1xf32>
    %195 = vector.extract_strided_slice %191 {offsets = [0, 8], sizes = [8, 8], strides = [1, 1]} : vector<8x16xf32> to vector<8x8xf32>
    %cst_106 = arith.constant dense<0.000000e+00> : vector<8xf32>
    %196 = vector.multi_reduction <add>, %195, %cst_106 [1] : vector<8x8xf32> to vector<8xf32>
    %197 = vector.shape_cast %196 : vector<8xf32> to vector<8x1xf32>
    %198 = arith.mulf %173, %187 : vector<8x1xf32>
    %199 = arith.subf %198, %194 : vector<8x1xf32>
    %cst_107 = arith.constant 1.250000e-01 : f32
    %200 = vector.broadcast %cst_107 : f32 to vector<8x1xf32>
    %201 = arith.mulf %199, %200 : vector<8x1xf32>
    %202 = arith.mulf %176, %187 : vector<8x1xf32>
    %203 = arith.subf %202, %197 : vector<8x1xf32>
    %cst_108 = arith.constant 1.250000e-01 : f32
    %204 = vector.broadcast %cst_108 : f32 to vector<8x1xf32>
    %205 = arith.mulf %203, %204 : vector<8x1xf32>
    %206 = vector.extract_strided_slice %177 {offsets = [0, 0], sizes = [1, 3], strides = [1, 1]} : vector<6x3xf32> to vector<1x3xf32>
    %207 = vector.broadcast %201 : vector<8x1xf32> to vector<8x3xf32>
    %208 = vector.broadcast %206 : vector<1x3xf32> to vector<8x3xf32>
    %209 = arith.mulf %207, %208 : vector<8x3xf32>
    %210 = arith.addf %186, %209 : vector<8x3xf32>
    %211 = vector.extract_strided_slice %177 {offsets = [3, 0], sizes = [1, 3], strides = [1, 1]} : vector<6x3xf32> to vector<1x3xf32>
    %212 = vector.broadcast %205 : vector<8x1xf32> to vector<8x3xf32>
    %213 = vector.broadcast %211 : vector<1x3xf32> to vector<8x3xf32>
    %214 = arith.mulf %212, %213 : vector<8x3xf32>
    %215 = arith.addf %210, %214 : vector<8x3xf32>
    %216 = vector.extract_strided_slice %2 {offsets = [0, 1], sizes = [8, 1], strides = [1, 1]} : vector<8x3xf32> to vector<8x1xf32>
    %217 = vector.shape_cast %216 : vector<8x1xf32> to vector<1x8x1xf32>
    %218 = vector.broadcast %217 : vector<1x8x1xf32> to vector<8x8x16xf32>
    %219 = arith.mulf %170, %218 : vector<8x8x16xf32>
    %cst_109 = arith.constant dense<0.000000e+00> : vector<8x16xf32>
    %220 = vector.multi_reduction <add>, %219, %cst_109 [1] : vector<8x8x16xf32> to vector<8x16xf32>
    %221 = vector.extract_strided_slice %220 {offsets = [0, 0], sizes = [8, 8], strides = [1, 1]} : vector<8x16xf32> to vector<8x8xf32>
    %cst_110 = arith.constant dense<0.000000e+00> : vector<8xf32>
    %222 = vector.multi_reduction <add>, %221, %cst_110 [1] : vector<8x8xf32> to vector<8xf32>
    %223 = vector.shape_cast %222 : vector<8xf32> to vector<8x1xf32>
    %224 = vector.extract_strided_slice %220 {offsets = [0, 8], sizes = [8, 8], strides = [1, 1]} : vector<8x16xf32> to vector<8x8xf32>
    %cst_111 = arith.constant dense<0.000000e+00> : vector<8xf32>
    %225 = vector.multi_reduction <add>, %224, %cst_111 [1] : vector<8x8xf32> to vector<8xf32>
    %226 = vector.shape_cast %225 : vector<8xf32> to vector<8x1xf32>
    %227 = arith.mulf %173, %216 : vector<8x1xf32>
    %228 = arith.subf %227, %223 : vector<8x1xf32>
    %cst_112 = arith.constant 1.250000e-01 : f32
    %229 = vector.broadcast %cst_112 : f32 to vector<8x1xf32>
    %230 = arith.mulf %228, %229 : vector<8x1xf32>
    %231 = arith.mulf %176, %216 : vector<8x1xf32>
    %232 = arith.subf %231, %226 : vector<8x1xf32>
    %cst_113 = arith.constant 1.250000e-01 : f32
    %233 = vector.broadcast %cst_113 : f32 to vector<8x1xf32>
    %234 = arith.mulf %232, %233 : vector<8x1xf32>
    %235 = vector.extract_strided_slice %177 {offsets = [1, 0], sizes = [1, 3], strides = [1, 1]} : vector<6x3xf32> to vector<1x3xf32>
    %236 = vector.broadcast %230 : vector<8x1xf32> to vector<8x3xf32>
    %237 = vector.broadcast %235 : vector<1x3xf32> to vector<8x3xf32>
    %238 = arith.mulf %236, %237 : vector<8x3xf32>
    %239 = arith.addf %215, %238 : vector<8x3xf32>
    %240 = vector.extract_strided_slice %177 {offsets = [4, 0], sizes = [1, 3], strides = [1, 1]} : vector<6x3xf32> to vector<1x3xf32>
    %241 = vector.broadcast %234 : vector<8x1xf32> to vector<8x3xf32>
    %242 = vector.broadcast %240 : vector<1x3xf32> to vector<8x3xf32>
    %243 = arith.mulf %241, %242 : vector<8x3xf32>
    %244 = arith.addf %239, %243 : vector<8x3xf32>
    %245 = vector.extract_strided_slice %2 {offsets = [0, 2], sizes = [8, 1], strides = [1, 1]} : vector<8x3xf32> to vector<8x1xf32>
    %246 = vector.shape_cast %245 : vector<8x1xf32> to vector<1x8x1xf32>
    %247 = vector.broadcast %246 : vector<1x8x1xf32> to vector<8x8x16xf32>
    %248 = arith.mulf %170, %247 : vector<8x8x16xf32>
    %cst_114 = arith.constant dense<0.000000e+00> : vector<8x16xf32>
    %249 = vector.multi_reduction <add>, %248, %cst_114 [1] : vector<8x8x16xf32> to vector<8x16xf32>
    %250 = vector.extract_strided_slice %249 {offsets = [0, 0], sizes = [8, 8], strides = [1, 1]} : vector<8x16xf32> to vector<8x8xf32>
    %cst_115 = arith.constant dense<0.000000e+00> : vector<8xf32>
    %251 = vector.multi_reduction <add>, %250, %cst_115 [1] : vector<8x8xf32> to vector<8xf32>
    %252 = vector.shape_cast %251 : vector<8xf32> to vector<8x1xf32>
    %253 = vector.extract_strided_slice %249 {offsets = [0, 8], sizes = [8, 8], strides = [1, 1]} : vector<8x16xf32> to vector<8x8xf32>
    %cst_116 = arith.constant dense<0.000000e+00> : vector<8xf32>
    %254 = vector.multi_reduction <add>, %253, %cst_116 [1] : vector<8x8xf32> to vector<8xf32>
    %255 = vector.shape_cast %254 : vector<8xf32> to vector<8x1xf32>
    %256 = arith.mulf %173, %245 : vector<8x1xf32>
    %257 = arith.subf %256, %252 : vector<8x1xf32>
    %cst_117 = arith.constant 1.250000e-01 : f32
    %258 = vector.broadcast %cst_117 : f32 to vector<8x1xf32>
    %259 = arith.mulf %257, %258 : vector<8x1xf32>
    %260 = arith.mulf %176, %245 : vector<8x1xf32>
    %261 = arith.subf %260, %255 : vector<8x1xf32>
    %cst_118 = arith.constant 1.250000e-01 : f32
    %262 = vector.broadcast %cst_118 : f32 to vector<8x1xf32>
    %263 = arith.mulf %261, %262 : vector<8x1xf32>
    %264 = vector.extract_strided_slice %177 {offsets = [2, 0], sizes = [1, 3], strides = [1, 1]} : vector<6x3xf32> to vector<1x3xf32>
    %265 = vector.broadcast %259 : vector<8x1xf32> to vector<8x3xf32>
    %266 = vector.broadcast %264 : vector<1x3xf32> to vector<8x3xf32>
    %267 = arith.mulf %265, %266 : vector<8x3xf32>
    %268 = arith.addf %244, %267 : vector<8x3xf32>
    %269 = vector.extract_strided_slice %177 {offsets = [5, 0], sizes = [1, 3], strides = [1, 1]} : vector<6x3xf32> to vector<1x3xf32>
    %270 = vector.broadcast %263 : vector<8x1xf32> to vector<8x3xf32>
    %271 = vector.broadcast %269 : vector<1x3xf32> to vector<8x3xf32>
    %272 = arith.mulf %270, %271 : vector<8x3xf32>
    %273 = arith.addf %268, %272 : vector<8x3xf32>
    %c0_119 = arith.constant 0 : index
    %c0_120 = arith.constant 0 : index
    %274 = vector.load %arg34[%c0_119, %c0_120] : memref<8x3xf32, #tpu.memory_space<vmem>>, vector<8x3xf32>
    tpu.vector_store %arg34[%c0_119, %c0_120], %273 {strides = array<i32>} : memref<8x3xf32, #tpu.memory_space<vmem>>, vector<8x3xf32>,
    return
  }
}

</mosaic_0001>

<llo_original>
// kernel: esa3d_forward.1
$region0: #{esa3d_forward.1}
  #allocation0 [shape = 'u32[]', space=smem, size = 0x4, offset = 0x4, fixed_abs, tag = 'smem constant byte address 0x4 - core index']
  #allocation1 [shape = 'u32[144,128]{1,0:T(1,128)}', space=vmem, size = 0x12000, scoped, tag = 'internal scratch']
  %s0 = inlined_call_operand.smem [shape: u32[35], index: -1, kind: input, shape index: {}]
  %s1 = sld [smem:[%s0]]
  %s2 = scalar_lea.smem %s0, 1
  %s3 = sld [smem:[%s2]]
  %s4 = scalar_lea.smem %s0, 2
  %s5 = sld [smem:[%s4]]
  %s6 = scalar_lea.smem %s0, 3
  %s7 = sld [smem:[%s6]]
  %s8 = scalar_lea.smem %s0, 4
  %s9 = sld [smem:[%s8]]
  %s10 = scalar_lea.smem %s0, 5
  %s11 = sld [smem:[%s10]]
  %s12 = scalar_lea.smem %s0, 6
  %s13 = sld [smem:[%s12]]
  %s14 = scalar_lea.smem %s0, 7
  %s15 = sld [smem:[%s14]]
  %s16 = scalar_lea.smem %s0, 8
  %s17 = sld [smem:[%s16]]
  %s18 = scalar_lea.smem %s0, 9
  %s19 = sld [smem:[%s18]]
  %s20 = scalar_lea.smem %s0, 10
  %s21 = sld [smem:[%s20]]
  %s22 = scalar_lea.smem %s0, 11
  %s23 = sld [smem:[%s22]]
  %s24 = scalar_lea.smem %s0, 12
  %s25 = sld [smem:[%s24]]
  %s26 = scalar_lea.smem %s0, 13
  %s27 = sld [smem:[%s26]]
  %s28 = scalar_lea.smem %s0, 14
  %s29 = sld [smem:[%s28]]
  %s30 = scalar_lea.smem %s0, 15
  %s31 = sld [smem:[%s30]]
  %s32 = scalar_lea.smem %s0, 16
  %s33 = sld [smem:[%s32]]
  %s34 = scalar_lea.smem %s0, 17
  %s35 = sld [smem:[%s34]]
  %s36 = scalar_lea.smem %s0, 18
  %s37 = sld [smem:[%s36]]
  %s38 = scalar_lea.smem %s0, 19
  %s39 = sld [smem:[%s38]]
  %s40 = scalar_lea.smem %s0, 20
  %s41 = sld [smem:[%s40]]
  %s42 = scalar_lea.smem %s0, 21
  %s43 = sld [smem:[%s42]]
  %s44 = scalar_lea.smem %s0, 22
  %s45 = sld [smem:[%s44]]
  %s46 = scalar_lea.smem %s0, 23
  %s47 = sld [smem:[%s46]]
  %s48 = scalar_lea.smem %s0, 24
  %s49 = sld [smem:[%s48]]
  %s50 = scalar_lea.smem %s0, 25
  %s51 = sld [smem:[%s50]]
  %s52 = scalar_lea.smem %s0, 26
  %s53 = sld [smem:[%s52]]
  %s54 = scalar_lea.smem %s0, 27
  %s55 = sld [smem:[%s54]]
  %s56 = scalar_lea.smem %s0, 28
  %s57 = sld [smem:[%s56]]
  %s58 = scalar_lea.smem %s0, 29
  %s59 = sld [smem:[%s58]]
  %s60 = scalar_lea.smem %s0, 30
  %s61 = sld [smem:[%s60]]
  %s62 = scalar_lea.smem %s0, 31
  %s63 = sld [smem:[%s62]]
  %s64 = scalar_lea.smem %s0, 32
  %s65 = sld [smem:[%s64]]
  %s66 = scalar_lea.smem %s0, 33
  %s67 = sld [smem:[%s66]]
  %s68 = scalar_lea.smem %s0, 34
  %s69 = sld [smem:[%s68]]
  %70 = xla_tuple %s67, %s69
  %s71 = sld [smem:[#allocation0]]
  $region150: #{esa3d_forward.1} parent=0
    _
  %s73 = ssub.s32 1, %s71
  %s74 = scalar_select 0, %s73, %s71
  $region1: #{esa3d_forward.1} parent=0
    #allocation2 [shape = 'u8[4096]{0}', space=vmem, size = 0x1000, scoped, tag = 'output window, operand 0, single buffered']
    #allocation3 [shape = 's32[1]{0}', space=sflag, size = 0x4, scoped, tag = 'scoped memory for esa3d_forward.1']
    %75 = vsyncpa [#allocation3], 0
    // Predicated region
    $region2: #{esa3d_forward.1} parent=1 // pred_check
      _
    $region3: #{esa3d_forward.1} parent=1 // pred_check_branch
      %77 = sbr.rel (0) target = $region5
    $region4: #{esa3d_forward.1} parent=1 // pred_region
      _
    $region5: #{esa3d_forward.1} parent=1 // pred_fallthru
      _
    // Predicated region
    $region6: #{esa3d_forward.1} parent=1 // pred_check
      _
    $region7: #{esa3d_forward.1} parent=1 // pred_check_branch
      %79 = sbr.rel (0) target = $region9
    $region8: #{esa3d_forward.1} parent=1 // pred_region
      _
    $region9: #{esa3d_forward.1} parent=1 // pred_fallthru
      _
    // Predicated region
    $region10: #{esa3d_forward.1} parent=1 // pred_check
      _
    $region11: #{esa3d_forward.1} parent=1 // pred_check_branch
      %81 = sbr.rel (0) target = $region13
    $region12: #{esa3d_forward.1} parent=1 // pred_region
      _
    $region13: #{esa3d_forward.1} parent=1 // pred_fallthru
      _
    // Predicated region
    $region14: #{esa3d_forward.1} parent=1 // pred_check
      _
    $region15: #{esa3d_forward.1} parent=1 // pred_check_branch
      %83 = sbr.rel (0) target = $region17
    $region16: #{esa3d_forward.1} parent=1 // pred_region
      _
    $region17: #{esa3d_forward.1} parent=1 // pred_fallthru
      _
    // Predicated region
    $region18: #{esa3d_forward.1} parent=1 // pred_check
      _
    $region19: #{esa3d_forward.1} parent=1 // pred_check_branch
      %85 = sbr.rel (0) target = $region21
    $region20: #{esa3d_forward.1} parent=1 // pred_region
      _
    $region21: #{esa3d_forward.1} parent=1 // pred_fallthru
      _
    // Predicated region
    $region22: #{esa3d_forward.1} parent=1 // pred_check
      _
    $region23: #{esa3d_forward.1} parent=1 // pred_check_branch
      %87 = sbr.rel (0) target = $region25
    $region24: #{esa3d_forward.1} parent=1 // pred_region
      _
    $region25: #{esa3d_forward.1} parent=1 // pred_fallthru
      _
    // Predicated region
    $region26: #{esa3d_forward.1} parent=1 // pred_check
      _
    $region27: #{esa3d_forward.1} parent=1 // pred_check_branch
      %89 = sbr.rel (0) target = $region29
    $region28: #{esa3d_forward.1} parent=1 // pred_region
      _
    $region29: #{esa3d_forward.1} parent=1 // pred_fallthru
      _
    // Predicated region
    $region30: #{esa3d_forward.1} parent=1 // pred_check
      _
    $region31: #{esa3d_forward.1} parent=1 // pred_check_branch
      %91 = sbr.rel (0) target = $region33
    $region32: #{esa3d_forward.1} parent=1 // pred_region
      _
    $region33: #{esa3d_forward.1} parent=1 // pred_fallthru
      _
    // Predicated region
    $region34: #{esa3d_forward.1} parent=1 // pred_check
      _
    $region35: #{esa3d_forward.1} parent=1 // pred_check_branch
      %93 = sbr.rel (0) target = $region37
    $region36: #{esa3d_forward.1} parent=1 // pred_region
      _
    $region37: #{esa3d_forward.1} parent=1 // pred_fallthru
      _
    // Predicated region
    $region38: #{esa3d_forward.1} parent=1 // pred_check
      _
    $region39: #{esa3d_forward.1} parent=1 // pred_check_branch
      %95 = sbr.rel (0) target = $region41
    $region40: #{esa3d_forward.1} parent=1 // pred_region
      _
    $region41: #{esa3d_forward.1} parent=1 // pred_fallthru
      _
    // Predicated region
    $region42: #{esa3d_forward.1} parent=1 // pred_check
      _
    $region43: #{esa3d_forward.1} parent=1 // pred_check_branch
      %97 = sbr.rel (0) target = $region45
    $region44: #{esa3d_forward.1} parent=1 // pred_region
      _
    $region45: #{esa3d_forward.1} parent=1 // pred_fallthru
      _
    // Predicated region
    $region46: #{esa3d_forward.1} parent=1 // pred_check
      _
    $region47: #{esa3d_forward.1} parent=1 // pred_check_branch
      %99 = sbr.rel (0) target = $region49
    $region48: #{esa3d_forward.1} parent=1 // pred_region
      _
    $region49: #{esa3d_forward.1} parent=1 // pred_fallthru
      _
    // Predicated region
    $region50: #{esa3d_forward.1} parent=1 // pred_check
      _
    $region51: #{esa3d_forward.1} parent=1 // pred_check_branch
      %101 = sbr.rel (0) target = $region53
    $region52: #{esa3d_forward.1} parent=1 // pred_region
      _
    $region53: #{esa3d_forward.1} parent=1 // pred_fallthru
      _
    // Predicated region
    $region54: #{esa3d_forward.1} parent=1 // pred_check
      _
    $region55: #{esa3d_forward.1} parent=1 // pred_check_branch
      %103 = sbr.rel (0) target = $region57
    $region56: #{esa3d_forward.1} parent=1 // pred_region
      _
    $region57: #{esa3d_forward.1} parent=1 // pred_fallthru
      _
    // Predicated region
    $region58: #{esa3d_forward.1} parent=1 // pred_check
      _
    $region59: #{esa3d_forward.1} parent=1 // pred_check_branch
      %105 = sbr.rel (0) target = $region61
    $region60: #{esa3d_forward.1} parent=1 // pred_region
      _
    $region61: #{esa3d_forward.1} parent=1 // pred_fallthru
      _
    // Predicated region
    $region62: #{esa3d_forward.1} parent=1 // pred_check
      _
    $region63: #{esa3d_forward.1} parent=1 // pred_check_branch
      %107 = sbr.rel (0) target = $region65
    $region64: #{esa3d_forward.1} parent=1 // pred_region
      _
    $region65: #{esa3d_forward.1} parent=1 // pred_fallthru
      _
    // Predicated region
    $region66: #{esa3d_forward.1} parent=1 // pred_check
      _
    $region67: #{esa3d_forward.1} parent=1 // pred_check_branch
      %109 = sbr.rel (0) target = $region69
    $region68: #{esa3d_forward.1} parent=1 // pred_region
      _
    $region69: #{esa3d_forward.1} parent=1 // pred_fallthru
      _
    // Predicated region
    $region70: #{esa3d_forward.1} parent=1 // pred_check
      _
    $region71: #{esa3d_forward.1} parent=1 // pred_check_branch
      %111 = sbr.rel (0) target = $region73
    $region72: #{esa3d_forward.1} parent=1 // pred_region
      _
    $region73: #{esa3d_forward.1} parent=1 // pred_fallthru
      _
    // Predicated region
    $region74: #{esa3d_forward.1} parent=1 // pred_check
      _
    $region75: #{esa3d_forward.1} parent=1 // pred_check_branch
      %113 = sbr.rel (0) target = $region77
    $region76: #{esa3d_forward.1} parent=1 // pred_region
      _
    $region77: #{esa3d_forward.1} parent=1 // pred_fallthru
      _
    // Predicated region
    $region78: #{esa3d_forward.1} parent=1 // pred_check
      _
    $region79: #{esa3d_forward.1} parent=1 // pred_check_branch
      %115 = sbr.rel (0) target = $region81
    $region80: #{esa3d_forward.1} parent=1 // pred_region
      _
    $region81: #{esa3d_forward.1} parent=1 // pred_fallthru
      _
    // Predicated region
    $region82: #{esa3d_forward.1} parent=1 // pred_check
      _
    $region83: #{esa3d_forward.1} parent=1 // pred_check_branch
      %117 = sbr.rel (0) target = $region85
    $region84: #{esa3d_forward.1} parent=1 // pred_region
      _
    $region85: #{esa3d_forward.1} parent=1 // pred_fallthru
      _
    // Predicated region
    $region86: #{esa3d_forward.1} parent=1 // pred_check
      _
    $region87: #{esa3d_forward.1} parent=1 // pred_check_branch
      %119 = sbr.rel (0) target = $region89
    $region88: #{esa3d_forward.1} parent=1 // pred_region
      _
    $region89: #{esa3d_forward.1} parent=1 // pred_fallthru
      _
    // Predicated region
    $region90: #{esa3d_forward.1} parent=1 // pred_check
      _
    $region91: #{esa3d_forward.1} parent=1 // pred_check_branch
      %121 = sbr.rel (0) target = $region93
    $region92: #{esa3d_forward.1} parent=1 // pred_region
      _
    $region93: #{esa3d_forward.1} parent=1 // pred_fallthru
      _
    // Predicated region
    $region94: #{esa3d_forward.1} parent=1 // pred_check
      _
    $region95: #{esa3d_forward.1} parent=1 // pred_check_branch
      %123 = sbr.rel (0) target = $region97
    $region96: #{esa3d_forward.1} parent=1 // pred_region
      _
    $region97: #{esa3d_forward.1} parent=1 // pred_fallthru
      _
    // Predicated region
    $region98: #{esa3d_forward.1} parent=1 // pred_check
      _
    $region99: #{esa3d_forward.1} parent=1 // pred_check_branch
      %125 = sbr.rel (0) target = $region101
    $region100: #{esa3d_forward.1} parent=1 // pred_region
      _
    $region101: #{esa3d_forward.1} parent=1 // pred_fallthru
      _
    // Predicated region
    $region102: #{esa3d_forward.1} parent=1 // pred_check
      _
    $region103: #{esa3d_forward.1} parent=1 // pred_check_branch
      %127 = sbr.rel (0) target = $region105
    $region104: #{esa3d_forward.1} parent=1 // pred_region
      _
    $region105: #{esa3d_forward.1} parent=1 // pred_fallthru
      _
    // Predicated region
    $region106: #{esa3d_forward.1} parent=1 // pred_check
      _
    $region107: #{esa3d_forward.1} parent=1 // pred_check_branch
      %129 = sbr.rel (0) target = $region109
    $region108: #{esa3d_forward.1} parent=1 // pred_region
      _
    $region109: #{esa3d_forward.1} parent=1 // pred_fallthru
      _
    // Predicated region
    $region110: #{esa3d_forward.1} parent=1 // pred_check
      _
    $region111: #{esa3d_forward.1} parent=1 // pred_check_branch
      %131 = sbr.rel (0) target = $region113
    $region112: #{esa3d_forward.1} parent=1 // pred_region
      _
    $region113: #{esa3d_forward.1} parent=1 // pred_fallthru
      _
    // Predicated region
    $region114: #{esa3d_forward.1} parent=1 // pred_check
      _
    $region115: #{esa3d_forward.1} parent=1 // pred_check_branch
      %133 = sbr.rel (0) target = $region117
    $region116: #{esa3d_forward.1} parent=1 // pred_region
      _
    $region117: #{esa3d_forward.1} parent=1 // pred_fallthru
      _
    // Predicated region
    $region118: #{esa3d_forward.1} parent=1 // pred_check
      _
    $region119: #{esa3d_forward.1} parent=1 // pred_check_branch
      %135 = sbr.rel (0) target = $region121
    $region120: #{esa3d_forward.1} parent=1 // pred_region
      _
    $region121: #{esa3d_forward.1} parent=1 // pred_fallthru
      _
    // Predicated region
    $region122: #{esa3d_forward.1} parent=1 // pred_check
      _
    $region123: #{esa3d_forward.1} parent=1 // pred_check_branch
      %137 = sbr.rel (0) target = $region125
    $region124: #{esa3d_forward.1} parent=1 // pred_region
      _
    $region125: #{esa3d_forward.1} parent=1 // pred_fallthru
      _
    // Predicated region
    $region126: #{esa3d_forward.1} parent=1 // pred_check
      _
    $region127: #{esa3d_forward.1} parent=1 // pred_check_branch
      %139 = sbr.rel (0) target = $region129
    $region128: #{esa3d_forward.1} parent=1 // pred_region
      _
    $region129: #{esa3d_forward.1} parent=1 // pred_fallthru
      _
    // Predicated region
    $region130: #{esa3d_forward.1} parent=1 // pred_check
      _
    $region131: #{esa3d_forward.1} parent=1 // pred_check_branch
      %141 = sbr.rel (0) target = $region133
    $region132: #{esa3d_forward.1} parent=1 // pred_region
      _
    $region133: #{esa3d_forward.1} parent=1 // pred_fallthru
      _
    %v142 = vld [vmem:[%s1] sm:$0xff]
    %v143 = vld [vmem:[%s3] sm:$0xff]
    %v144 = vld [vmem:[%s5] sm:$0xff]
    %v145 = vld [vmem:[%s7] sm:$0xff]
    %v146 = vld [vmem:[%s7 + $0x8] sm:$0xff]
    %v147 = vld [vmem:[%s7 + $0x10] sm:$0xff]
    %v148 = vld [vmem:[%s7 + $0x18] sm:$0xff]
    %v149 = vld [vmem:[%s7 + $0x20] sm:$0xff]
    %v150 = vld [vmem:[%s7 + $0x28] sm:$0xff]
    %v151 = vld [vmem:[%s7 + $0x30] sm:$0xff]
    %v152 = vld [vmem:[%s7 + $0x38] sm:$0xff]
    %v153 = vld [vmem:[%s9] sm:$0xff]
    %v154 = vld [vmem:[%s9 + $0x8] sm:$0xff]
    %vm155 = vcmask 130048
    %v157 = vsel %vm155, %v142, 0
    %159 = vmatprep.subr.mxu0 0.0
    %160 = vmatpush1.msra.mxu0 %v153
    %161 = vmatprep.subr.mxu0 0.0
    %162 = vmatpush1.msra.mxu0 %v154
    %163 = vmatprep.subr.mxu0 0.0
    %164 = vmatpush1.msra.mxu0 0.0
    %165 = vmatprep.subr.mxu0 0.0
    %166 = vmatpush1.msra.mxu0 0.0
    %167 = vmatprep.subr.mxu0 0.0
    %168 = vmatpush1.msra.mxu0 0.0
    %169 = vmatprep.subr.mxu0 0.0
    %170 = vmatpush1.msra.mxu0 0.0
    %171 = vmatprep.subr.mxu0 0.0
    %172 = vmatpush1.msra.mxu0 0.0
    %173 = vmatprep.subr.mxu0 0.0
    %174 = vmatpush1.msra.mxu0 0.0
    %175 = vmatprep.subr.mxu0 0.0
    %176 = vmatpush1.msra.mxu0 0.0
    %177 = vmatprep.subr.mxu0 0.0
    %178 = vmatpush1.msra.mxu0 0.0
    %179 = vmatprep.subr.mxu0 0.0
    %180 = vmatpush1.msra.mxu0 0.0
    %181 = vmatprep.subr.mxu0 0.0
    %182 = vmatpush1.msra.mxu0 0.0
    %183 = vmatprep.subr.mxu0 0.0
    %184 = vmatpush1.msra.mxu0 0.0
    %185 = vmatprep.subr.mxu0 0.0
    %186 = vmatpush1.msra.mxu0 0.0
    %187 = vmatprep.subr.mxu0 0.0
    %188 = vmatpush1.msra.mxu0 0.0
    %189 = vmatprep.subr.mxu0 0.0
    %190 = vmatpush1.msra.mxu0 0.0
    %191 = vmatprep.subr.mxu0 0.0
    %192 = vmatpush1.msra.mxu0 0.0
    %193 = vmatprep.subr.mxu0 0.0
    %194 = vmatpush1.msra.mxu0 0.0
    %195 = vmatprep.subr.mxu0 0.0
    %196 = vmatpush1.msra.mxu0 0.0
    %197 = vmatprep.subr.mxu0 0.0
    %198 = vmatpush1.msra.mxu0 0.0
    %199 = vmatprep.subr.mxu0 0.0
    %200 = vmatpush1.msra.mxu0 0.0
    %201 = vmatprep.subr.mxu0 0.0
    %202 = vmatpush1.msra.mxu0 0.0
    %203 = vmatprep.subr.mxu0 0.0
    %204 = vmatpush1.msra.mxu0 0.0
    %205 = vmatprep.subr.mxu0 0.0
    %206 = vmatpush1.msra.mxu0 0.0
    %207 = vmatprep.subr.mxu0 0.0
    %208 = vmatpush1.msra.mxu0 0.0
    %209 = vmatprep.subr.mxu0 0.0
    %210 = vmatpush1.msra.mxu0 0.0
    %211 = vmatprep.subr.mxu0 0.0
    %212 = vmatpush1.msra.mxu0 0.0
    %213 = vmatprep.subr.mxu0 0.0
    %214 = vmatpush1.msra.mxu0 0.0
    %215 = vmatprep.subr.mxu0 0.0
    %216 = vmatpush1.msra.mxu0 0.0
    %217 = vmatprep.subr.mxu0 0.0
    %218 = vmatpush1.msra.mxu0 0.0
    %219 = vmatprep.subr.mxu0 0.0
    %220 = vmatpush1.msra.mxu0 0.0
    %221 = vmatprep.subr.mxu0 0.0
    %222 = vmatpush1.msra.mxu0 0.0
    %223 = vmatprep.mubr.f32.mxu0 0.0
    %224 = vmatmul.mubr.f32.gmra.mrb[0].mxu0 %v157
    %v225 = vpop.f32.mrb[0].mxu0
    %v226 = vadd.f32 0.0, %v225
    %v227 = vpop.f32.mrb[0].mxu0
    %228 = vdwg.mxu0
    %v229 = vld [vmem:[%s11] sm:$0xff]
    %v230 = vld [vmem:[%s11 + $0x8] sm:$0xff]
    %231 = vmatprep.subr.mxu0 0.0
    %232 = vmatpush1.msra.mxu0 %v229
    %233 = vmatprep.subr.mxu0 0.0
    %234 = vmatpush1.msra.mxu0 %v230
    %235 = vmatprep.subr.mxu0 0.0
    %236 = vmatpush1.msra.mxu0 0.0
    %237 = vmatprep.subr.mxu0 0.0
    %238 = vmatpush1.msra.mxu0 0.0
    %239 = vmatprep.subr.mxu0 0.0
    %240 = vmatpush1.msra.mxu0 0.0
    %241 = vmatprep.subr.mxu0 0.0
    %242 = vmatpush1.msra.mxu0 0.0
    %243 = vmatprep.subr.mxu0 0.0
    %244 = vmatpush1.msra.mxu0 0.0
    %245 = vmatprep.subr.mxu0 0.0
    %246 = vmatpush1.msra.mxu0 0.0
    %247 = vmatprep.subr.mxu0 0.0
    %248 = vmatpush1.msra.mxu0 0.0
    %249 = vmatprep.subr.mxu0 0.0
    %250 = vmatpush1.msra.mxu0 0.0
    %251 = vmatprep.subr.mxu0 0.0
    %252 = vmatpush1.msra.mxu0 0.0
    %253 = vmatprep.subr.mxu0 0.0
    %254 = vmatpush1.msra.mxu0 0.0
    %255 = vmatprep.subr.mxu0 0.0
    %256 = vmatpush1.msra.mxu0 0.0
    %257 = vmatprep.subr.mxu0 0.0
    %258 = vmatpush1.msra.mxu0 0.0
    %259 = vmatprep.subr.mxu0 0.0
    %260 = vmatpush1.msra.mxu0 0.0
    %261 = vmatprep.subr.mxu0 0.0
    %262 = vmatpush1.msra.mxu0 0.0
    %263 = vmatprep.subr.mxu0 0.0
    %264 = vmatpush1.msra.mxu0 0.0
    %265 = vmatprep.subr.mxu0 0.0
    %266 = vmatpush1.msra.mxu0 0.0
    %267 = vmatprep.subr.mxu0 0.0
    %268 = vmatpush1.msra.mxu0 0.0
    %269 = vmatprep.subr.mxu0 0.0
    %270 = vmatpush1.msra.mxu0 0.0
    %271 = vmatprep.subr.mxu0 0.0
    %272 = vmatpush1.msra.mxu0 0.0
    %273 = vmatprep.subr.mxu0 0.0
    %274 = vmatpush1.msra.mxu0 0.0
    %275 = vmatprep.subr.mxu0 0.0
    %276 = vmatpush1.msra.mxu0 0.0
    %277 = vmatprep.subr.mxu0 0.0
    %278 = vmatpush1.msra.mxu0 0.0
    %279 = vmatprep.subr.mxu0 0.0
    %280 = vmatpush1.msra.mxu0 0.0
    %281 = vmatprep.subr.mxu0 0.0
    %282 = vmatpush1.msra.mxu0 0.0
    %283 = vmatprep.subr.mxu0 0.0
    %284 = vmatpush1.msra.mxu0 0.0
    %285 = vmatprep.subr.mxu0 0.0
    %286 = vmatpush1.msra.mxu0 0.0
    %287 = vmatprep.subr.mxu0 0.0
    %288 = vmatpush1.msra.mxu0 0.0
    %289 = vmatprep.subr.mxu0 0.0
    %290 = vmatpush1.msra.mxu0 0.0
    %291 = vmatprep.subr.mxu0 0.0
    %292 = vmatpush1.msra.mxu0 0.0
    %293 = vmatprep.subr.mxu0 0.0
    %294 = vmatpush1.msra.mxu0 0.0
    %295 = vmatprep.mubr.f32.mxu0 0.0
    %296 = vmatmul.mubr.f32.gmra.mrb[0].mxu0 %v157
    %v297 = vpop.f32.mrb[0].mxu0
    %v298 = vadd.f32 0.0, %v297
    %v299 = vpop.f32.mrb[0].mxu0
    %300 = vdwg.mxu0
    %v301 = vld [vmem:[%s13] sm:$0xff]
    %v302 = vld [vmem:[%s13 + $0x8] sm:$0xff]
    %303 = vmatprep.subr.mxu0 0.0
    %304 = vmatpush1.msra.mxu0 %v301
    %305 = vmatprep.subr.mxu0 0.0
    %306 = vmatpush1.msra.mxu0 %v302
    %307 = vmatprep.subr.mxu0 0.0
    %308 = vmatpush1.msra.mxu0 0.0
    %309 = vmatprep.subr.mxu0 0.0
    %310 = vmatpush1.msra.mxu0 0.0
    %311 = vmatprep.subr.mxu0 0.0
    %312 = vmatpush1.msra.mxu0 0.0
    %313 = vmatprep.subr.mxu0 0.0
    %314 = vmatpush1.msra.mxu0 0.0
    %315 = vmatprep.subr.mxu0 0.0
    %316 = vmatpush1.msra.mxu0 0.0
    %317 = vmatprep.subr.mxu0 0.0
    %318 = vmatpush1.msra.mxu0 0.0
    %319 = vmatprep.subr.mxu0 0.0
    %320 = vmatpush1.msra.mxu0 0.0
    %321 = vmatprep.subr.mxu0 0.0
    %322 = vmatpush1.msra.mxu0 0.0
    %323 = vmatprep.subr.mxu0 0.0
    %324 = vmatpush1.msra.mxu0 0.0
    %325 = vmatprep.subr.mxu0 0.0
    %326 = vmatpush1.msra.mxu0 0.0
    %327 = vmatprep.subr.mxu0 0.0
    %328 = vmatpush1.msra.mxu0 0.0
    %329 = vmatprep.subr.mxu0 0.0
    %330 = vmatpush1.msra.mxu0 0.0
    %331 = vmatprep.subr.mxu0 0.0
    %332 = vmatpush1.msra.mxu0 0.0
    %333 = vmatprep.subr.mxu0 0.0
    %334 = vmatpush1.msra.mxu0 0.0
    %335 = vmatprep.subr.mxu0 0.0
    %336 = vmatpush1.msra.mxu0 0.0
    %337 = vmatprep.subr.mxu0 0.0
    %338 = vmatpush1.msra.mxu0 0.0
    %339 = vmatprep.subr.mxu0 0.0
    %340 = vmatpush1.msra.mxu0 0.0
    %341 = vmatprep.subr.mxu0 0.0
    %342 = vmatpush1.msra.mxu0 0.0
    %343 = vmatprep.subr.mxu0 0.0
    %344 = vmatpush1.msra.mxu0 0.0
    %345 = vmatprep.subr.mxu0 0.0
    %346 = vmatpush1.msra.mxu0 0.0
    %347 = vmatprep.subr.mxu0 0.0
    %348 = vmatpush1.msra.mxu0 0.0
    %349 = vmatprep.subr.mxu0 0.0
    %350 = vmatpush1.msra.mxu0 0.0
    %351 = vmatprep.subr.mxu0 0.0
    %352 = vmatpush1.msra.mxu0 0.0
    %353 = vmatprep.subr.mxu0 0.0
    %354 = vmatpush1.msra.mxu0 0.0
    %355 = vmatprep.subr.mxu0 0.0
    %356 = vmatpush1.msra.mxu0 0.0
    %357 = vmatprep.subr.mxu0 0.0
    %358 = vmatpush1.msra.mxu0 0.0
    %359 = vmatprep.subr.mxu0 0.0
    %360 = vmatpush1.msra.mxu0 0.0
    %361 = vmatprep.subr.mxu0 0.0
    %362 = vmatpush1.msra.mxu0 0.0
    %363 = vmatprep.subr.mxu0 0.0
    %364 = vmatpush1.msra.mxu0 0.0
    %365 = vmatprep.subr.mxu0 0.0
    %366 = vmatpush1.msra.mxu0 0.0
    %367 = vmatprep.mubr.f32.mxu0 0.0
    %368 = vmatmul.mubr.f32.gmra.mrb[0].mxu0 %v157
    %v369 = vpop.f32.mrb[0].mxu0
    %v370 = vadd.f32 0.0, %v369
    %v371 = vpop.f32.mrb[0].mxu0
    %372 = vdwg.mxu0
    %v374 = vcombine.high %v144, %v144
    %v376 = vunpack.c.l.s4 1966171168
    %v377 = vunpack.c.0.s8 %v376
    %v378 = vlaneseq
    %v379 = vshrl.u32 %v378, 7
    %v380 = vsub.s32 %v377, %v379
    %v381 = vrot.slane %v144, %v380
    %v383 = vunpack.c.l.s4 1966171168
    %v384 = vunpack.c.0.s8 %v383
    %v385 = vlaneseq
    %v386 = vshrl.u32 %v385, 7
    %v387 = vsub.s32 %v384, %v386
    %v388 = vrot.slane %v374, %v387
    %v389 = vcombine.high %v381, %v381
    %v390 = vcombine.high %v388, %v388
    %v392 = vunpack.c.l.s4 1966171168
    %v393 = vunpack.c.0.s8 %v392
    %v394 = vlaneseq
    %v395 = vshrl.u32 %v394, 7
    %v396 = vsub.s32 %v393, %v395
    %v397 = vrot.slane %v381, %v396
    %v399 = vunpack.c.l.s4 1966171168
    %v400 = vunpack.c.0.s8 %v399
    %v401 = vlaneseq
    %v402 = vshrl.u32 %v401, 7
    %v403 = vsub.s32 %v400, %v402
    %v404 = vrot.slane %v388, %v403
    %v406 = vunpack.c.l.s4 1966171168
    %v407 = vunpack.c.0.s8 %v406
    %v408 = vlaneseq
    %v409 = vshrl.u32 %v408, 7
    %v410 = vsub.s32 %v407, %v409
    %v411 = vrot.slane %v389, %v410
    %v413 = vunpack.c.l.s4 1966171168
    %v414 = vunpack.c.0.s8 %v413
    %v415 = vlaneseq
    %v416 = vshrl.u32 %v415, 7
    %v417 = vsub.s32 %v414, %v416
    %v418 = vrot.slane %v390, %v417
    %v419 = vcombine.high %v397, %v397
    %v420 = vcombine.high %v404, %v404
    %v421 = vcombine.high %v411, %v411
    %v422 = vcombine.high %v418, %v418
    %v423 = vlaneseq
    %v424 = vshrl.u32 %v423, 7
    %v425 = vsub.s32 0, %v424
    %v426 = vrot.slane %v397, %v425
    %v427 = vlaneseq
    %v428 = vshrl.u32 %v427, 7
    %v429 = vsub.s32 0, %v428
    %v430 = vrot.slane %v411, %v429
    %v431 = vlaneseq
    %v432 = vshrl.u32 %v431, 7
    %v433 = vsub.s32 0, %v432
    %v434 = vrot.slane %v419, %v433
    %v435 = vlaneseq
    %v436 = vshrl.u32 %v435, 7
    %v437 = vsub.s32 0, %v436
    %v438 = vrot.slane %v421, %v437
    %v439 = vlaneseq
    %v440 = vshrl.u32 %v439, 7
    %v441 = vsub.s32 0, %v440
    %v442 = vrot.slane %v404, %v441
    %v443 = vlaneseq
    %v444 = vshrl.u32 %v443, 7
    %v445 = vsub.s32 0, %v444
    %v446 = vrot.slane %v418, %v445
    %v447 = vlaneseq
    %v448 = vshrl.u32 %v447, 7
    %v449 = vsub.s32 0, %v448
    %v450 = vrot.slane %v420, %v449
    %v451 = vlaneseq
    %v452 = vshrl.u32 %v451, 7
    %v453 = vsub.s32 0, %v452
    %v454 = vrot.slane %v422, %v453
    %v463 = vsub.f32 %v426, %v144
    %v464 = vsub.f32 %v430, %v144
    %v465 = vsub.f32 %v434, %v144
    %v466 = vsub.f32 %v438, %v144
    %v467 = vsub.f32 %v442, %v144
    %v468 = vsub.f32 %v446, %v144
    %v469 = vsub.f32 %v450, %v144
    %v470 = vsub.f32 %v454, %v144
    %v471 = vmul.f32 %v463, %v463
    %v472 = vmul.f32 %v464, %v464
    %v473 = vmul.f32 %v465, %v465
    %v474 = vmul.f32 %v466, %v466
    %v475 = vmul.f32 %v467, %v467
    %v476 = vmul.f32 %v468, %v468
    %v477 = vmul.f32 %v469, %v469
    %v478 = vmul.f32 %v470, %v470
    %vm479 = vcmask 23552
    %v480 = vsel %vm479, %v471, 0.0
    %481 = vadd.xlane.f32.xlu0 %v480
    %v482 = vpop.xlane.xlu0 %481
    %v483 = vsel %vm479, %v472, 0.0
    %484 = vadd.xlane.f32.xlu0 %v483
    %v485 = vpop.xlane.xlu0 %484
    %v486 = vsel %vm479, %v473, 0.0
    %487 = vadd.xlane.f32.xlu0 %v486
    %v488 = vpop.xlane.xlu0 %487
    %v489 = vsel %vm479, %v474, 0.0
    %490 = vadd.xlane.f32.xlu0 %v489
    %v491 = vpop.xlane.xlu0 %490
    %v492 = vsel %vm479, %v475, 0.0
    %493 = vadd.xlane.f32.xlu0 %v492
    %v494 = vpop.xlane.xlu0 %493
    %v495 = vsel %vm479, %v476, 0.0
    %496 = vadd.xlane.f32.xlu0 %v495
    %v497 = vpop.xlane.xlu0 %496
    %v498 = vsel %vm479, %v477, 0.0
    %499 = vadd.xlane.f32.xlu0 %v498
    %v500 = vpop.xlane.xlu0 %499
    %v501 = vsel %vm479, %v478, 0.0
    %502 = vadd.xlane.f32.xlu0 %v501
    %v503 = vpop.xlane.xlu0 %502
    %v504 = vrsqrt.pop %v482
    %v505 = vmul.f32 %v482, %v504
    %vm506 = vcmp.eq.f32.partialorder %v482, inf
    %v507 = vsel %vm506, %v482, %v505
    %vm508 = vcmp.eq.f32.partialorder %v482, 0.0
    %v509 = vand.u32 %v482, 2147483648
    %v510 = vsel %vm508, %v509, %v507
    %v511 = vrsqrt.pop %v485
    %v512 = vmul.f32 %v485, %v511
    %vm513 = vcmp.eq.f32.partialorder %v485, inf
    %v514 = vsel %vm513, %v485, %v512
    %vm515 = vcmp.eq.f32.partialorder %v485, 0.0
    %v516 = vand.u32 %v485, 2147483648
    %v517 = vsel %vm515, %v516, %v514
    %v518 = vrsqrt.pop %v488
    %v519 = vmul.f32 %v488, %v518
    %vm520 = vcmp.eq.f32.partialorder %v488, inf
    %v521 = vsel %vm520, %v488, %v519
    %vm522 = vcmp.eq.f32.partialorder %v488, 0.0
    %v523 = vand.u32 %v488, 2147483648
    %v524 = vsel %vm522, %v523, %v521
    %v525 = vrsqrt.pop %v491
    %v526 = vmul.f32 %v491, %v525
    %vm527 = vcmp.eq.f32.partialorder %v491, inf
    %v528 = vsel %vm527, %v491, %v526
    %vm529 = vcmp.eq.f32.partialorder %v491, 0.0
    %v530 = vand.u32 %v491, 2147483648
    %v531 = vsel %vm529, %v530, %v528
    %v532 = vrsqrt.pop %v494
    %v533 = vmul.f32 %v494, %v532
    %vm534 = vcmp.eq.f32.partialorder %v494, inf
    %v535 = vsel %vm534, %v494, %v533
    %vm536 = vcmp.eq.f32.partialorder %v494, 0.0
    %v537 = vand.u32 %v494, 2147483648
    %v538 = vsel %vm536, %v537, %v535
    %v539 = vrsqrt.pop %v497
    %v540 = vmul.f32 %v497, %v539
    %vm541 = vcmp.eq.f32.partialorder %v497, inf
    %v542 = vsel %vm541, %v497, %v540
    %vm543 = vcmp.eq.f32.partialorder %v497, 0.0
    %v544 = vand.u32 %v497, 2147483648
    %v545 = vsel %vm543, %v544, %v542
    %v546 = vrsqrt.pop %v500
    %v547 = vmul.f32 %v500, %v546
    %vm548 = vcmp.eq.f32.partialorder %v500, inf
    %v549 = vsel %vm548, %v500, %v547
    %vm550 = vcmp.eq.f32.partialorder %v500, 0.0
    %v551 = vand.u32 %v500, 2147483648
    %v552 = vsel %vm550, %v551, %v549
    %v553 = vrsqrt.pop %v503
    %v554 = vmul.f32 %v503, %v553
    %vm555 = vcmp.eq.f32.partialorder %v503, inf
    %v556 = vsel %vm555, %v503, %v554
    %vm557 = vcmp.eq.f32.partialorder %v503, 0.0
    %v558 = vand.u32 %v503, 2147483648
    %v559 = vsel %vm557, %v558, %v556
    %vm560 = vcmp.le.f32.partialorder %v510, 10.0
    %vm561 = vcmp.le.f32.partialorder %v517, 10.0
    %vm562 = vcmp.le.f32.partialorder %v524, 10.0
    %vm563 = vcmp.le.f32.partialorder %v531, 10.0
    %vm564 = vcmp.le.f32.partialorder %v538, 10.0
    %vm565 = vcmp.le.f32.partialorder %v545, 10.0
    %vm566 = vcmp.le.f32.partialorder %v552, 10.0
    %vm567 = vcmp.le.f32.partialorder %v559, 10.0
    %v568 = vld [vmem:[%s17] sm:$0x1]
    %v569 = vsub.f32 0.0, %v568
    %v570 = vld [vmem:[%s15] sm:$0x1]
    %v572 = vlaneseq
    %v573 = vshrl.u32 %v572, 7
    %v574 = vsub.s32 0, %v573
    %v575 = vrot.slane %v570, %v574
    %v577 = vsub.f32 %v510, %v575
    %v578 = vsub.f32 %v517, %v575
    %v579 = vsub.f32 %v524, %v575
    %v580 = vsub.f32 %v531, %v575
    %v581 = vsub.f32 %v538, %v575
    %v582 = vsub.f32 %v545, %v575
    %v583 = vsub.f32 %v552, %v575
    %v584 = vsub.f32 %v559, %v575
    %v585 = vmul.f32 %v577, %v577
    %v586 = vmul.f32 %v578, %v578
    %v587 = vmul.f32 %v579, %v579
    %v588 = vmul.f32 %v580, %v580
    %v589 = vmul.f32 %v581, %v581
    %v590 = vmul.f32 %v582, %v582
    %v591 = vmul.f32 %v583, %v583
    %v592 = vmul.f32 %v584, %v584
    %v594 = vlaneseq
    %v595 = vshrl.u32 %v594, 7
    %v596 = vsub.s32 0, %v595
    %v597 = vrot.slane %v569, %v596
    %v599 = vmul.f32 %v597, %v585
    %v600 = vmul.f32 %v597, %v586
    %v601 = vmul.f32 %v597, %v587
    %v602 = vmul.f32 %v597, %v588
    %v603 = vmul.f32 %v597, %v589
    %v604 = vmul.f32 %v597, %v590
    %v605 = vmul.f32 %v597, %v591
    %v606 = vmul.f32 %v597, %v592
    %v607 = vmul.f32 %v599, 1.442695
    %v608 = vpow.pop %v607
    %v609 = vmul.f32 %v600, 1.442695
    %v610 = vpow.pop %v609
    %v611 = vmul.f32 %v601, 1.442695
    %v612 = vpow.pop %v611
    %v613 = vmul.f32 %v602, 1.442695
    %v614 = vpow.pop %v613
    %v615 = vmul.f32 %v603, 1.442695
    %v616 = vpow.pop %v615
    %v617 = vmul.f32 %v604, 1.442695
    %v618 = vpow.pop %v617
    %v619 = vmul.f32 %v605, 1.442695
    %v620 = vpow.pop %v619
    %v621 = vmul.f32 %v606, 1.442695
    %v622 = vpow.pop %v621
    %v623 = vsel %vm560, 1, 0
    %v624 = vsel %vm561, 1, 0
    %v625 = vsel %vm562, 1, 0
    %v626 = vsel %vm563, 1, 0
    %v627 = vsel %vm564, 1, 0
    %v628 = vsel %vm565, 1, 0
    %v629 = vsel %vm566, 1, 0
    %v630 = vsel %vm567, 1, 0
    %v631 = vcvt.s32.f32 %v623
    %v632 = vcvt.s32.f32 %v624
    %v633 = vcvt.s32.f32 %v625
    %v634 = vcvt.s32.f32 %v626
    %v635 = vcvt.s32.f32 %v627
    %v636 = vcvt.s32.f32 %v628
    %v637 = vcvt.s32.f32 %v629
    %v638 = vcvt.s32.f32 %v630
    %v639 = vmul.f32 %v608, %v631
    %v640 = vmul.f32 %v610, %v632
    %v641 = vmul.f32 %v612, %v633
    %v642 = vmul.f32 %v614, %v634
    %v643 = vmul.f32 %v616, %v635
    %v644 = vmul.f32 %v618, %v636
    %v645 = vmul.f32 %v620, %v637
    %v646 = vmul.f32 %v622, %v638
    %v648 = vcombine.high %v226, %v226
    %v650 = vunpack.c.l.s4 1966171168
    %v651 = vunpack.c.0.s8 %v650
    %v652 = vlaneseq
    %v653 = vshrl.u32 %v652, 7
    %v654 = vsub.s32 %v651, %v653
    %v655 = vrot.slane %v226, %v654
    %v657 = vunpack.c.l.s4 1966171168
    %v658 = vunpack.c.0.s8 %v657
    %v659 = vlaneseq
    %v660 = vshrl.u32 %v659, 7
    %v661 = vsub.s32 %v658, %v660
    %v662 = vrot.slane %v648, %v661
    %v663 = vcombine.high %v655, %v655
    %v664 = vcombine.high %v662, %v662
    %v666 = vunpack.c.l.s4 1966171168
    %v667 = vunpack.c.0.s8 %v666
    %v668 = vlaneseq
    %v669 = vshrl.u32 %v668, 7
    %v670 = vsub.s32 %v667, %v669
    %v671 = vrot.slane %v655, %v670
    %v673 = vunpack.c.l.s4 1966171168
    %v674 = vunpack.c.0.s8 %v673
    %v675 = vlaneseq
    %v676 = vshrl.u32 %v675, 7
    %v677 = vsub.s32 %v674, %v676
    %v678 = vrot.slane %v662, %v677
    %v680 = vunpack.c.l.s4 1966171168
    %v681 = vunpack.c.0.s8 %v680
    %v682 = vlaneseq
    %v683 = vshrl.u32 %v682, 7
    %v684 = vsub.s32 %v681, %v683
    %v685 = vrot.slane %v663, %v684
    %v687 = vunpack.c.l.s4 1966171168
    %v688 = vunpack.c.0.s8 %v687
    %v689 = vlaneseq
    %v690 = vshrl.u32 %v689, 7
    %v691 = vsub.s32 %v688, %v690
    %v692 = vrot.slane %v664, %v691
    %v693 = vcombine.high %v671, %v671
    %v694 = vcombine.high %v678, %v678
    %v695 = vcombine.high %v685, %v685
    %v696 = vcombine.high %v692, %v692
    %v697 = vlaneseq
    %v698 = vshrl.u32 %v697, 7
    %v699 = vsub.s32 0, %v698
    %v700 = vrot.slane %v671, %v699
    %v701 = vlaneseq
    %v702 = vshrl.u32 %v701, 7
    %v703 = vsub.s32 0, %v702
    %v704 = vrot.slane %v685, %v703
    %v705 = vlaneseq
    %v706 = vshrl.u32 %v705, 7
    %v707 = vsub.s32 0, %v706
    %v708 = vrot.slane %v693, %v707
    %v709 = vlaneseq
    %v710 = vshrl.u32 %v709, 7
    %v711 = vsub.s32 0, %v710
    %v712 = vrot.slane %v695, %v711
    %v713 = vlaneseq
    %v714 = vshrl.u32 %v713, 7
    %v715 = vsub.s32 0, %v714
    %v716 = vrot.slane %v678, %v715
    %v717 = vlaneseq
    %v718 = vshrl.u32 %v717, 7
    %v719 = vsub.s32 0, %v718
    %v720 = vrot.slane %v692, %v719
    %v721 = vlaneseq
    %v722 = vshrl.u32 %v721, 7
    %v723 = vsub.s32 0, %v722
    %v724 = vrot.slane %v694, %v723
    %v725 = vlaneseq
    %v726 = vshrl.u32 %v725, 7
    %v727 = vsub.s32 0, %v726
    %v728 = vrot.slane %v696, %v727
    %v737 = vmul.f32 %v700, %v298
    %v738 = vmul.f32 %v704, %v298
    %v739 = vmul.f32 %v708, %v298
    %v740 = vmul.f32 %v712, %v298
    %v741 = vmul.f32 %v716, %v298
    %v742 = vmul.f32 %v720, %v298
    %v743 = vmul.f32 %v724, %v298
    %v744 = vmul.f32 %v728, %v298
    %v745 = vld [vmem:[%s19] sm:$0xff]
    %v746 = vld [vmem:[%s19 + $0x8] sm:$0xff]
    %v747 = vld [vmem:[%s21] sm:$0xff]
    %v748 = vld [vmem:[%s21 + $0x8] sm:$0xff]
    %v750 = vsel %vm155, %v298, 0
    %752 = vmatprep.subr.mxu0 0.0
    %753 = vmatpush1.msra.mxu0 %v747
    %754 = vmatprep.subr.mxu0 0.0
    %755 = vmatpush1.msra.mxu0 %v748
    %756 = vmatprep.subr.mxu0 0.0
    %757 = vmatpush1.msra.mxu0 0.0
    %758 = vmatprep.subr.mxu0 0.0
    %759 = vmatpush1.msra.mxu0 0.0
    %760 = vmatprep.subr.mxu0 0.0
    %761 = vmatpush1.msra.mxu0 0.0
    %762 = vmatprep.subr.mxu0 0.0
    %763 = vmatpush1.msra.mxu0 0.0
    %764 = vmatprep.subr.mxu0 0.0
    %765 = vmatpush1.msra.mxu0 0.0
    %766 = vmatprep.subr.mxu0 0.0
    %767 = vmatpush1.msra.mxu0 0.0
    %768 = vmatprep.subr.mxu0 0.0
    %769 = vmatpush1.msra.mxu0 0.0
    %770 = vmatprep.subr.mxu0 0.0
    %771 = vmatpush1.msra.mxu0 0.0
    %772 = vmatprep.subr.mxu0 0.0
    %773 = vmatpush1.msra.mxu0 0.0
    %774 = vmatprep.subr.mxu0 0.0
    %775 = vmatpush1.msra.mxu0 0.0
    %776 = vmatprep.subr.mxu0 0.0
    %777 = vmatpush1.msra.mxu0 0.0
    %778 = vmatprep.subr.mxu0 0.0
    %779 = vmatpush1.msra.mxu0 0.0
    %780 = vmatprep.subr.mxu0 0.0
    %781 = vmatpush1.msra.mxu0 0.0
    %782 = vmatprep.subr.mxu0 0.0
    %783 = vmatpush1.msra.mxu0 0.0
    %784 = vmatprep.subr.mxu0 0.0
    %785 = vmatpush1.msra.mxu0 0.0
    %786 = vmatprep.subr.mxu0 0.0
    %787 = vmatpush1.msra.mxu0 0.0
    %788 = vmatprep.subr.mxu0 0.0
    %789 = vmatpush1.msra.mxu0 0.0
    %790 = vmatprep.subr.mxu0 0.0
    %791 = vmatpush1.msra.mxu0 0.0
    %792 = vmatprep.subr.mxu0 0.0
    %793 = vmatpush1.msra.mxu0 0.0
    %794 = vmatprep.subr.mxu0 0.0
    %795 = vmatpush1.msra.mxu0 0.0
    %796 = vmatprep.subr.mxu0 0.0
    %797 = vmatpush1.msra.mxu0 0.0
    %798 = vmatprep.subr.mxu0 0.0
    %799 = vmatpush1.msra.mxu0 0.0
    %800 = vmatprep.subr.mxu0 0.0
    %801 = vmatpush1.msra.mxu0 0.0
    %802 = vmatprep.subr.mxu0 0.0
    %803 = vmatpush1.msra.mxu0 0.0
    %804 = vmatprep.subr.mxu0 0.0
    %805 = vmatpush1.msra.mxu0 0.0
    %806 = vmatprep.subr.mxu0 0.0
    %807 = vmatpush1.msra.mxu0 0.0
    %808 = vmatprep.subr.mxu0 0.0
    %809 = vmatpush1.msra.mxu0 0.0
    %810 = vmatprep.subr.mxu0 0.0
    %811 = vmatpush1.msra.mxu0 0.0
    %812 = vmatprep.subr.mxu0 0.0
    %813 = vmatpush1.msra.mxu0 0.0
    %814 = vmatprep.subr.mxu0 0.0
    %815 = vmatpush1.msra.mxu0 0.0
    %816 = vmatprep.mubr.f32.mxu0 0.0
    %817 = vmatmul.mubr.f32.gmra.mrb[0].mxu0 %v750
    %v818 = vpop.f32.mrb[0].mxu0
    %v819 = vadd.f32 0.0, %v818
    %v820 = vpop.f32.mrb[0].mxu0
    %821 = vmatprep.mubr.f32.mxu0 0.0
    %822 = vmatmul.mubr.f32.gmra.mrb[0].mxu0 %v750
    %v823 = vpop.f32.mrb[0].mxu0
    %v824 = vadd.f32 0.0, %v823
    %v825 = vpop.f32.mrb[0].mxu0
    %826 = vmatprep.mubr.f32.mxu0 0.0
    %827 = vmatmul.mubr.f32.gmra.mrb[0].mxu0 %v750
    %v828 = vpop.f32.mrb[0].mxu0
    %v829 = vadd.f32 0.0, %v828
    %v830 = vpop.f32.mrb[0].mxu0
    %831 = vmatprep.mubr.f32.mxu0 0.0
    %832 = vmatmul.mubr.f32.gmra.mrb[0].mxu0 %v750
    %v833 = vpop.f32.mrb[0].mxu0
    %v834 = vadd.f32 0.0, %v833
    %v835 = vpop.f32.mrb[0].mxu0
    %836 = vmatprep.mubr.f32.mxu0 0.0
    %837 = vmatmul.mubr.f32.gmra.mrb[0].mxu0 %v750
    %v838 = vpop.f32.mrb[0].mxu0
    %v839 = vadd.f32 0.0, %v838
    %v840 = vpop.f32.mrb[0].mxu0
    %841 = vmatprep.mubr.f32.mxu0 0.0
    %842 = vmatmul.mubr.f32.gmra.mrb[0].mxu0 %v750
    %v843 = vpop.f32.mrb[0].mxu0
    %v844 = vadd.f32 0.0, %v843
    %v845 = vpop.f32.mrb[0].mxu0
    %846 = vmatprep.mubr.f32.mxu0 0.0
    %847 = vmatmul.mubr.f32.gmra.mrb[0].mxu0 %v750
    %v848 = vpop.f32.mrb[0].mxu0
    %v849 = vadd.f32 0.0, %v848
    %v850 = vpop.f32.mrb[0].mxu0
    %851 = vmatprep.mubr.f32.mxu0 0.0
    %852 = vmatmul.mubr.f32.gmra.mrb[0].mxu0 %v750
    %v853 = vpop.f32.mrb[0].mxu0
    %v854 = vadd.f32 0.0, %v853
    %v855 = vpop.f32.mrb[0].mxu0
    %856 = vdwg.mxu0
    %v857 = vsel %vm155, %v700, 0
    %v859 = vsel %vm155, %v704, 0
    %v861 = vsel %vm155, %v708, 0
    %v863 = vsel %vm155, %v712, 0
    %v865 = vsel %vm155, %v716, 0
    %v867 = vsel %vm155, %v720, 0
    %v869 = vsel %vm155, %v724, 0
    %v871 = vsel %vm155, %v728, 0
    %873 = vmatprep.subr.mxu0 0.0
    %874 = vmatpush1.msra.mxu0 %v745
    %875 = vmatprep.subr.mxu0 0.0
    %876 = vmatpush1.msra.mxu0 %v746
    %877 = vmatprep.subr.mxu0 0.0
    %878 = vmatpush1.msra.mxu0 0.0
    %879 = vmatprep.subr.mxu0 0.0
    %880 = vmatpush1.msra.mxu0 0.0
    %881 = vmatprep.subr.mxu0 0.0
    %882 = vmatpush1.msra.mxu0 0.0
    %883 = vmatprep.subr.mxu0 0.0
    %884 = vmatpush1.msra.mxu0 0.0
    %885 = vmatprep.subr.mxu0 0.0
    %886 = vmatpush1.msra.mxu0 0.0
    %887 = vmatprep.subr.mxu0 0.0
    %888 = vmatpush1.msra.mxu0 0.0
    %889 = vmatprep.subr.mxu0 0.0
    %890 = vmatpush1.msra.mxu0 0.0
    %891 = vmatprep.subr.mxu0 0.0
    %892 = vmatpush1.msra.mxu0 0.0
    %893 = vmatprep.subr.mxu0 0.0
    %894 = vmatpush1.msra.mxu0 0.0
    %895 = vmatprep.subr.mxu0 0.0
    %896 = vmatpush1.msra.mxu0 0.0
    %897 = vmatprep.subr.mxu0 0.0
    %898 = vmatpush1.msra.mxu0 0.0
    %899 = vmatprep.subr.mxu0 0.0
    %900 = vmatpush1.msra.mxu0 0.0
    %901 = vmatprep.subr.mxu0 0.0
    %902 = vmatpush1.msra.mxu0 0.0
    %903 = vmatprep.subr.mxu0 0.0
    %904 = vmatpush1.msra.mxu0 0.0
    %905 = vmatprep.subr.mxu0 0.0
    %906 = vmatpush1.msra.mxu0 0.0
    %907 = vmatprep.subr.mxu0 0.0
    %908 = vmatpush1.msra.mxu0 0.0
    %909 = vmatprep.subr.mxu0 0.0
    %910 = vmatpush1.msra.mxu0 0.0
    %911 = vmatprep.subr.mxu0 0.0
    %912 = vmatpush1.msra.mxu0 0.0
    %913 = vmatprep.subr.mxu0 0.0
    %914 = vmatpush1.msra.mxu0 0.0
    %915 = vmatprep.subr.mxu0 0.0
    %916 = vmatpush1.msra.mxu0 0.0
    %917 = vmatprep.subr.mxu0 0.0
    %918 = vmatpush1.msra.mxu0 0.0
    %919 = vmatprep.subr.mxu0 0.0
    %920 = vmatpush1.msra.mxu0 0.0
    %921 = vmatprep.subr.mxu0 0.0
    %922 = vmatpush1.msra.mxu0 0.0
    %923 = vmatprep.subr.mxu0 0.0
    %924 = vmatpush1.msra.mxu0 0.0
    %925 = vmatprep.subr.mxu0 0.0
    %926 = vmatpush1.msra.mxu0 0.0
    %927 = vmatprep.subr.mxu0 0.0
    %928 = vmatpush1.msra.mxu0 0.0
    %929 = vmatprep.subr.mxu0 0.0
    %930 = vmatpush1.msra.mxu0 0.0
    %931 = vmatprep.subr.mxu0 0.0
    %932 = vmatpush1.msra.mxu0 0.0
    %933 = vmatprep.subr.mxu0 0.0
    %934 = vmatpush1.msra.mxu0 0.0
    %935 = vmatprep.subr.mxu0 0.0
    %936 = vmatpush1.msra.mxu0 0.0
    %937 = vmatprep.mubr.f32.mxu0 0.0
    %938 = vmatmul.mubr.f32.gmra.mrb[0].mxu0 %v857
    %v939 = vpop.f32.mrb[0].mxu0
    %v940 = vadd.f32 %v819, %v939
    %v941 = vpop.f32.mrb[0].mxu0
    %942 = vmatprep.mubr.f32.mxu0 0.0
    %943 = vmatmul.mubr.f32.gmra.mrb[0].mxu0 %v859
    %v944 = vpop.f32.mrb[0].mxu0
    %v945 = vadd.f32 %v824, %v944
    %v946 = vpop.f32.mrb[0].mxu0
    %947 = vmatprep.mubr.f32.mxu0 0.0
    %948 = vmatmul.mubr.f32.gmra.mrb[0].mxu0 %v861
    %v949 = vpop.f32.mrb[0].mxu0
    %v950 = vadd.f32 %v829, %v949
    %v951 = vpop.f32.mrb[0].mxu0
    %952 = vmatprep.mubr.f32.mxu0 0.0
    %953 = vmatmul.mubr.f32.gmra.mrb[0].mxu0 %v863
    %v954 = vpop.f32.mrb[0].mxu0
    %v955 = vadd.f32 %v834, %v954
    %v956 = vpop.f32.mrb[0].mxu0
    %957 = vmatprep.mubr.f32.mxu0 0.0
    %958 = vmatmul.mubr.f32.gmra.mrb[0].mxu0 %v865
    %v959 = vpop.f32.mrb[0].mxu0
    %v960 = vadd.f32 %v839, %v959
    %v961 = vpop.f32.mrb[0].mxu0
    %962 = vmatprep.mubr.f32.mxu0 0.0
    %963 = vmatmul.mubr.f32.gmra.mrb[0].mxu0 %v867
    %v964 = vpop.f32.mrb[0].mxu0
    %v965 = vadd.f32 %v844, %v964
    %v966 = vpop.f32.mrb[0].mxu0
    %967 = vmatprep.mubr.f32.mxu0 0.0
    %968 = vmatmul.mubr.f32.gmra.mrb[0].mxu0 %v869
    %v969 = vpop.f32.mrb[0].mxu0
    %v970 = vadd.f32 %v849, %v969
    %v971 = vpop.f32.mrb[0].mxu0
    %972 = vmatprep.mubr.f32.mxu0 0.0
    %973 = vmatmul.mubr.f32.gmra.mrb[0].mxu0 %v871
    %v974 = vpop.f32.mrb[0].mxu0
    %v975 = vadd.f32 %v854, %v974
    %v976 = vpop.f32.mrb[0].mxu0
    %977 = vdwg.mxu0
    %v978 = vld [vmem:[%s23] sm:$0xff]
    %v979 = vld [vmem:[%s23 + $0x8] sm:$0xff]
    %v981 = vsel %vm155, %v737, 0
    %v984 = vsel %vm155, %v738, 0
    %v987 = vsel %vm155, %v739, 0
    %v990 = vsel %vm155, %v740, 0
    %v993 = vsel %vm155, %v741, 0
    %v996 = vsel %vm155, %v742, 0
    %v999 = vsel %vm155, %v743, 0
    %v1002 = vsel %vm155, %v744, 0
    %1004 = vmatprep.subr.mxu0 0.0
    %1005 = vmatpush1.msra.mxu0 %v978
    %1006 = vmatprep.subr.mxu0 0.0
    %1007 = vmatpush1.msra.mxu0 %v979
    %1008 = vmatprep.subr.mxu0 0.0
    %1009 = vmatpush1.msra.mxu0 0.0
    %1010 = vmatprep.subr.mxu0 0.0
    %1011 = vmatpush1.msra.mxu0 0.0
    %1012 = vmatprep.subr.mxu0 0.0
    %1013 = vmatpush1.msra.mxu0 0.0
    %1014 = vmatprep.subr.mxu0 0.0
    %1015 = vmatpush1.msra.mxu0 0.0
    %1016 = vmatprep.subr.mxu0 0.0
    %1017 = vmatpush1.msra.mxu0 0.0
    %1018 = vmatprep.subr.mxu0 0.0
    %1019 = vmatpush1.msra.mxu0 0.0
    %1020 = vmatprep.subr.mxu0 0.0
    %1021 = vmatpush1.msra.mxu0 0.0
    %1022 = vmatprep.subr.mxu0 0.0
    %1023 = vmatpush1.msra.mxu0 0.0
    %1024 = vmatprep.subr.mxu0 0.0
    %1025 = vmatpush1.msra.mxu0 0.0
    %1026 = vmatprep.subr.mxu0 0.0
    %1027 = vmatpush1.msra.mxu0 0.0
    %1028 = vmatprep.subr.mxu0 0.0
    %1029 = vmatpush1.msra.mxu0 0.0
    %1030 = vmatprep.subr.mxu0 0.0
    %1031 = vmatpush1.msra.mxu0 0.0
    %1032 = vmatprep.subr.mxu0 0.0
    %1033 = vmatpush1.msra.mxu0 0.0
    %1034 = vmatprep.subr.mxu0 0.0
    %1035 = vmatpush1.msra.mxu0 0.0
    %1036 = vmatprep.subr.mxu0 0.0
    %1037 = vmatpush1.msra.mxu0 0.0
    %1038 = vmatprep.subr.mxu0 0.0
    %1039 = vmatpush1.msra.mxu0 0.0
    %1040 = vmatprep.subr.mxu0 0.0
    %1041 = vmatpush1.msra.mxu0 0.0
    %1042 = vmatprep.subr.mxu0 0.0
    %1043 = vmatpush1.msra.mxu0 0.0
    %1044 = vmatprep.subr.mxu0 0.0
    %1045 = vmatpush1.msra.mxu0 0.0
    %1046 = vmatprep.subr.mxu0 0.0
    %1047 = vmatpush1.msra.mxu0 0.0
    %1048 = vmatprep.subr.mxu0 0.0
    %1049 = vmatpush1.msra.mxu0 0.0
    %1050 = vmatprep.subr.mxu0 0.0
    %1051 = vmatpush1.msra.mxu0 0.0
    %1052 = vmatprep.subr.mxu0 0.0
    %1053 = vmatpush1.msra.mxu0 0.0
    %1054 = vmatprep.subr.mxu0 0.0
    %1055 = vmatpush1.msra.mxu0 0.0
    %1056 = vmatprep.subr.mxu0 0.0
    %1057 = vmatpush1.msra.mxu0 0.0
    %1058 = vmatprep.subr.mxu0 0.0
    %1059 = vmatpush1.msra.mxu0 0.0
    %1060 = vmatprep.subr.mxu0 0.0
    %1061 = vmatpush1.msra.mxu0 0.0
    %1062 = vmatprep.subr.mxu0 0.0
    %1063 = vmatpush1.msra.mxu0 0.0
    %1064 = vmatprep.subr.mxu0 0.0
    %1065 = vmatpush1.msra.mxu0 0.0
    %1066 = vmatprep.subr.mxu0 0.0
    %1067 = vmatpush1.msra.mxu0 0.0
    %1068 = vmatprep.mubr.f32.mxu0 0.0
    %1069 = vmatmul.mubr.f32.gmra.mrb[0].mxu0 %v981
    %v1070 = vpop.f32.mrb[0].mxu0
    %v1071 = vadd.f32 0.0, %v1070
    %v1072 = vpop.f32.mrb[0].mxu0
    %1073 = vmatprep.mubr.f32.mxu0 0.0
    %1074 = vmatmul.mubr.f32.gmra.mrb[0].mxu0 %v984
    %v1075 = vpop.f32.mrb[0].mxu0
    %v1076 = vadd.f32 0.0, %v1075
    %v1077 = vpop.f32.mrb[0].mxu0
    %1078 = vmatprep.mubr.f32.mxu0 0.0
    %1079 = vmatmul.mubr.f32.gmra.mrb[0].mxu0 %v987
    %v1080 = vpop.f32.mrb[0].mxu0
    %v1081 = vadd.f32 0.0, %v1080
    %v1082 = vpop.f32.mrb[0].mxu0
    %1083 = vmatprep.mubr.f32.mxu0 0.0
    %1084 = vmatmul.mubr.f32.gmra.mrb[0].mxu0 %v990
    %v1085 = vpop.f32.mrb[0].mxu0
    %v1086 = vadd.f32 0.0, %v1085
    %v1087 = vpop.f32.mrb[0].mxu0
    %1088 = vmatprep.mubr.f32.mxu0 0.0
    %1089 = vmatmul.mubr.f32.gmra.mrb[0].mxu0 %v993
    %v1090 = vpop.f32.mrb[0].mxu0
    %v1091 = vadd.f32 0.0, %v1090
    %v1092 = vpop.f32.mrb[0].mxu0
    %1093 = vmatprep.mubr.f32.mxu0 0.0
    %1094 = vmatmul.mubr.f32.gmra.mrb[0].mxu0 %v996
    %v1095 = vpop.f32.mrb[0].mxu0
    %v1096 = vadd.f32 0.0, %v1095
    %v1097 = vpop.f32.mrb[0].mxu0
    %1098 = vmatprep.mubr.f32.mxu0 0.0
    %1099 = vmatmul.mubr.f32.gmra.mrb[0].mxu0 %v999
    %v1100 = vpop.f32.mrb[0].mxu0
    %v1101 = vadd.f32 0.0, %v1100
    %v1102 = vpop.f32.mrb[0].mxu0
    %1103 = vmatprep.mubr.f32.mxu0 0.0
    %1104 = vmatmul.mubr.f32.gmra.mrb[0].mxu0 %v1002
    %v1105 = vpop.f32.mrb[0].mxu0
    %v1106 = vadd.f32 0.0, %v1105
    %v1107 = vpop.f32.mrb[0].mxu0
    %1108 = vdwg.mxu0
    %v1109 = vadd.f32 %v940, %v1071
    %v1110 = vadd.f32 %v945, %v1076
    %v1111 = vadd.f32 %v950, %v1081
    %v1112 = vadd.f32 %v955, %v1086
    %v1113 = vadd.f32 %v960, %v1091
    %v1114 = vadd.f32 %v965, %v1096
    %v1115 = vadd.f32 %v970, %v1101
    %v1116 = vadd.f32 %v975, %v1106
    %v1117 = vld [vmem:[%s25] sm:$0xff]
    %v1118 = vld [vmem:[%s25 + $0x8] sm:$0xff]
    %v1119 = vld [vmem:[%s25 + $0x10] sm:$0xff]
    %v1120 = vld [vmem:[%s25 + $0x18] sm:$0xff]
    %vm1121 = vcmask 261120
    %v1123 = vsel %vm1121, %v639, 0
    %v1126 = vsel %vm1121, %v640, 0
    %v1129 = vsel %vm1121, %v641, 0
    %v1132 = vsel %vm1121, %v642, 0
    %v1135 = vsel %vm1121, %v643, 0
    %v1138 = vsel %vm1121, %v644, 0
    %v1141 = vsel %vm1121, %v645, 0
    %v1144 = vsel %vm1121, %v646, 0
    %1146 = vmatprep.subr.mxu0 0.0
    %1147 = vmatpush1.msra.mxu0 %v1117
    %1148 = vmatprep.subr.mxu0 0.0
    %1149 = vmatpush1.msra.mxu0 %v1118
    %1150 = vmatprep.subr.mxu0 0.0
    %1151 = vmatpush1.msra.mxu0 %v1119
    %1152 = vmatprep.subr.mxu0 0.0
    %1153 = vmatpush1.msra.mxu0 %v1120
    %1154 = vmatprep.subr.mxu0 0.0
    %1155 = vmatpush1.msra.mxu0 0.0
    %1156 = vmatprep.subr.mxu0 0.0
    %1157 = vmatpush1.msra.mxu0 0.0
    %1158 = vmatprep.subr.mxu0 0.0
    %1159 = vmatpush1.msra.mxu0 0.0
    %1160 = vmatprep.subr.mxu0 0.0
    %1161 = vmatpush1.msra.mxu0 0.0
    %1162 = vmatprep.subr.mxu0 0.0
    %1163 = vmatpush1.msra.mxu0 0.0
    %1164 = vmatprep.subr.mxu0 0.0
    %1165 = vmatpush1.msra.mxu0 0.0
    %1166 = vmatprep.subr.mxu0 0.0
    %1167 = vmatpush1.msra.mxu0 0.0
    %1168 = vmatprep.subr.mxu0 0.0
    %1169 = vmatpush1.msra.mxu0 0.0
    %1170 = vmatprep.subr.mxu0 0.0
    %1171 = vmatpush1.msra.mxu0 0.0
    %1172 = vmatprep.subr.mxu0 0.0
    %1173 = vmatpush1.msra.mxu0 0.0
    %1174 = vmatprep.subr.mxu0 0.0
    %1175 = vmatpush1.msra.mxu0 0.0
    %1176 = vmatprep.subr.mxu0 0.0
    %1177 = vmatpush1.msra.mxu0 0.0
    %1178 = vmatprep.subr.mxu0 0.0
    %1179 = vmatpush1.msra.mxu0 0.0
    %1180 = vmatprep.subr.mxu0 0.0
    %1181 = vmatpush1.msra.mxu0 0.0
    %1182 = vmatprep.subr.mxu0 0.0
    %1183 = vmatpush1.msra.mxu0 0.0
    %1184 = vmatprep.subr.mxu0 0.0
    %1185 = vmatpush1.msra.mxu0 0.0
    %1186 = vmatprep.subr.mxu0 0.0
    %1187 = vmatpush1.msra.mxu0 0.0
    %1188 = vmatprep.subr.mxu0 0.0
    %1189 = vmatpush1.msra.mxu0 0.0
    %1190 = vmatprep.subr.mxu0 0.0
    %1191 = vmatpush1.msra.mxu0 0.0
    %1192 = vmatprep.subr.mxu0 0.0
    %1193 = vmatpush1.msra.mxu0 0.0
    %1194 = vmatprep.subr.mxu0 0.0
    %1195 = vmatpush1.msra.mxu0 0.0
    %1196 = vmatprep.subr.mxu0 0.0
    %1197 = vmatpush1.msra.mxu0 0.0
    %1198 = vmatprep.subr.mxu0 0.0
    %1199 = vmatpush1.msra.mxu0 0.0
    %1200 = vmatprep.subr.mxu0 0.0
    %1201 = vmatpush1.msra.mxu0 0.0
    %1202 = vmatprep.subr.mxu0 0.0
    %1203 = vmatpush1.msra.mxu0 0.0
    %1204 = vmatprep.subr.mxu0 0.0
    %1205 = vmatpush1.msra.mxu0 0.0
    %1206 = vmatprep.subr.mxu0 0.0
    %1207 = vmatpush1.msra.mxu0 0.0
    %1208 = vmatprep.subr.mxu0 0.0
    %1209 = vmatpush1.msra.mxu0 0.0
    %1210 = vmatprep.mubr.f32.mxu0 0.0
    %1211 = vmatmul.mubr.f32.gmra.mrb[0].mxu0 %v1123
    %v1212 = vpop.f32.mrb[0].mxu0
    %v1213 = vadd.f32 0.0, %v1212
    %v1214 = vpop.f32.mrb[0].mxu0
    %1215 = vmatprep.mubr.f32.mxu0 0.0
    %1216 = vmatmul.mubr.f32.gmra.mrb[0].mxu0 %v1126
    %v1217 = vpop.f32.mrb[0].mxu0
    %v1218 = vadd.f32 0.0, %v1217
    %v1219 = vpop.f32.mrb[0].mxu0
    %1220 = vmatprep.mubr.f32.mxu0 0.0
    %1221 = vmatmul.mubr.f32.gmra.mrb[0].mxu0 %v1129
    %v1222 = vpop.f32.mrb[0].mxu0
    %v1223 = vadd.f32 0.0, %v1222
    %v1224 = vpop.f32.mrb[0].mxu0
    %1225 = vmatprep.mubr.f32.mxu0 0.0
    %1226 = vmatmul.mubr.f32.gmra.mrb[0].mxu0 %v1132
    %v1227 = vpop.f32.mrb[0].mxu0
    %v1228 = vadd.f32 0.0, %v1227
    %v1229 = vpop.f32.mrb[0].mxu0
    %1230 = vmatprep.mubr.f32.mxu0 0.0
    %1231 = vmatmul.mubr.f32.gmra.mrb[0].mxu0 %v1135
    %v1232 = vpop.f32.mrb[0].mxu0
    %v1233 = vadd.f32 0.0, %v1232
    %v1234 = vpop.f32.mrb[0].mxu0
    %1235 = vmatprep.mubr.f32.mxu0 0.0
    %1236 = vmatmul.mubr.f32.gmra.mrb[0].mxu0 %v1138
    %v1237 = vpop.f32.mrb[0].mxu0
    %v1238 = vadd.f32 0.0, %v1237
    %v1239 = vpop.f32.mrb[0].mxu0
    %1240 = vmatprep.mubr.f32.mxu0 0.0
    %1241 = vmatmul.mubr.f32.gmra.mrb[0].mxu0 %v1141
    %v1242 = vpop.f32.mrb[0].mxu0
    %v1243 = vadd.f32 0.0, %v1242
    %v1244 = vpop.f32.mrb[0].mxu0
    %1245 = vmatprep.mubr.f32.mxu0 0.0
    %1246 = vmatmul.mubr.f32.gmra.mrb[0].mxu0 %v1144
    %v1247 = vpop.f32.mrb[0].mxu0
    %v1248 = vadd.f32 0.0, %v1247
    %v1249 = vpop.f32.mrb[0].mxu0
    %1250 = vdwg.mxu0
    %v1251 = vadd.f32 %v1109, %v1213
    %v1252 = vadd.f32 %v1110, %v1218
    %v1253 = vadd.f32 %v1111, %v1223
    %v1254 = vadd.f32 %v1112, %v1228
    %v1255 = vadd.f32 %v1113, %v1233
    %v1256 = vadd.f32 %v1114, %v1238
    %v1257 = vadd.f32 %v1115, %v1243
    %v1258 = vadd.f32 %v1116, %v1248
    %v1259 = vld [vmem:[%s27] sm:$0x1]
    %v1261 = vlaneseq
    %v1262 = vshrl.u32 %v1261, 7
    %v1263 = vsub.s32 0, %v1262
    %v1264 = vrot.slane %v1259, %v1263
    %v1266 = vadd.f32 %v1251, %v1264
    %v1267 = vadd.f32 %v1252, %v1264
    %v1268 = vadd.f32 %v1253, %v1264
    %v1269 = vadd.f32 %v1254, %v1264
    %v1270 = vadd.f32 %v1255, %v1264
    %v1271 = vadd.f32 %v1256, %v1264
    %v1272 = vadd.f32 %v1257, %v1264
    %v1273 = vadd.f32 %v1258, %v1264
    %v1274 = vxor.u32 %v1266, 2147483648
    %v1275 = vxor.u32 %v1267, 2147483648
    %v1276 = vxor.u32 %v1268, 2147483648
    %v1277 = vxor.u32 %v1269, 2147483648
    %v1278 = vxor.u32 %v1270, 2147483648
    %v1279 = vxor.u32 %v1271, 2147483648
    %v1280 = vxor.u32 %v1272, 2147483648
    %v1281 = vxor.u32 %v1273, 2147483648
    %v1282 = vmul.f32 %v1274, 1.442695
    %v1283 = vpow.pop %v1282
    %v1284 = vmul.f32 %v1275, 1.442695
    %v1285 = vpow.pop %v1284
    %v1286 = vmul.f32 %v1276, 1.442695
    %v1287 = vpow.pop %v1286
    %v1288 = vmul.f32 %v1277, 1.442695
    %v1289 = vpow.pop %v1288
    %v1290 = vmul.f32 %v1278, 1.442695
    %v1291 = vpow.pop %v1290
    %v1292 = vmul.f32 %v1279, 1.442695
    %v1293 = vpow.pop %v1292
    %v1294 = vmul.f32 %v1280, 1.442695
    %v1295 = vpow.pop %v1294
    %v1296 = vmul.f32 %v1281, 1.442695
    %v1297 = vpow.pop %v1296
    %v1298 = vadd.f32 %v1283, 1.0
    %v1299 = vadd.f32 %v1285, 1.0
    %v1300 = vadd.f32 %v1287, 1.0
    %v1301 = vadd.f32 %v1289, 1.0
    %v1302 = vadd.f32 %v1291, 1.0
    %v1303 = vadd.f32 %v1293, 1.0
    %v1304 = vadd.f32 %v1295, 1.0
    %v1305 = vadd.f32 %v1297, 1.0
    %v1306 = vrcp.pop %v1298
    %v1307 = vmul.f32 1.0, %v1306
    %v1308 = vrcp.pop %v1299
    %v1309 = vmul.f32 1.0, %v1308
    %v1310 = vrcp.pop %v1300
    %v1311 = vmul.f32 1.0, %v1310
    %v1312 = vrcp.pop %v1301
    %v1313 = vmul.f32 1.0, %v1312
    %v1314 = vrcp.pop %v1302
    %v1315 = vmul.f32 1.0, %v1314
    %v1316 = vrcp.pop %v1303
    %v1317 = vmul.f32 1.0, %v1316
    %v1318 = vrcp.pop %v1304
    %v1319 = vmul.f32 1.0, %v1318
    %v1320 = vrcp.pop %v1305
    %v1321 = vmul.f32 1.0, %v1320
    %v1322 = vmul.f32 %v1266, %v1307
    %v1323 = vmul.f32 %v1267, %v1309
    %v1324 = vmul.f32 %v1268, %v1311
    %v1325 = vmul.f32 %v1269, %v1313
    %v1326 = vmul.f32 %v1270, %v1315
    %v1327 = vmul.f32 %v1271, %v1317
    %v1328 = vmul.f32 %v1272, %v1319
    %v1329 = vmul.f32 %v1273, %v1321
    %v1330 = vld [vmem:[%s29] sm:$0xff]
    %v1331 = vld [vmem:[%s29 + $0x8] sm:$0xff]
    %v1332 = vld [vmem:[%s29 + $0x10] sm:$0xff]
    %v1333 = vld [vmem:[%s29 + $0x18] sm:$0xff]
    %v1334 = vld [vmem:[%s29 + $0x20] sm:$0xff]
    %v1335 = vld [vmem:[%s29 + $0x28] sm:$0xff]
    %v1336 = vld [vmem:[%s29 + $0x30] sm:$0xff]
    %v1337 = vld [vmem:[%s29 + $0x38] sm:$0xff]
    %v1338 = vld [vmem:[%s29 + $0x40] sm:$0xff]
    %v1339 = vld [vmem:[%s29 + $0x48] sm:$0xff]
    %v1340 = vld [vmem:[%s29 + $0x50] sm:$0xff]
    %v1341 = vld [vmem:[%s29 + $0x58] sm:$0xff]
    %v1342 = vld [vmem:[%s29 + $0x60] sm:$0xff]
    %v1343 = vld [vmem:[%s29 + $0x68] sm:$0xff]
    %v1344 = vld [vmem:[%s29 + $0x70] sm:$0xff]
    %v1345 = vld [vmem:[%s29 + $0x78] sm:$0xff]
    %v1346 = vld [vmem:[%s31] sm:$0x1]
    %v1348 = vlaneseq
    %v1349 = vshrl.u32 %v1348, 7
    %v1350 = vsub.s32 0, %v1349
    %v1351 = vrot.slane %v1346, %v1350
    %1353 = vmatprep.subr.mxu0 0.0
    %1354 = vmatpush1.msra.mxu0 %v1330
    %1355 = vmatprep.subr.mxu0 0.0
    %1356 = vmatpush1.msra.mxu0 %v1331
    %1357 = vmatprep.subr.mxu0 0.0
    %1358 = vmatpush1.msra.mxu0 %v1332
    %1359 = vmatprep.subr.mxu0 0.0
    %1360 = vmatpush1.msra.mxu0 %v1333
    %1361 = vmatprep.subr.mxu0 0.0
    %1362 = vmatpush1.msra.mxu0 %v1334
    %1363 = vmatprep.subr.mxu0 0.0
    %1364 = vmatpush1.msra.mxu0 %v1335
    %1365 = vmatprep.subr.mxu0 0.0
    %1366 = vmatpush1.msra.mxu0 %v1336
    %1367 = vmatprep.subr.mxu0 0.0
    %1368 = vmatpush1.msra.mxu0 %v1337
    %1369 = vmatprep.subr.mxu0 0.0
    %1370 = vmatpush1.msra.mxu0 %v1338
    %1371 = vmatprep.subr.mxu0 0.0
    %1372 = vmatpush1.msra.mxu0 %v1339
    %1373 = vmatprep.subr.mxu0 0.0
    %1374 = vmatpush1.msra.mxu0 %v1340
    %1375 = vmatprep.subr.mxu0 0.0
    %1376 = vmatpush1.msra.mxu0 %v1341
    %1377 = vmatprep.subr.mxu0 0.0
    %1378 = vmatpush1.msra.mxu0 %v1342
    %1379 = vmatprep.subr.mxu0 0.0
    %1380 = vmatpush1.msra.mxu0 %v1343
    %1381 = vmatprep.subr.mxu0 0.0
    %1382 = vmatpush1.msra.mxu0 %v1344
    %1383 = vmatprep.subr.mxu0 0.0
    %1384 = vmatpush1.msra.mxu0 %v1345
    %1385 = vmatprep.subr.mxu0 0.0
    %1386 = vmatpush1.msra.mxu0 0.0
    %1387 = vmatprep.subr.mxu0 0.0
    %1388 = vmatpush1.msra.mxu0 0.0
    %1389 = vmatprep.subr.mxu0 0.0
    %1390 = vmatpush1.msra.mxu0 0.0
    %1391 = vmatprep.subr.mxu0 0.0
    %1392 = vmatpush1.msra.mxu0 0.0
    %1393 = vmatprep.subr.mxu0 0.0
    %1394 = vmatpush1.msra.mxu0 0.0
    %1395 = vmatprep.subr.mxu0 0.0
    %1396 = vmatpush1.msra.mxu0 0.0
    %1397 = vmatprep.subr.mxu0 0.0
    %1398 = vmatpush1.msra.mxu0 0.0
    %1399 = vmatprep.subr.mxu0 0.0
    %1400 = vmatpush1.msra.mxu0 0.0
    %1401 = vmatprep.subr.mxu0 0.0
    %1402 = vmatpush1.msra.mxu0 0.0
    %1403 = vmatprep.subr.mxu0 0.0
    %1404 = vmatpush1.msra.mxu0 0.0
    %1405 = vmatprep.subr.mxu0 0.0
    %1406 = vmatpush1.msra.mxu0 0.0
    %1407 = vmatprep.subr.mxu0 0.0
    %1408 = vmatpush1.msra.mxu0 0.0
    %1409 = vmatprep.subr.mxu0 0.0
    %1410 = vmatpush1.msra.mxu0 0.0
    %1411 = vmatprep.subr.mxu0 0.0
    %1412 = vmatpush1.msra.mxu0 0.0
    %1413 = vmatprep.subr.mxu0 0.0
    %1414 = vmatpush1.msra.mxu0 0.0
    %1415 = vmatprep.subr.mxu0 0.0
    %1416 = vmatpush1.msra.mxu0 0.0
    %1417 = vmatprep.mubr.f32.mxu0 0.0
    %1418 = vmatmul.mubr.f32.gmra.mrb[0].mxu0 %v1322
    %v1419 = vpop.f32.mrb[0].mxu0
    %v1420 = vadd.f32 %v1351, %v1419
    %v1421 = vpop.f32.mrb[0].mxu0
    %1422 = vmatprep.mubr.f32.mxu0 0.0
    %1423 = vmatmul.mubr.f32.gmra.mrb[0].mxu0 %v1323
    %v1424 = vpop.f32.mrb[0].mxu0
    %v1425 = vadd.f32 %v1351, %v1424
    %v1426 = vpop.f32.mrb[0].mxu0
    %1427 = vmatprep.mubr.f32.mxu0 0.0
    %1428 = vmatmul.mubr.f32.gmra.mrb[0].mxu0 %v1324
    %v1429 = vpop.f32.mrb[0].mxu0
    %v1430 = vadd.f32 %v1351, %v1429
    %v1431 = vpop.f32.mrb[0].mxu0
    %1432 = vmatprep.mubr.f32.mxu0 0.0
    %1433 = vmatmul.mubr.f32.gmra.mrb[0].mxu0 %v1325
    %v1434 = vpop.f32.mrb[0].mxu0
    %v1435 = vadd.f32 %v1351, %v1434
    %v1436 = vpop.f32.mrb[0].mxu0
    %1437 = vmatprep.mubr.f32.mxu0 0.0
    %1438 = vmatmul.mubr.f32.gmra.mrb[0].mxu0 %v1326
    %v1439 = vpop.f32.mrb[0].mxu0
    %v1440 = vadd.f32 %v1351, %v1439
    %v1441 = vpop.f32.mrb[0].mxu0
    %1442 = vmatprep.mubr.f32.mxu0 0.0
    %1443 = vmatmul.mubr.f32.gmra.mrb[0].mxu0 %v1327
    %v1444 = vpop.f32.mrb[0].mxu0
    %v1445 = vadd.f32 %v1351, %v1444
    %v1446 = vpop.f32.mrb[0].mxu0
    %1447 = vmatprep.mubr.f32.mxu0 0.0
    %1448 = vmatmul.mubr.f32.gmra.mrb[0].mxu0 %v1328
    %v1449 = vpop.f32.mrb[0].mxu0
    %v1450 = vadd.f32 %v1351, %v1449
    %v1451 = vpop.f32.mrb[0].mxu0
    %1452 = vmatprep.mubr.f32.mxu0 0.0
    %1453 = vmatmul.mubr.f32.gmra.mrb[0].mxu0 %v1329
    %v1454 = vpop.f32.mrb[0].mxu0
    %v1455 = vadd.f32 %v1351, %v1454
    %v1456 = vpop.f32.mrb[0].mxu0
    %1457 = vdwg.mxu0
    %v1458 = vxor.u32 %v1420, 2147483648
    %v1459 = vxor.u32 %v1425, 2147483648
    %v1460 = vxor.u32 %v1430, 2147483648
    %v1461 = vxor.u32 %v1435, 2147483648
    %v1462 = vxor.u32 %v1440, 2147483648
    %v1463 = vxor.u32 %v1445, 2147483648
    %v1464 = vxor.u32 %v1450, 2147483648
    %v1465 = vxor.u32 %v1455, 2147483648
    %v1466 = vmul.f32 %v1458, 1.442695
    %v1467 = vpow.pop %v1466
    %v1468 = vmul.f32 %v1459, 1.442695
    %v1469 = vpow.pop %v1468
    %v1470 = vmul.f32 %v1460, 1.442695
    %v1471 = vpow.pop %v1470
    %v1472 = vmul.f32 %v1461, 1.442695
    %v1473 = vpow.pop %v1472
    %v1474 = vmul.f32 %v1462, 1.442695
    %v1475 = vpow.pop %v1474
    %v1476 = vmul.f32 %v1463, 1.442695
    %v1477 = vpow.pop %v1476
    %v1478 = vmul.f32 %v1464, 1.442695
    %v1479 = vpow.pop %v1478
    %v1480 = vmul.f32 %v1465, 1.442695
    %v1481 = vpow.pop %v1480
    %v1482 = vadd.f32 %v1467, 1.0
    %v1483 = vadd.f32 %v1469, 1.0
    %v1484 = vadd.f32 %v1471, 1.0
    %v1485 = vadd.f32 %v1473, 1.0
    %v1486 = vadd.f32 %v1475, 1.0
    %v1487 = vadd.f32 %v1477, 1.0
    %v1488 = vadd.f32 %v1479, 1.0
    %v1489 = vadd.f32 %v1481, 1.0
    %v1490 = vrcp.pop %v1482
    %v1491 = vmul.f32 1.0, %v1490
    %v1492 = vrcp.pop %v1483
    %v1493 = vmul.f32 1.0, %v1492
    %v1494 = vrcp.pop %v1484
    %v1495 = vmul.f32 1.0, %v1494
    %v1496 = vrcp.pop %v1485
    %v1497 = vmul.f32 1.0, %v1496
    %v1498 = vrcp.pop %v1486
    %v1499 = vmul.f32 1.0, %v1498
    %v1500 = vrcp.pop %v1487
    %v1501 = vmul.f32 1.0, %v1500
    %v1502 = vrcp.pop %v1488
    %v1503 = vmul.f32 1.0, %v1502
    %v1504 = vrcp.pop %v1489
    %v1505 = vmul.f32 1.0, %v1504
    %v1506 = vmul.f32 %v1420, %v1491
    %v1507 = vmul.f32 %v1425, %v1493
    %v1508 = vmul.f32 %v1430, %v1495
    %v1509 = vmul.f32 %v1435, %v1497
    %v1510 = vmul.f32 %v1440, %v1499
    %v1511 = vmul.f32 %v1445, %v1501
    %v1512 = vmul.f32 %v1450, %v1503
    %v1513 = vmul.f32 %v1455, %v1505
    %v1514 = vld [vmem:[%s33] sm:$0xff]
    %v1515 = vld [vmem:[%s33 + $0x8] sm:$0xff]
    %v1516 = vld [vmem:[%s33 + $0x10] sm:$0xff]
    %v1517 = vld [vmem:[%s33 + $0x18] sm:$0xff]
    %v1518 = vld [vmem:[%s33 + $0x20] sm:$0xff]
    %v1519 = vld [vmem:[%s33 + $0x28] sm:$0xff]
    %v1520 = vld [vmem:[%s33 + $0x30] sm:$0xff]
    %v1521 = vld [vmem:[%s33 + $0x38] sm:$0xff]
    %v1522 = vld [vmem:[%s33 + $0x40] sm:$0xff]
    %v1523 = vld [vmem:[%s33 + $0x48] sm:$0xff]
    %v1524 = vld [vmem:[%s33 + $0x50] sm:$0xff]
    %v1525 = vld [vmem:[%s33 + $0x58] sm:$0xff]
    %v1526 = vld [vmem:[%s33 + $0x60] sm:$0xff]
    %v1527 = vld [vmem:[%s33 + $0x68] sm:$0xff]
    %v1528 = vld [vmem:[%s33 + $0x70] sm:$0xff]
    %v1529 = vld [vmem:[%s33 + $0x78] sm:$0xff]
    %v1530 = vld [vmem:[%s35] sm:$0x1]
    %v1532 = vlaneseq
    %v1533 = vshrl.u32 %v1532, 7
    %v1534 = vsub.s32 0, %v1533
    %v1535 = vrot.slane %v1530, %v1534
    %1537 = vmatprep.subr.mxu0 0.0
    %1538 = vmatpush1.msra.mxu0 %v1514
    %1539 = vmatprep.subr.mxu0 0.0
    %1540 = vmatpush1.msra.mxu0 %v1515
    %1541 = vmatprep.subr.mxu0 0.0
    %1542 = vmatpush1.msra.mxu0 %v1516
    %1543 = vmatprep.subr.mxu0 0.0
    %1544 = vmatpush1.msra.mxu0 %v1517
    %1545 = vmatprep.subr.mxu0 0.0
    %1546 = vmatpush1.msra.mxu0 %v1518
    %1547 = vmatprep.subr.mxu0 0.0
    %1548 = vmatpush1.msra.mxu0 %v1519
    %1549 = vmatprep.subr.mxu0 0.0
    %1550 = vmatpush1.msra.mxu0 %v1520
    %1551 = vmatprep.subr.mxu0 0.0
    %1552 = vmatpush1.msra.mxu0 %v1521
    %1553 = vmatprep.subr.mxu0 0.0
    %1554 = vmatpush1.msra.mxu0 %v1522
    %1555 = vmatprep.subr.mxu0 0.0
    %1556 = vmatpush1.msra.mxu0 %v1523
    %1557 = vmatprep.subr.mxu0 0.0
    %1558 = vmatpush1.msra.mxu0 %v1524
    %1559 = vmatprep.subr.mxu0 0.0
    %1560 = vmatpush1.msra.mxu0 %v1525
    %1561 = vmatprep.subr.mxu0 0.0
    %1562 = vmatpush1.msra.mxu0 %v1526
    %1563 = vmatprep.subr.mxu0 0.0
    %1564 = vmatpush1.msra.mxu0 %v1527
    %1565 = vmatprep.subr.mxu0 0.0
    %1566 = vmatpush1.msra.mxu0 %v1528
    %1567 = vmatprep.subr.mxu0 0.0
    %1568 = vmatpush1.msra.mxu0 %v1529
    %1569 = vmatprep.subr.mxu0 0.0
    %1570 = vmatpush1.msra.mxu0 0.0
    %1571 = vmatprep.subr.mxu0 0.0
    %1572 = vmatpush1.msra.mxu0 0.0
    %1573 = vmatprep.subr.mxu0 0.0
    %1574 = vmatpush1.msra.mxu0 0.0
    %1575 = vmatprep.subr.mxu0 0.0
    %1576 = vmatpush1.msra.mxu0 0.0
    %1577 = vmatprep.subr.mxu0 0.0
    %1578 = vmatpush1.msra.mxu0 0.0
    %1579 = vmatprep.subr.mxu0 0.0
    %1580 = vmatpush1.msra.mxu0 0.0
    %1581 = vmatprep.subr.mxu0 0.0
    %1582 = vmatpush1.msra.mxu0 0.0
    %1583 = vmatprep.subr.mxu0 0.0
    %1584 = vmatpush1.msra.mxu0 0.0
    %1585 = vmatprep.subr.mxu0 0.0
    %1586 = vmatpush1.msra.mxu0 0.0
    %1587 = vmatprep.subr.mxu0 0.0
    %1588 = vmatpush1.msra.mxu0 0.0
    %1589 = vmatprep.subr.mxu0 0.0
    %1590 = vmatpush1.msra.mxu0 0.0
    %1591 = vmatprep.subr.mxu0 0.0
    %1592 = vmatpush1.msra.mxu0 0.0
    %1593 = vmatprep.subr.mxu0 0.0
    %1594 = vmatpush1.msra.mxu0 0.0
    %1595 = vmatprep.subr.mxu0 0.0
    %1596 = vmatpush1.msra.mxu0 0.0
    %1597 = vmatprep.subr.mxu0 0.0
    %1598 = vmatpush1.msra.mxu0 0.0
    %1599 = vmatprep.subr.mxu0 0.0
    %1600 = vmatpush1.msra.mxu0 0.0
    %1601 = vmatprep.mubr.f32.mxu0 0.0
    %1602 = vmatmul.mubr.f32.gmra.mrb[0].mxu0 %v1506
    %v1603 = vpop.f32.mrb[0].mxu0
    %v1604 = vadd.f32 %v1535, %v1603
    %v1605 = vpop.f32.mrb[0].mxu0
    %1606 = vmatprep.mubr.f32.mxu0 0.0
    %1607 = vmatmul.mubr.f32.gmra.mrb[0].mxu0 %v1507
    %v1608 = vpop.f32.mrb[0].mxu0
    %v1609 = vadd.f32 %v1535, %v1608
    %v1610 = vpop.f32.mrb[0].mxu0
    %1611 = vmatprep.mubr.f32.mxu0 0.0
    %1612 = vmatmul.mubr.f32.gmra.mrb[0].mxu0 %v1508
    %v1613 = vpop.f32.mrb[0].mxu0
    %v1614 = vadd.f32 %v1535, %v1613
    %v1615 = vpop.f32.mrb[0].mxu0
    %1616 = vmatprep.mubr.f32.mxu0 0.0
    %1617 = vmatmul.mubr.f32.gmra.mrb[0].mxu0 %v1509
    %v1618 = vpop.f32.mrb[0].mxu0
    %v1619 = vadd.f32 %v1535, %v1618
    %v1620 = vpop.f32.mrb[0].mxu0
    %1621 = vmatprep.mubr.f32.mxu0 0.0
    %1622 = vmatmul.mubr.f32.gmra.mrb[0].mxu0 %v1510
    %v1623 = vpop.f32.mrb[0].mxu0
    %v1624 = vadd.f32 %v1535, %v1623
    %v1625 = vpop.f32.mrb[0].mxu0
    %1626 = vmatprep.mubr.f32.mxu0 0.0
    %1627 = vmatmul.mubr.f32.gmra.mrb[0].mxu0 %v1511
    %v1628 = vpop.f32.mrb[0].mxu0
    %v1629 = vadd.f32 %v1535, %v1628
    %v1630 = vpop.f32.mrb[0].mxu0
    %1631 = vmatprep.mubr.f32.mxu0 0.0
    %1632 = vmatmul.mubr.f32.gmra.mrb[0].mxu0 %v1512
    %v1633 = vpop.f32.mrb[0].mxu0
    %v1634 = vadd.f32 %v1535, %v1633
    %v1635 = vpop.f32.mrb[0].mxu0
    %1636 = vmatprep.mubr.f32.mxu0 0.0
    %1637 = vmatmul.mubr.f32.gmra.mrb[0].mxu0 %v1513
    %v1638 = vpop.f32.mrb[0].mxu0
    %v1639 = vadd.f32 %v1535, %v1638
    %v1640 = vpop.f32.mrb[0].mxu0
    %1641 = vdwg.mxu0
    %v1642 = vlaneseq
    %v1643 = vshrl.u32 %v1642, 7
    %vm1644 = vcmp.eq.s32.totalorder %v1643, 0
    %vm1645 = vcmp.eq.s32.totalorder %v1643, 1
    %vm1646 = vcmp.eq.s32.totalorder %v1643, 2
    %vm1647 = vcmp.eq.s32.totalorder %v1643, 3
    %vm1648 = vcmp.eq.s32.totalorder %v1643, 4
    %vm1649 = vcmp.eq.s32.totalorder %v1643, 5
    %vm1650 = vcmp.eq.s32.totalorder %v1643, 6
    %vm1651 = vcmp.eq.s32.totalorder %v1643, 7
    %vm1652 = vmor %vm1644, %vm560
    %vm1653 = vmor %vm1645, %vm561
    %vm1654 = vmor %vm1646, %vm562
    %vm1655 = vmor %vm1647, %vm563
    %vm1656 = vmor %vm1648, %vm564
    %vm1657 = vmor %vm1649, %vm565
    %vm1658 = vmor %vm1650, %vm566
    %vm1659 = vmor %vm1651, %vm567
    %vm1660 = vcmp.gt.f32.partialorder %v145, 0.5
    %vm1661 = vcmp.gt.f32.partialorder %v146, 0.5
    %vm1662 = vcmp.gt.f32.partialorder %v147, 0.5
    %vm1663 = vcmp.gt.f32.partialorder %v148, 0.5
    %vm1664 = vcmp.gt.f32.partialorder %v149, 0.5
    %vm1665 = vcmp.gt.f32.partialorder %v150, 0.5
    %vm1666 = vcmp.gt.f32.partialorder %v151, 0.5
    %vm1667 = vcmp.gt.f32.partialorder %v152, 0.5
    %v1668 = vsel %vm1652, 1, 0
    %v1669 = vsel %vm1653, 1, 0
    %v1670 = vsel %vm1654, 1, 0
    %v1671 = vsel %vm1655, 1, 0
    %v1672 = vsel %vm1656, 1, 0
    %v1673 = vsel %vm1657, 1, 0
    %v1674 = vsel %vm1658, 1, 0
    %v1675 = vsel %vm1659, 1, 0
    %vm1676 = vcmp.eq.s32.totalorder %v1668, 1
    %vm1677 = vcmp.eq.s32.totalorder %v1669, 1
    %vm1678 = vcmp.eq.s32.totalorder %v1670, 1
    %vm1679 = vcmp.eq.s32.totalorder %v1671, 1
    %vm1680 = vcmp.eq.s32.totalorder %v1672, 1
    %vm1681 = vcmp.eq.s32.totalorder %v1673, 1
    %vm1682 = vcmp.eq.s32.totalorder %v1674, 1
    %vm1683 = vcmp.eq.s32.totalorder %v1675, 1
    %vm1684 = vmand %vm1676, %vm1660
    %vm1685 = vmand %vm1677, %vm1661
    %vm1686 = vmand %vm1678, %vm1662
    %vm1687 = vmand %vm1679, %vm1663
    %vm1688 = vmand %vm1680, %vm1664
    %vm1689 = vmand %vm1681, %vm1665
    %vm1690 = vmand %vm1682, %vm1666
    %vm1691 = vmand %vm1683, %vm1667
    %v1692 = vsel %vm1684, %v1604, -1e+30
    %v1693 = vsel %vm1685, %v1609, -1e+30
    %v1694 = vsel %vm1686, %v1614, -1e+30
    %v1695 = vsel %vm1687, %v1619, -1e+30
    %v1696 = vsel %vm1688, %v1624, -1e+30
    %v1697 = vsel %vm1689, %v1629, -1e+30
    %v1698 = vsel %vm1690, %v1634, -1e+30
    %v1699 = vsel %vm1691, %v1639, -1e+30
    %v1700 = vsel %vm155, %v1692, -inf
    %v1701 = vrot.slane %v1700, 4
    %v1702 = vmax.f32 %v1700, %v1701
    %v1703 = vrot.slane %v1702, 2
    %v1704 = vmax.f32 %v1702, %v1703
    %v1705 = vrot.slane %v1704, 1
    %v1706 = vmax.f32 %v1704, %v1705
    %v1707 = vsel %vm155, %v1693, -inf
    %v1708 = vrot.slane %v1707, 4
    %v1709 = vmax.f32 %v1707, %v1708
    %v1710 = vrot.slane %v1709, 2
    %v1711 = vmax.f32 %v1709, %v1710
    %v1712 = vrot.slane %v1711, 1
    %v1713 = vmax.f32 %v1711, %v1712
    %v1714 = vsel %vm155, %v1694, -inf
    %v1715 = vrot.slane %v1714, 4
    %v1716 = vmax.f32 %v1714, %v1715
    %v1717 = vrot.slane %v1716, 2
    %v1718 = vmax.f32 %v1716, %v1717
    %v1719 = vrot.slane %v1718, 1
    %v1720 = vmax.f32 %v1718, %v1719
    %v1721 = vsel %vm155, %v1695, -inf
    %v1722 = vrot.slane %v1721, 4
    %v1723 = vmax.f32 %v1721, %v1722
    %v1724 = vrot.slane %v1723, 2
    %v1725 = vmax.f32 %v1723, %v1724
    %v1726 = vrot.slane %v1725, 1
    %v1727 = vmax.f32 %v1725, %v1726
    %v1728 = vsel %vm155, %v1696, -inf
    %v1729 = vrot.slane %v1728, 4
    %v1730 = vmax.f32 %v1728, %v1729
    %v1731 = vrot.slane %v1730, 2
    %v1732 = vmax.f32 %v1730, %v1731
    %v1733 = vrot.slane %v1732, 1
    %v1734 = vmax.f32 %v1732, %v1733
    %v1735 = vsel %vm155, %v1697, -inf
    %v1736 = vrot.slane %v1735, 4
    %v1737 = vmax.f32 %v1735, %v1736
    %v1738 = vrot.slane %v1737, 2
    %v1739 = vmax.f32 %v1737, %v1738
    %v1740 = vrot.slane %v1739, 1
    %v1741 = vmax.f32 %v1739, %v1740
    %v1742 = vsel %vm155, %v1698, -inf
    %v1743 = vrot.slane %v1742, 4
    %v1744 = vmax.f32 %v1742, %v1743
    %v1745 = vrot.slane %v1744, 2
    %v1746 = vmax.f32 %v1744, %v1745
    %v1747 = vrot.slane %v1746, 1
    %v1748 = vmax.f32 %v1746, %v1747
    %v1749 = vsel %vm155, %v1699, -inf
    %v1750 = vrot.slane %v1749, 4
    %v1751 = vmax.f32 %v1749, %v1750
    %v1752 = vrot.slane %v1751, 2
    %v1753 = vmax.f32 %v1751, %v1752
    %v1754 = vrot.slane %v1753, 1
    %v1755 = vmax.f32 %v1753, %v1754
    %v1756 = vsub.f32 %v1692, %v1706
    %v1757 = vsub.f32 %v1693, %v1713
    %v1758 = vsub.f32 %v1694, %v1720
    %v1759 = vsub.f32 %v1695, %v1727
    %v1760 = vsub.f32 %v1696, %v1734
    %v1761 = vsub.f32 %v1697, %v1741
    %v1762 = vsub.f32 %v1698, %v1748
    %v1763 = vsub.f32 %v1699, %v1755
    %v1764 = vmul.f32 %v1756, 1.442695
    %v1765 = vpow.pop %v1764
    %v1766 = vmul.f32 %v1757, 1.442695
    %v1767 = vpow.pop %v1766
    %v1768 = vmul.f32 %v1758, 1.442695
    %v1769 = vpow.pop %v1768
    %v1770 = vmul.f32 %v1759, 1.442695
    %v1771 = vpow.pop %v1770
    %v1772 = vmul.f32 %v1760, 1.442695
    %v1773 = vpow.pop %v1772
    %v1774 = vmul.f32 %v1761, 1.442695
    %v1775 = vpow.pop %v1774
    %v1776 = vmul.f32 %v1762, 1.442695
    %v1777 = vpow.pop %v1776
    %v1778 = vmul.f32 %v1763, 1.442695
    %v1779 = vpow.pop %v1778
    %v1780 = vsel %vm155, %v1765, 0.0
    %v1781 = vrot.slane %v1780, 4
    %v1782 = vadd.f32 %v1780, %v1781
    %v1783 = vrot.slane %v1782, 2
    %v1784 = vadd.f32 %v1782, %v1783
    %v1785 = vrot.slane %v1784, 1
    %v1786 = vadd.f32 %v1784, %v1785
    %v1787 = vsel %vm155, %v1767, 0.0
    %v1788 = vrot.slane %v1787, 4
    %v1789 = vadd.f32 %v1787, %v1788
    %v1790 = vrot.slane %v1789, 2
    %v1791 = vadd.f32 %v1789, %v1790
    %v1792 = vrot.slane %v1791, 1
    %v1793 = vadd.f32 %v1791, %v1792
    %v1794 = vsel %vm155, %v1769, 0.0
    %v1795 = vrot.slane %v1794, 4
    %v1796 = vadd.f32 %v1794, %v1795
    %v1797 = vrot.slane %v1796, 2
    %v1798 = vadd.f32 %v1796, %v1797
    %v1799 = vrot.slane %v1798, 1
    %v1800 = vadd.f32 %v1798, %v1799
    %v1801 = vsel %vm155, %v1771, 0.0
    %v1802 = vrot.slane %v1801, 4
    %v1803 = vadd.f32 %v1801, %v1802
    %v1804 = vrot.slane %v1803, 2
    %v1805 = vadd.f32 %v1803, %v1804
    %v1806 = vrot.slane %v1805, 1
    %v1807 = vadd.f32 %v1805, %v1806
    %v1808 = vsel %vm155, %v1773, 0.0
    %v1809 = vrot.slane %v1808, 4
    %v1810 = vadd.f32 %v1808, %v1809
    %v1811 = vrot.slane %v1810, 2
    %v1812 = vadd.f32 %v1810, %v1811
    %v1813 = vrot.slane %v1812, 1
    %v1814 = vadd.f32 %v1812, %v1813
    %v1815 = vsel %vm155, %v1775, 0.0
    %v1816 = vrot.slane %v1815, 4
    %v1817 = vadd.f32 %v1815, %v1816
    %v1818 = vrot.slane %v1817, 2
    %v1819 = vadd.f32 %v1817, %v1818
    %v1820 = vrot.slane %v1819, 1
    %v1821 = vadd.f32 %v1819, %v1820
    %v1822 = vsel %vm155, %v1777, 0.0
    %v1823 = vrot.slane %v1822, 4
    %v1824 = vadd.f32 %v1822, %v1823
    %v1825 = vrot.slane %v1824, 2
    %v1826 = vadd.f32 %v1824, %v1825
    %v1827 = vrot.slane %v1826, 1
    %v1828 = vadd.f32 %v1826, %v1827
    %v1829 = vsel %vm155, %v1779, 0.0
    %v1830 = vrot.slane %v1829, 4
    %v1831 = vadd.f32 %v1829, %v1830
    %v1832 = vrot.slane %v1831, 2
    %v1833 = vadd.f32 %v1831, %v1832
    %v1834 = vrot.slane %v1833, 1
    %v1835 = vadd.f32 %v1833, %v1834
    %v1836 = vrcp.pop %v1786
    %v1837 = vmul.f32 %v1765, %v1836
    %v1838 = vrcp.pop %v1793
    %v1839 = vmul.f32 %v1767, %v1838
    %v1840 = vrcp.pop %v1800
    %v1841 = vmul.f32 %v1769, %v1840
    %v1842 = vrcp.pop %v1807
    %v1843 = vmul.f32 %v1771, %v1842
    %v1844 = vrcp.pop %v1814
    %v1845 = vmul.f32 %v1773, %v1844
    %v1846 = vrcp.pop %v1821
    %v1847 = vmul.f32 %v1775, %v1846
    %v1848 = vrcp.pop %v1828
    %v1849 = vmul.f32 %v1777, %v1848
    %v1850 = vrcp.pop %v1835
    %v1851 = vmul.f32 %v1779, %v1850
    %v1852 = vmul.f32 %v1837, %v370
    %v1853 = vmul.f32 %v1839, %v370
    %v1854 = vmul.f32 %v1841, %v370
    %v1855 = vmul.f32 %v1843, %v370
    %v1856 = vmul.f32 %v1845, %v370
    %v1857 = vmul.f32 %v1847, %v370
    %v1858 = vmul.f32 %v1849, %v370
    %v1859 = vmul.f32 %v1851, %v370
    %v1860 = vsel %vm155, %v1852, 0.0
    %v1861 = vrot.slane %v1860, 4
    %v1862 = vadd.f32 %v1860, %v1861
    %v1863 = vrot.slane %v1862, 2
    %v1864 = vadd.f32 %v1862, %v1863
    %v1865 = vrot.slane %v1864, 1
    %v1866 = vadd.f32 %v1864, %v1865
    %v1867 = vsel %vm155, %v1853, 0.0
    %v1868 = vrot.slane %v1867, 4
    %v1869 = vadd.f32 %v1867, %v1868
    %v1870 = vrot.slane %v1869, 2
    %v1871 = vadd.f32 %v1869, %v1870
    %v1872 = vrot.slane %v1871, 1
    %v1873 = vadd.f32 %v1871, %v1872
    %v1874 = vsel %vm155, %v1854, 0.0
    %v1875 = vrot.slane %v1874, 4
    %v1876 = vadd.f32 %v1874, %v1875
    %v1877 = vrot.slane %v1876, 2
    %v1878 = vadd.f32 %v1876, %v1877
    %v1879 = vrot.slane %v1878, 1
    %v1880 = vadd.f32 %v1878, %v1879
    %v1881 = vsel %vm155, %v1855, 0.0
    %v1882 = vrot.slane %v1881, 4
    %v1883 = vadd.f32 %v1881, %v1882
    %v1884 = vrot.slane %v1883, 2
    %v1885 = vadd.f32 %v1883, %v1884
    %v1886 = vrot.slane %v1885, 1
    %v1887 = vadd.f32 %v1885, %v1886
    %v1888 = vsel %vm155, %v1856, 0.0
    %v1889 = vrot.slane %v1888, 4
    %v1890 = vadd.f32 %v1888, %v1889
    %v1891 = vrot.slane %v1890, 2
    %v1892 = vadd.f32 %v1890, %v1891
    %v1893 = vrot.slane %v1892, 1
    %v1894 = vadd.f32 %v1892, %v1893
    %v1895 = vsel %vm155, %v1857, 0.0
    %v1896 = vrot.slane %v1895, 4
    %v1897 = vadd.f32 %v1895, %v1896
    %v1898 = vrot.slane %v1897, 2
    %v1899 = vadd.f32 %v1897, %v1898
    %v1900 = vrot.slane %v1899, 1
    %v1901 = vadd.f32 %v1899, %v1900
    %v1902 = vsel %vm155, %v1858, 0.0
    %v1903 = vrot.slane %v1902, 4
    %v1904 = vadd.f32 %v1902, %v1903
    %v1905 = vrot.slane %v1904, 2
    %v1906 = vadd.f32 %v1904, %v1905
    %v1907 = vrot.slane %v1906, 1
    %v1908 = vadd.f32 %v1906, %v1907
    %v1909 = vsel %vm155, %v1859, 0.0
    %v1910 = vrot.slane %v1909, 4
    %v1911 = vadd.f32 %v1909, %v1910
    %v1912 = vrot.slane %v1911, 2
    %v1913 = vadd.f32 %v1911, %v1912
    %v1914 = vrot.slane %v1913, 1
    %v1915 = vadd.f32 %v1913, %v1914
    %v1916 = vld [vmem:[%s45] sm:$0xff]
    %v1917 = vld [vmem:[%s45 + $0x8] sm:$0xff]
    %vm1926 = vcmask 1041409
    %v1927 = vsel %vm1926, %v1873, %v1866
    %vm1928 = vcmask 1042434
    %v1929 = vsel %vm1928, %v1880, %v1927
    %vm1930 = vcmask 1043459
    %v1931 = vsel %vm1930, %v1887, %v1929
    %vm1932 = vcmask 1044484
    %v1933 = vsel %vm1932, %v1894, %v1931
    %vm1934 = vcmask 1045509
    %v1935 = vsel %vm1934, %v1901, %v1933
    %vm1936 = vcmask 1046534
    %v1937 = vsel %vm1936, %v1908, %v1935
    %vm1938 = vcmask 1047559
    %v1939 = vsel %vm1938, %v1915, %v1937
    %v1940 = vsel %vm155, %v1939, 0
    %1942 = vmatprep.subr.mxu0 0.0
    %1943 = vmatpush1.msra.mxu0 %v1916
    %1944 = vmatprep.subr.mxu0 0.0
    %1945 = vmatpush1.msra.mxu0 %v1917
    %1946 = vmatprep.subr.mxu0 0.0
    %1947 = vmatpush1.msra.mxu0 0.0
    %1948 = vmatprep.subr.mxu0 0.0
    %1949 = vmatpush1.msra.mxu0 0.0
    %1950 = vmatprep.subr.mxu0 0.0
    %1951 = vmatpush1.msra.mxu0 0.0
    %1952 = vmatprep.subr.mxu0 0.0
    %1953 = vmatpush1.msra.mxu0 0.0
    %1954 = vmatprep.subr.mxu0 0.0
    %1955 = vmatpush1.msra.mxu0 0.0
    %1956 = vmatprep.subr.mxu0 0.0
    %1957 = vmatpush1.msra.mxu0 0.0
    %1958 = vmatprep.subr.mxu0 0.0
    %1959 = vmatpush1.msra.mxu0 0.0
    %1960 = vmatprep.subr.mxu0 0.0
    %1961 = vmatpush1.msra.mxu0 0.0
    %1962 = vmatprep.subr.mxu0 0.0
    %1963 = vmatpush1.msra.mxu0 0.0
    %1964 = vmatprep.subr.mxu0 0.0
    %1965 = vmatpush1.msra.mxu0 0.0
    %1966 = vmatprep.subr.mxu0 0.0
    %1967 = vmatpush1.msra.mxu0 0.0
    %1968 = vmatprep.subr.mxu0 0.0
    %1969 = vmatpush1.msra.mxu0 0.0
    %1970 = vmatprep.subr.mxu0 0.0
    %1971 = vmatpush1.msra.mxu0 0.0
    %1972 = vmatprep.subr.mxu0 0.0
    %1973 = vmatpush1.msra.mxu0 0.0
    %1974 = vmatprep.subr.mxu0 0.0
    %1975 = vmatpush1.msra.mxu0 0.0
    %1976 = vmatprep.subr.mxu0 0.0
    %1977 = vmatpush1.msra.mxu0 0.0
    %1978 = vmatprep.subr.mxu0 0.0
    %1979 = vmatpush1.msra.mxu0 0.0
    %1980 = vmatprep.subr.mxu0 0.0
    %1981 = vmatpush1.msra.mxu0 0.0
    %1982 = vmatprep.subr.mxu0 0.0
    %1983 = vmatpush1.msra.mxu0 0.0
    %1984 = vmatprep.subr.mxu0 0.0
    %1985 = vmatpush1.msra.mxu0 0.0
    %1986 = vmatprep.subr.mxu0 0.0
    %1987 = vmatpush1.msra.mxu0 0.0
    %1988 = vmatprep.subr.mxu0 0.0
    %1989 = vmatpush1.msra.mxu0 0.0
    %1990 = vmatprep.subr.mxu0 0.0
    %1991 = vmatpush1.msra.mxu0 0.0
    %1992 = vmatprep.subr.mxu0 0.0
    %1993 = vmatpush1.msra.mxu0 0.0
    %1994 = vmatprep.subr.mxu0 0.0
    %1995 = vmatpush1.msra.mxu0 0.0
    %1996 = vmatprep.subr.mxu0 0.0
    %1997 = vmatpush1.msra.mxu0 0.0
    %1998 = vmatprep.subr.mxu0 0.0
    %1999 = vmatpush1.msra.mxu0 0.0
    %2000 = vmatprep.subr.mxu0 0.0
    %2001 = vmatpush1.msra.mxu0 0.0
    %2002 = vmatprep.subr.mxu0 0.0
    %2003 = vmatpush1.msra.mxu0 0.0
    %2004 = vmatprep.subr.mxu0 0.0
    %2005 = vmatpush1.msra.mxu0 0.0
    %2006 = vmatprep.mubr.f32.mxu0 0.0
    %2007 = vmatmul.mubr.f32.gmra.mrb[0].mxu0 %v1940
    %v2008 = vpop.f32.mrb[0].mxu0
    %v2009 = vadd.f32 0.0, %v2008
    %v2010 = vpop.f32.mrb[0].mxu0
    %2011 = vdwg.mxu0
    %v2012 = vadd.f32 %v142, %v2009
    %v2013 = vld [vmem:[%s47] sm:$0x1]
    %v2015 = vlaneseq
    %v2016 = vshrl.u32 %v2015, 7
    %v2017 = vsub.s32 0, %v2016
    %v2018 = vrot.slane %v2013, %v2017
    %v2020 = vadd.f32 %v2012, %v2018
    %v2021 = vld [vmem:[%s49] sm:$0xff]
    %v2022 = vld [vmem:[%s49 + $0x8] sm:$0xff]
    %v2024 = vsel %vm155, %v2020, 0
    %2026 = vmatprep.subr.mxu0 0.0
    %2027 = vmatpush1.msra.mxu0 %v2021
    %2028 = vmatprep.subr.mxu0 0.0
    %2029 = vmatpush1.msra.mxu0 %v2022
    %2030 = vmatprep.subr.mxu0 0.0
    %2031 = vmatpush1.msra.mxu0 0.0
    %2032 = vmatprep.subr.mxu0 0.0
    %2033 = vmatpush1.msra.mxu0 0.0
    %2034 = vmatprep.subr.mxu0 0.0
    %2035 = vmatpush1.msra.mxu0 0.0
    %2036 = vmatprep.subr.mxu0 0.0
    %2037 = vmatpush1.msra.mxu0 0.0
    %2038 = vmatprep.subr.mxu0 0.0
    %2039 = vmatpush1.msra.mxu0 0.0
    %2040 = vmatprep.subr.mxu0 0.0
    %2041 = vmatpush1.msra.mxu0 0.0
    %2042 = vmatprep.subr.mxu0 0.0
    %2043 = vmatpush1.msra.mxu0 0.0
    %2044 = vmatprep.subr.mxu0 0.0
    %2045 = vmatpush1.msra.mxu0 0.0
    %2046 = vmatprep.subr.mxu0 0.0
    %2047 = vmatpush1.msra.mxu0 0.0
    %2048 = vmatprep.subr.mxu0 0.0
    %2049 = vmatpush1.msra.mxu0 0.0
    %2050 = vmatprep.subr.mxu0 0.0
    %2051 = vmatpush1.msra.mxu0 0.0
    %2052 = vmatprep.subr.mxu0 0.0
    %2053 = vmatpush1.msra.mxu0 0.0
    %2054 = vmatprep.subr.mxu0 0.0
    %2055 = vmatpush1.msra.mxu0 0.0
    %2056 = vmatprep.subr.mxu0 0.0
    %2057 = vmatpush1.msra.mxu0 0.0
    %2058 = vmatprep.subr.mxu0 0.0
    %2059 = vmatpush1.msra.mxu0 0.0
    %2060 = vmatprep.subr.mxu0 0.0
    %2061 = vmatpush1.msra.mxu0 0.0
    %2062 = vmatprep.subr.mxu0 0.0
    %2063 = vmatpush1.msra.mxu0 0.0
    %2064 = vmatprep.subr.mxu0 0.0
    %2065 = vmatpush1.msra.mxu0 0.0
    %2066 = vmatprep.subr.mxu0 0.0
    %2067 = vmatpush1.msra.mxu0 0.0
    %2068 = vmatprep.subr.mxu0 0.0
    %2069 = vmatpush1.msra.mxu0 0.0
    %2070 = vmatprep.subr.mxu0 0.0
    %2071 = vmatpush1.msra.mxu0 0.0
    %2072 = vmatprep.subr.mxu0 0.0
    %2073 = vmatpush1.msra.mxu0 0.0
    %2074 = vmatprep.subr.mxu0 0.0
    %2075 = vmatpush1.msra.mxu0 0.0
    %2076 = vmatprep.subr.mxu0 0.0
    %2077 = vmatpush1.msra.mxu0 0.0
    %2078 = vmatprep.subr.mxu0 0.0
    %2079 = vmatpush1.msra.mxu0 0.0
    %2080 = vmatprep.subr.mxu0 0.0
    %2081 = vmatpush1.msra.mxu0 0.0
    %2082 = vmatprep.subr.mxu0 0.0
    %2083 = vmatpush1.msra.mxu0 0.0
    %2084 = vmatprep.subr.mxu0 0.0
    %2085 = vmatpush1.msra.mxu0 0.0
    %2086 = vmatprep.subr.mxu0 0.0
    %2087 = vmatpush1.msra.mxu0 0.0
    %2088 = vmatprep.subr.mxu0 0.0
    %2089 = vmatpush1.msra.mxu0 0.0
    %2090 = vmatprep.mubr.f32.mxu0 0.0
    %2091 = vmatmul.mubr.f32.gmra.mrb[0].mxu0 %v2024
    %v2092 = vpop.f32.mrb[0].mxu0
    %v2093 = vadd.f32 0.0, %v2092
    %v2094 = vpop.f32.mrb[0].mxu0
    %2095 = vdwg.mxu0
    %v2096 = vsub.f32 %v2020, %v2093
    %v2097 = vmul.f32 %v2096, %v2096
    %v2099 = vsel %vm155, %v2097, 0
    %2101 = vmatprep.subr.mxu0 0.0
    %2102 = vmatpush1.msra.mxu0 %v2021
    %2103 = vmatprep.subr.mxu0 0.0
    %2104 = vmatpush1.msra.mxu0 %v2022
    %2105 = vmatprep.subr.mxu0 0.0
    %2106 = vmatpush1.msra.mxu0 0.0
    %2107 = vmatprep.subr.mxu0 0.0
    %2108 = vmatpush1.msra.mxu0 0.0
    %2109 = vmatprep.subr.mxu0 0.0
    %2110 = vmatpush1.msra.mxu0 0.0
    %2111 = vmatprep.subr.mxu0 0.0
    %2112 = vmatpush1.msra.mxu0 0.0
    %2113 = vmatprep.subr.mxu0 0.0
    %2114 = vmatpush1.msra.mxu0 0.0
    %2115 = vmatprep.subr.mxu0 0.0
    %2116 = vmatpush1.msra.mxu0 0.0
    %2117 = vmatprep.subr.mxu0 0.0
    %2118 = vmatpush1.msra.mxu0 0.0
    %2119 = vmatprep.subr.mxu0 0.0
    %2120 = vmatpush1.msra.mxu0 0.0
    %2121 = vmatprep.subr.mxu0 0.0
    %2122 = vmatpush1.msra.mxu0 0.0
    %2123 = vmatprep.subr.mxu0 0.0
    %2124 = vmatpush1.msra.mxu0 0.0
    %2125 = vmatprep.subr.mxu0 0.0
    %2126 = vmatpush1.msra.mxu0 0.0
    %2127 = vmatprep.subr.mxu0 0.0
    %2128 = vmatpush1.msra.mxu0 0.0
    %2129 = vmatprep.subr.mxu0 0.0
    %2130 = vmatpush1.msra.mxu0 0.0
    %2131 = vmatprep.subr.mxu0 0.0
    %2132 = vmatpush1.msra.mxu0 0.0
    %2133 = vmatprep.subr.mxu0 0.0
    %2134 = vmatpush1.msra.mxu0 0.0
    %2135 = vmatprep.subr.mxu0 0.0
    %2136 = vmatpush1.msra.mxu0 0.0
    %2137 = vmatprep.subr.mxu0 0.0
    %2138 = vmatpush1.msra.mxu0 0.0
    %2139 = vmatprep.subr.mxu0 0.0
    %2140 = vmatpush1.msra.mxu0 0.0
    %2141 = vmatprep.subr.mxu0 0.0
    %2142 = vmatpush1.msra.mxu0 0.0
    %2143 = vmatprep.subr.mxu0 0.0
    %2144 = vmatpush1.msra.mxu0 0.0
    %2145 = vmatprep.subr.mxu0 0.0
    %2146 = vmatpush1.msra.mxu0 0.0
    %2147 = vmatprep.subr.mxu0 0.0
    %2148 = vmatpush1.msra.mxu0 0.0
    %2149 = vmatprep.subr.mxu0 0.0
    %2150 = vmatpush1.msra.mxu0 0.0
    %2151 = vmatprep.subr.mxu0 0.0
    %2152 = vmatpush1.msra.mxu0 0.0
    %2153 = vmatprep.subr.mxu0 0.0
    %2154 = vmatpush1.msra.mxu0 0.0
    %2155 = vmatprep.subr.mxu0 0.0
    %2156 = vmatpush1.msra.mxu0 0.0
    %2157 = vmatprep.subr.mxu0 0.0
    %2158 = vmatpush1.msra.mxu0 0.0
    %2159 = vmatprep.subr.mxu0 0.0
    %2160 = vmatpush1.msra.mxu0 0.0
    %2161 = vmatprep.subr.mxu0 0.0
    %2162 = vmatpush1.msra.mxu0 0.0
    %2163 = vmatprep.subr.mxu0 0.0
    %2164 = vmatpush1.msra.mxu0 0.0
    %2165 = vmatprep.mubr.f32.mxu0 0.0
    %2166 = vmatmul.mubr.f32.gmra.mrb[0].mxu0 %v2099
    %v2167 = vpop.f32.mrb[0].mxu0
    %v2168 = vadd.f32 1e-05, %v2167
    %v2169 = vpop.f32.mrb[0].mxu0
    %2170 = vdwg.mxu0
    %v2171 = vrsqrt.pop %v2168
    %v2172 = vmul.f32 %v2096, %v2171
    %v2173 = vld [vmem:[%s51] sm:$0x1]
    %v2175 = vlaneseq
    %v2176 = vshrl.u32 %v2175, 7
    %v2177 = vsub.s32 0, %v2176
    %v2178 = vrot.slane %v2173, %v2177
    %v2180 = vmul.f32 %v2172, %v2178
    %v2181 = vld [vmem:[%s53] sm:$0x1]
    %v2183 = vlaneseq
    %v2184 = vshrl.u32 %v2183, 7
    %v2185 = vsub.s32 0, %v2184
    %v2186 = vrot.slane %v2181, %v2185
    %v2188 = vadd.f32 %v2180, %v2186
    %v2189 = vld [vmem:[%s55] sm:$0xff]
    %v2190 = vld [vmem:[%s55 + $0x8] sm:$0xff]
    %v2191 = vld [vmem:[%s57] sm:$0x1]
    %v2193 = vlaneseq
    %v2194 = vshrl.u32 %v2193, 7
    %v2195 = vsub.s32 0, %v2194
    %v2196 = vrot.slane %v2191, %v2195
    %v2199 = vsel %vm155, %v2188, 0
    %2201 = vmatprep.subr.mxu0 0.0
    %2202 = vmatpush1.msra.mxu0 %v2189
    %2203 = vmatprep.subr.mxu0 0.0
    %2204 = vmatpush1.msra.mxu0 %v2190
    %2205 = vmatprep.subr.mxu0 0.0
    %2206 = vmatpush1.msra.mxu0 0.0
    %2207 = vmatprep.subr.mxu0 0.0
    %2208 = vmatpush1.msra.mxu0 0.0
    %2209 = vmatprep.subr.mxu0 0.0
    %2210 = vmatpush1.msra.mxu0 0.0
    %2211 = vmatprep.subr.mxu0 0.0
    %2212 = vmatpush1.msra.mxu0 0.0
    %2213 = vmatprep.subr.mxu0 0.0
    %2214 = vmatpush1.msra.mxu0 0.0
    %2215 = vmatprep.subr.mxu0 0.0
    %2216 = vmatpush1.msra.mxu0 0.0
    %2217 = vmatprep.subr.mxu0 0.0
    %2218 = vmatpush1.msra.mxu0 0.0
    %2219 = vmatprep.subr.mxu0 0.0
    %2220 = vmatpush1.msra.mxu0 0.0
    %2221 = vmatprep.subr.mxu0 0.0
    %2222 = vmatpush1.msra.mxu0 0.0
    %2223 = vmatprep.subr.mxu0 0.0
    %2224 = vmatpush1.msra.mxu0 0.0
    %2225 = vmatprep.subr.mxu0 0.0
    %2226 = vmatpush1.msra.mxu0 0.0
    %2227 = vmatprep.subr.mxu0 0.0
    %2228 = vmatpush1.msra.mxu0 0.0
    %2229 = vmatprep.subr.mxu0 0.0
    %2230 = vmatpush1.msra.mxu0 0.0
    %2231 = vmatprep.subr.mxu0 0.0
    %2232 = vmatpush1.msra.mxu0 0.0
    %2233 = vmatprep.subr.mxu0 0.0
    %2234 = vmatpush1.msra.mxu0 0.0
    %2235 = vmatprep.subr.mxu0 0.0
    %2236 = vmatpush1.msra.mxu0 0.0
    %2237 = vmatprep.subr.mxu0 0.0
    %2238 = vmatpush1.msra.mxu0 0.0
    %2239 = vmatprep.subr.mxu0 0.0
    %2240 = vmatpush1.msra.mxu0 0.0
    %2241 = vmatprep.subr.mxu0 0.0
    %2242 = vmatpush1.msra.mxu0 0.0
    %2243 = vmatprep.subr.mxu0 0.0
    %2244 = vmatpush1.msra.mxu0 0.0
    %2245 = vmatprep.subr.mxu0 0.0
    %2246 = vmatpush1.msra.mxu0 0.0
    %2247 = vmatprep.subr.mxu0 0.0
    %2248 = vmatpush1.msra.mxu0 0.0
    %2249 = vmatprep.subr.mxu0 0.0
    %2250 = vmatpush1.msra.mxu0 0.0
    %2251 = vmatprep.subr.mxu0 0.0
    %2252 = vmatpush1.msra.mxu0 0.0
    %2253 = vmatprep.subr.mxu0 0.0
    %2254 = vmatpush1.msra.mxu0 0.0
    %2255 = vmatprep.subr.mxu0 0.0
    %2256 = vmatpush1.msra.mxu0 0.0
    %2257 = vmatprep.subr.mxu0 0.0
    %2258 = vmatpush1.msra.mxu0 0.0
    %2259 = vmatprep.subr.mxu0 0.0
    %2260 = vmatpush1.msra.mxu0 0.0
    %2261 = vmatprep.subr.mxu0 0.0
    %2262 = vmatpush1.msra.mxu0 0.0
    %2263 = vmatprep.subr.mxu0 0.0
    %2264 = vmatpush1.msra.mxu0 0.0
    %2265 = vmatprep.mubr.f32.mxu0 0.0
    %2266 = vmatmul.mubr.f32.gmra.mrb[0].mxu0 %v2199
    %v2267 = vpop.f32.mrb[0].mxu0
    %v2268 = vadd.f32 %v2196, %v2267
    %v2269 = vpop.f32.mrb[0].mxu0
    %2270 = vdwg.mxu0
    %v2271 = vxor.u32 %v2268, 2147483648
    %v2272 = vmul.f32 %v2271, 1.442695
    %v2273 = vpow.pop %v2272
    %v2274 = vadd.f32 %v2273, 1.0
    %v2275 = vrcp.pop %v2274
    %v2276 = vmul.f32 1.0, %v2275
    %v2277 = vmul.f32 %v2268, %v2276
    %v2278 = vld [vmem:[%s59] sm:$0xff]
    %v2279 = vld [vmem:[%s61] sm:$0x1]
    %v2281 = vlaneseq
    %v2282 = vshrl.u32 %v2281, 7
    %v2283 = vsub.s32 0, %v2282
    %v2284 = vrot.slane %v2279, %v2283
    %vm2286 = vcmask 64512
    %v2288 = vsel %vm2286, %v2277, 0
    %2290 = vmatprep.subr.mxu0 0.0
    %2291 = vmatpush1.msra.mxu0 %v2278
    %2292 = vmatprep.subr.mxu0 0.0
    %2293 = vmatpush1.msra.mxu0 0.0
    %2294 = vmatprep.subr.mxu0 0.0
    %2295 = vmatpush1.msra.mxu0 0.0
    %2296 = vmatprep.subr.mxu0 0.0
    %2297 = vmatpush1.msra.mxu0 0.0
    %2298 = vmatprep.subr.mxu0 0.0
    %2299 = vmatpush1.msra.mxu0 0.0
    %2300 = vmatprep.subr.mxu0 0.0
    %2301 = vmatpush1.msra.mxu0 0.0
    %2302 = vmatprep.subr.mxu0 0.0
    %2303 = vmatpush1.msra.mxu0 0.0
    %2304 = vmatprep.subr.mxu0 0.0
    %2305 = vmatpush1.msra.mxu0 0.0
    %2306 = vmatprep.subr.mxu0 0.0
    %2307 = vmatpush1.msra.mxu0 0.0
    %2308 = vmatprep.subr.mxu0 0.0
    %2309 = vmatpush1.msra.mxu0 0.0
    %2310 = vmatprep.subr.mxu0 0.0
    %2311 = vmatpush1.msra.mxu0 0.0
    %2312 = vmatprep.subr.mxu0 0.0
    %2313 = vmatpush1.msra.mxu0 0.0
    %2314 = vmatprep.subr.mxu0 0.0
    %2315 = vmatpush1.msra.mxu0 0.0
    %2316 = vmatprep.subr.mxu0 0.0
    %2317 = vmatpush1.msra.mxu0 0.0
    %2318 = vmatprep.subr.mxu0 0.0
    %2319 = vmatpush1.msra.mxu0 0.0
    %2320 = vmatprep.subr.mxu0 0.0
    %2321 = vmatpush1.msra.mxu0 0.0
    %2322 = vmatprep.subr.mxu0 0.0
    %2323 = vmatpush1.msra.mxu0 0.0
    %2324 = vmatprep.subr.mxu0 0.0
    %2325 = vmatpush1.msra.mxu0 0.0
    %2326 = vmatprep.subr.mxu0 0.0
    %2327 = vmatpush1.msra.mxu0 0.0
    %2328 = vmatprep.subr.mxu0 0.0
    %2329 = vmatpush1.msra.mxu0 0.0
    %2330 = vmatprep.subr.mxu0 0.0
    %2331 = vmatpush1.msra.mxu0 0.0
    %2332 = vmatprep.subr.mxu0 0.0
    %2333 = vmatpush1.msra.mxu0 0.0
    %2334 = vmatprep.subr.mxu0 0.0
    %2335 = vmatpush1.msra.mxu0 0.0
    %2336 = vmatprep.subr.mxu0 0.0
    %2337 = vmatpush1.msra.mxu0 0.0
    %2338 = vmatprep.subr.mxu0 0.0
    %2339 = vmatpush1.msra.mxu0 0.0
    %2340 = vmatprep.subr.mxu0 0.0
    %2341 = vmatpush1.msra.mxu0 0.0
    %2342 = vmatprep.subr.mxu0 0.0
    %2343 = vmatpush1.msra.mxu0 0.0
    %2344 = vmatprep.subr.mxu0 0.0
    %2345 = vmatpush1.msra.mxu0 0.0
    %2346 = vmatprep.subr.mxu0 0.0
    %2347 = vmatpush1.msra.mxu0 0.0
    %2348 = vmatprep.subr.mxu0 0.0
    %2349 = vmatpush1.msra.mxu0 0.0
    %2350 = vmatprep.subr.mxu0 0.0
    %2351 = vmatpush1.msra.mxu0 0.0
    %2352 = vmatprep.subr.mxu0 0.0
    %2353 = vmatpush1.msra.mxu0 0.0
    %2354 = vmatprep.mubr.f32.mxu0 0.0
    %2355 = vmatmul.mubr.f32.gmra.mrb[0].mxu0 %v2288
    %v2356 = vpop.f32.mrb[0].mxu0
    %v2357 = vadd.f32 %v2284, %v2356
    %v2358 = vpop.f32.mrb[0].mxu0
    %2359 = vdwg.mxu0
    %2360 = vst.msk [vmem:[#allocation2] sm:$0xff] %vm2286, %v2357
    %v2361 = vld [vmem:[%s37] sm:$0xff]
    %v2362 = vld [vmem:[%s37 + $0x8] sm:$0xff]
    %v2363 = vld [vmem:[%s39] sm:$0x1]
    %v2365 = vlaneseq
    %v2366 = vshrl.u32 %v2365, 7
    %v2367 = vsub.s32 0, %v2366
    %v2368 = vrot.slane %v2363, %v2367
    %v2371 = vsel %vm155, %v370, 0
    %2373 = vmatprep.subr.mxu0 0.0
    %2374 = vmatpush1.msra.mxu0 %v2361
    %2375 = vmatprep.subr.mxu0 0.0
    %2376 = vmatpush1.msra.mxu0 %v2362
    %2377 = vmatprep.subr.mxu0 0.0
    %2378 = vmatpush1.msra.mxu0 0.0
    %2379 = vmatprep.subr.mxu0 0.0
    %2380 = vmatpush1.msra.mxu0 0.0
    %2381 = vmatprep.subr.mxu0 0.0
    %2382 = vmatpush1.msra.mxu0 0.0
    %2383 = vmatprep.subr.mxu0 0.0
    %2384 = vmatpush1.msra.mxu0 0.0
    %2385 = vmatprep.subr.mxu0 0.0
    %2386 = vmatpush1.msra.mxu0 0.0
    %2387 = vmatprep.subr.mxu0 0.0
    %2388 = vmatpush1.msra.mxu0 0.0
    %2389 = vmatprep.subr.mxu0 0.0
    %2390 = vmatpush1.msra.mxu0 0.0
    %2391 = vmatprep.subr.mxu0 0.0
    %2392 = vmatpush1.msra.mxu0 0.0
    %2393 = vmatprep.subr.mxu0 0.0
    %2394 = vmatpush1.msra.mxu0 0.0
    %2395 = vmatprep.subr.mxu0 0.0
    %2396 = vmatpush1.msra.mxu0 0.0
    %2397 = vmatprep.subr.mxu0 0.0
    %2398 = vmatpush1.msra.mxu0 0.0
    %2399 = vmatprep.subr.mxu0 0.0
    %2400 = vmatpush1.msra.mxu0 0.0
    %2401 = vmatprep.subr.mxu0 0.0
    %2402 = vmatpush1.msra.mxu0 0.0
    %2403 = vmatprep.subr.mxu0 0.0
    %2404 = vmatpush1.msra.mxu0 0.0
    %2405 = vmatprep.subr.mxu0 0.0
    %2406 = vmatpush1.msra.mxu0 0.0
    %2407 = vmatprep.subr.mxu0 0.0
    %2408 = vmatpush1.msra.mxu0 0.0
    %2409 = vmatprep.subr.mxu0 0.0
    %2410 = vmatpush1.msra.mxu0 0.0
    %2411 = vmatprep.subr.mxu0 0.0
    %2412 = vmatpush1.msra.mxu0 0.0
    %2413 = vmatprep.subr.mxu0 0.0
    %2414 = vmatpush1.msra.mxu0 0.0
    %2415 = vmatprep.subr.mxu0 0.0
    %2416 = vmatpush1.msra.mxu0 0.0
    %2417 = vmatprep.subr.mxu0 0.0
    %2418 = vmatpush1.msra.mxu0 0.0
    %2419 = vmatprep.subr.mxu0 0.0
    %2420 = vmatpush1.msra.mxu0 0.0
    %2421 = vmatprep.subr.mxu0 0.0
    %2422 = vmatpush1.msra.mxu0 0.0
    %2423 = vmatprep.subr.mxu0 0.0
    %2424 = vmatpush1.msra.mxu0 0.0
    %2425 = vmatprep.subr.mxu0 0.0
    %2426 = vmatpush1.msra.mxu0 0.0
    %2427 = vmatprep.subr.mxu0 0.0
    %2428 = vmatpush1.msra.mxu0 0.0
    %2429 = vmatprep.subr.mxu0 0.0
    %2430 = vmatpush1.msra.mxu0 0.0
    %2431 = vmatprep.subr.mxu0 0.0
    %2432 = vmatpush1.msra.mxu0 0.0
    %2433 = vmatprep.subr.mxu0 0.0
    %2434 = vmatpush1.msra.mxu0 0.0
    %2435 = vmatprep.subr.mxu0 0.0
    %2436 = vmatpush1.msra.mxu0 0.0
    %2437 = vmatprep.mubr.f32.mxu0 0.0
    %2438 = vmatmul.mubr.f32.gmra.mrb[0].mxu0 %v2371
    %v2439 = vpop.f32.mrb[0].mxu0
    %v2440 = vadd.f32 %v2368, %v2439
    %v2441 = vpop.f32.mrb[0].mxu0
    %2442 = vdwg.mxu0
    %v2443 = vxor.u32 %v2440, 2147483648
    %v2444 = vmul.f32 %v2443, 1.442695
    %v2445 = vpow.pop %v2444
    %v2446 = vadd.f32 %v2445, 1.0
    %v2447 = vrcp.pop %v2446
    %v2448 = vmul.f32 1.0, %v2447
    %v2449 = vmul.f32 %v2440, %v2448
    %v2450 = vld [vmem:[%s41] sm:$0xff]
    %v2451 = vld [vmem:[%s41 + $0x8] sm:$0xff]
    %v2452 = vld [vmem:[%s41 + $0x10] sm:$0xff]
    %v2453 = vld [vmem:[%s41 + $0x18] sm:$0xff]
    %v2454 = vld [vmem:[%s41 + $0x20] sm:$0xff]
    %v2455 = vld [vmem:[%s41 + $0x28] sm:$0xff]
    %v2456 = vld [vmem:[%s41 + $0x30] sm:$0xff]
    %v2457 = vld [vmem:[%s41 + $0x38] sm:$0xff]
    %v2458 = vld [vmem:[%s41 + $0x40] sm:$0xff]
    %v2459 = vld [vmem:[%s41 + $0x48] sm:$0xff]
    %v2460 = vld [vmem:[%s41 + $0x50] sm:$0xff]
    %v2461 = vld [vmem:[%s41 + $0x58] sm:$0xff]
    %v2462 = vld [vmem:[%s41 + $0x60] sm:$0xff]
    %v2463 = vld [vmem:[%s41 + $0x68] sm:$0xff]
    %v2464 = vld [vmem:[%s41 + $0x70] sm:$0xff]
    %v2465 = vld [vmem:[%s41 + $0x78] sm:$0xff]
    %v2466 = vld [vmem:[%s43] sm:$0x1]
    %v2468 = vlaneseq
    %v2469 = vshrl.u32 %v2468, 7
    %v2470 = vsub.s32 0, %v2469
    %v2471 = vrot.slane %v2466, %v2470
    %2473 = vmatprep.subr.mxu0 0.0
    %2474 = vmatpush1.msra.mxu0 %v2450
    %2475 = vmatprep.subr.mxu0 0.0
    %2476 = vmatpush1.msra.mxu0 %v2451
    %2477 = vmatprep.subr.mxu0 0.0
    %2478 = vmatpush1.msra.mxu0 %v2452
    %2479 = vmatprep.subr.mxu0 0.0
    %2480 = vmatpush1.msra.mxu0 %v2453
    %2481 = vmatprep.subr.mxu0 0.0
    %2482 = vmatpush1.msra.mxu0 %v2454
    %2483 = vmatprep.subr.mxu0 0.0
    %2484 = vmatpush1.msra.mxu0 %v2455
    %2485 = vmatprep.subr.mxu0 0.0
    %2486 = vmatpush1.msra.mxu0 %v2456
    %2487 = vmatprep.subr.mxu0 0.0
    %2488 = vmatpush1.msra.mxu0 %v2457
    %2489 = vmatprep.subr.mxu0 0.0
    %2490 = vmatpush1.msra.mxu0 %v2458
    %2491 = vmatprep.subr.mxu0 0.0
    %2492 = vmatpush1.msra.mxu0 %v2459
    %2493 = vmatprep.subr.mxu0 0.0
    %2494 = vmatpush1.msra.mxu0 %v2460
    %2495 = vmatprep.subr.mxu0 0.0
    %2496 = vmatpush1.msra.mxu0 %v2461
    %2497 = vmatprep.subr.mxu0 0.0
    %2498 = vmatpush1.msra.mxu0 %v2462
    %2499 = vmatprep.subr.mxu0 0.0
    %2500 = vmatpush1.msra.mxu0 %v2463
    %2501 = vmatprep.subr.mxu0 0.0
    %2502 = vmatpush1.msra.mxu0 %v2464
    %2503 = vmatprep.subr.mxu0 0.0
    %2504 = vmatpush1.msra.mxu0 %v2465
    %2505 = vmatprep.subr.mxu0 0.0
    %2506 = vmatpush1.msra.mxu0 0.0
    %2507 = vmatprep.subr.mxu0 0.0
    %2508 = vmatpush1.msra.mxu0 0.0
    %2509 = vmatprep.subr.mxu0 0.0
    %2510 = vmatpush1.msra.mxu0 0.0
    %2511 = vmatprep.subr.mxu0 0.0
    %2512 = vmatpush1.msra.mxu0 0.0
    %2513 = vmatprep.subr.mxu0 0.0
    %2514 = vmatpush1.msra.mxu0 0.0
    %2515 = vmatprep.subr.mxu0 0.0
    %2516 = vmatpush1.msra.mxu0 0.0
    %2517 = vmatprep.subr.mxu0 0.0
    %2518 = vmatpush1.msra.mxu0 0.0
    %2519 = vmatprep.subr.mxu0 0.0
    %2520 = vmatpush1.msra.mxu0 0.0
    %2521 = vmatprep.subr.mxu0 0.0
    %2522 = vmatpush1.msra.mxu0 0.0
    %2523 = vmatprep.subr.mxu0 0.0
    %2524 = vmatpush1.msra.mxu0 0.0
    %2525 = vmatprep.subr.mxu0 0.0
    %2526 = vmatpush1.msra.mxu0 0.0
    %2527 = vmatprep.subr.mxu0 0.0
    %2528 = vmatpush1.msra.mxu0 0.0
    %2529 = vmatprep.subr.mxu0 0.0
    %2530 = vmatpush1.msra.mxu0 0.0
    %2531 = vmatprep.subr.mxu0 0.0
    %2532 = vmatpush1.msra.mxu0 0.0
    %2533 = vmatprep.subr.mxu0 0.0
    %2534 = vmatpush1.msra.mxu0 0.0
    %2535 = vmatprep.subr.mxu0 0.0
    %2536 = vmatpush1.msra.mxu0 0.0
    %2537 = vmatprep.mubr.f32.mxu0 0.0
    %2538 = vmatmul.mubr.f32.gmra.mrb[0].mxu0 %v2449
    %v2539 = vpop.f32.mrb[0].mxu0
    %v2540 = vadd.f32 %v2471, %v2539
    %v2541 = vpop.f32.mrb[0].mxu0
    %2542 = vdwg.mxu0
    %v2543 = vxor.u32 %v2540, 2147483648
    %v2544 = vmul.f32 %v2543, 1.442695
    %v2545 = vpow.pop %v2544
    %v2546 = vadd.f32 %v2545, 1.0
    %v2547 = vrcp.pop %v2546
    %v2548 = vmul.f32 1.0, %v2547
    %v2550 = vcombine.high %v2548, %v2548
    %v2552 = vunpack.c.l.s4 1966171168
    %v2553 = vunpack.c.0.s8 %v2552
    %v2554 = vlaneseq
    %v2555 = vshrl.u32 %v2554, 7
    %v2556 = vsub.s32 %v2553, %v2555
    %v2557 = vrot.slane %v2548, %v2556
    %v2559 = vunpack.c.l.s4 1966171168
    %v2560 = vunpack.c.0.s8 %v2559
    %v2561 = vlaneseq
    %v2562 = vshrl.u32 %v2561, 7
    %v2563 = vsub.s32 %v2560, %v2562
    %v2564 = vrot.slane %v2550, %v2563
    %v2565 = vcombine.high %v2557, %v2557
    %v2566 = vcombine.high %v2564, %v2564
    %v2568 = vunpack.c.l.s4 1966171168
    %v2569 = vunpack.c.0.s8 %v2568
    %v2570 = vlaneseq
    %v2571 = vshrl.u32 %v2570, 7
    %v2572 = vsub.s32 %v2569, %v2571
    %v2573 = vrot.slane %v2557, %v2572
    %v2575 = vunpack.c.l.s4 1966171168
    %v2576 = vunpack.c.0.s8 %v2575
    %v2577 = vlaneseq
    %v2578 = vshrl.u32 %v2577, 7
    %v2579 = vsub.s32 %v2576, %v2578
    %v2580 = vrot.slane %v2564, %v2579
    %v2582 = vunpack.c.l.s4 1966171168
    %v2583 = vunpack.c.0.s8 %v2582
    %v2584 = vlaneseq
    %v2585 = vshrl.u32 %v2584, 7
    %v2586 = vsub.s32 %v2583, %v2585
    %v2587 = vrot.slane %v2565, %v2586
    %v2589 = vunpack.c.l.s4 1966171168
    %v2590 = vunpack.c.0.s8 %v2589
    %v2591 = vlaneseq
    %v2592 = vshrl.u32 %v2591, 7
    %v2593 = vsub.s32 %v2590, %v2592
    %v2594 = vrot.slane %v2566, %v2593
    %v2595 = vcombine.high %v2573, %v2573
    %v2596 = vcombine.high %v2580, %v2580
    %v2597 = vcombine.high %v2587, %v2587
    %v2598 = vcombine.high %v2594, %v2594
    %v2599 = vlaneseq
    %v2600 = vshrl.u32 %v2599, 7
    %v2601 = vsub.s32 0, %v2600
    %v2602 = vrot.slane %v2573, %v2601
    %v2603 = vlaneseq
    %v2604 = vshrl.u32 %v2603, 7
    %v2605 = vsub.s32 0, %v2604
    %v2606 = vrot.slane %v2587, %v2605
    %v2607 = vlaneseq
    %v2608 = vshrl.u32 %v2607, 7
    %v2609 = vsub.s32 0, %v2608
    %v2610 = vrot.slane %v2595, %v2609
    %v2611 = vlaneseq
    %v2612 = vshrl.u32 %v2611, 7
    %v2613 = vsub.s32 0, %v2612
    %v2614 = vrot.slane %v2597, %v2613
    %v2615 = vlaneseq
    %v2616 = vshrl.u32 %v2615, 7
    %v2617 = vsub.s32 0, %v2616
    %v2618 = vrot.slane %v2580, %v2617
    %v2619 = vlaneseq
    %v2620 = vshrl.u32 %v2619, 7
    %v2621 = vsub.s32 0, %v2620
    %v2622 = vrot.slane %v2594, %v2621
    %v2623 = vlaneseq
    %v2624 = vshrl.u32 %v2623, 7
    %v2625 = vsub.s32 0, %v2624
    %v2626 = vrot.slane %v2596, %v2625
    %v2627 = vlaneseq
    %v2628 = vshrl.u32 %v2627, 7
    %v2629 = vsub.s32 0, %v2628
    %v2630 = vrot.slane %v2598, %v2629
    %v2639 = vmul.f32 %v1837, %v2602
    %v2640 = vmul.f32 %v1839, %v2606
    %v2641 = vmul.f32 %v1841, %v2610
    %v2642 = vmul.f32 %v1843, %v2614
    %v2643 = vmul.f32 %v1845, %v2618
    %v2644 = vmul.f32 %v1847, %v2622
    %v2645 = vmul.f32 %v1849, %v2626
    %v2646 = vmul.f32 %v1851, %v2630
    %v2647 = vsel %vm2286, %v2548, 0.0
    %2648 = vadd.xlane.f32.xlu0 %v2647
    %v2649 = vpop.xlane.xlu0 %2648
    %2650 = vrot.lane.b32.xlu0 %v2548, 120
    %v2651 = vpop.permute.xlu0 %2650
    %v2653 = vsel %vm2286, %v2651, 0.0
    %2654 = vadd.xlane.f32.xlu0 %v2653
    %v2655 = vpop.xlane.xlu0 %2654
    %v2656 = vld [vmem:[%s63] sm:$0x3f]
    %v2657 = vld [vmem:[%s65] sm:$0x1]
    %v2659 = vlaneseq
    %v2660 = vshrl.u32 %v2659, 7
    %v2661 = vsub.s32 0, %v2660
    %v2662 = vrot.slane %v2657, %v2661
    %v2664 = vadd.f32 %v2662, 0.0
    %v2666 = vrot.slane %v2656, 3
    %v2668 = vadd.f32 %v2656, %v2666
    %v2670 = vsel %vm479, %v143, 0
    %vm2672 = vcmask 1042432
    %v2674 = vsel %vm2672, %v2668, 0
    %2676 = vmatprep.subr.mxu0 0.0
    %2677 = vmatpush1.msra.mxu0 %v2674
    %2678 = vmatprep.subr.mxu0 0.0
    %2679 = vmatpush1.msra.mxu0 0.0
    %2680 = vmatprep.subr.mxu0 0.0
    %2681 = vmatpush1.msra.mxu0 0.0
    %2682 = vmatprep.subr.mxu0 0.0
    %2683 = vmatpush1.msra.mxu0 0.0
    %2684 = vmatprep.subr.mxu0 0.0
    %2685 = vmatpush1.msra.mxu0 0.0
    %2686 = vmatprep.subr.mxu0 0.0
    %2687 = vmatpush1.msra.mxu0 0.0
    %2688 = vmatprep.subr.mxu0 0.0
    %2689 = vmatpush1.msra.mxu0 0.0
    %2690 = vmatprep.subr.mxu0 0.0
    %2691 = vmatpush1.msra.mxu0 0.0
    %2692 = vmatprep.subr.mxu0 0.0
    %2693 = vmatpush1.msra.mxu0 0.0
    %2694 = vmatprep.subr.mxu0 0.0
    %2695 = vmatpush1.msra.mxu0 0.0
    %2696 = vmatprep.subr.mxu0 0.0
    %2697 = vmatpush1.msra.mxu0 0.0
    %2698 = vmatprep.subr.mxu0 0.0
    %2699 = vmatpush1.msra.mxu0 0.0
    %2700 = vmatprep.subr.mxu0 0.0
    %2701 = vmatpush1.msra.mxu0 0.0
    %2702 = vmatprep.subr.mxu0 0.0
    %2703 = vmatpush1.msra.mxu0 0.0
    %2704 = vmatprep.subr.mxu0 0.0
    %2705 = vmatpush1.msra.mxu0 0.0
    %2706 = vmatprep.subr.mxu0 0.0
    %2707 = vmatpush1.msra.mxu0 0.0
    %2708 = vmatprep.subr.mxu0 0.0
    %2709 = vmatpush1.msra.mxu0 0.0
    %2710 = vmatprep.subr.mxu0 0.0
    %2711 = vmatpush1.msra.mxu0 0.0
    %2712 = vmatprep.subr.mxu0 0.0
    %2713 = vmatpush1.msra.mxu0 0.0
    %2714 = vmatprep.subr.mxu0 0.0
    %2715 = vmatpush1.msra.mxu0 0.0
    %2716 = vmatprep.subr.mxu0 0.0
    %2717 = vmatpush1.msra.mxu0 0.0
    %2718 = vmatprep.subr.mxu0 0.0
    %2719 = vmatpush1.msra.mxu0 0.0
    %2720 = vmatprep.subr.mxu0 0.0
    %2721 = vmatpush1.msra.mxu0 0.0
    %2722 = vmatprep.subr.mxu0 0.0
    %2723 = vmatpush1.msra.mxu0 0.0
    %2724 = vmatprep.subr.mxu0 0.0
    %2725 = vmatpush1.msra.mxu0 0.0
    %2726 = vmatprep.subr.mxu0 0.0
    %2727 = vmatpush1.msra.mxu0 0.0
    %2728 = vmatprep.subr.mxu0 0.0
    %2729 = vmatpush1.msra.mxu0 0.0
    %2730 = vmatprep.subr.mxu0 0.0
    %2731 = vmatpush1.msra.mxu0 0.0
    %2732 = vmatprep.subr.mxu0 0.0
    %2733 = vmatpush1.msra.mxu0 0.0
    %2734 = vmatprep.subr.mxu0 0.0
    %2735 = vmatpush1.msra.mxu0 0.0
    %2736 = vmatprep.subr.mxu0 0.0
    %2737 = vmatpush1.msra.mxu0 0.0
    %2738 = vmatprep.subr.mxu0 0.0
    %2739 = vmatpush1.msra.mxu0 0.0
    %2740 = vmatprep.mubr.f32.mxu0 0.0
    %2741 = vmatmul.mubr.f32.gmra.mrb[0].mxu0 %v2670
    %v2742 = vpop.f32.mrb[0].mxu0
    %v2743 = vadd.f32 0.0, %v2742
    %v2744 = vpop.f32.mrb[0].mxu0
    %2745 = vdwg.mxu0
    %v2746 = vadd.f32 %v2664, %v2743
    %2747 = vset.pattern.permute.xlu0 0
    %2748 = vperm.xlu0 %2747, %v144
    %v2749 = vpop.permute.xlu0 %2748
    %v2751 = vmul.f32 %v2639, %v2749
    %v2752 = vmul.f32 %v2640, %v2749
    %v2753 = vmul.f32 %v2641, %v2749
    %v2754 = vmul.f32 %v2642, %v2749
    %v2755 = vmul.f32 %v2643, %v2749
    %v2756 = vmul.f32 %v2644, %v2749
    %v2757 = vmul.f32 %v2645, %v2749
    %v2758 = vmul.f32 %v2646, %v2749
    %v2759 = vsel %vm155, %v2751, 0.0
    %v2760 = vrot.slane %v2759, 4
    %v2761 = vadd.f32 %v2759, %v2760
    %v2762 = vrot.slane %v2761, 2
    %v2763 = vadd.f32 %v2761, %v2762
    %v2764 = vrot.slane %v2763, 1
    %v2765 = vadd.f32 %v2763, %v2764
    %v2766 = vsel %vm155, %v2752, 0.0
    %v2767 = vrot.slane %v2766, 4
    %v2768 = vadd.f32 %v2766, %v2767
    %v2769 = vrot.slane %v2768, 2
    %v2770 = vadd.f32 %v2768, %v2769
    %v2771 = vrot.slane %v2770, 1
    %v2772 = vadd.f32 %v2770, %v2771
    %v2773 = vsel %vm155, %v2753, 0.0
    %v2774 = vrot.slane %v2773, 4
    %v2775 = vadd.f32 %v2773, %v2774
    %v2776 = vrot.slane %v2775, 2
    %v2777 = vadd.f32 %v2775, %v2776
    %v2778 = vrot.slane %v2777, 1
    %v2779 = vadd.f32 %v2777, %v2778
    %v2780 = vsel %vm155, %v2754, 0.0
    %v2781 = vrot.slane %v2780, 4
    %v2782 = vadd.f32 %v2780, %v2781
    %v2783 = vrot.slane %v2782, 2
    %v2784 = vadd.f32 %v2782, %v2783
    %v2785 = vrot.slane %v2784, 1
    %v2786 = vadd.f32 %v2784, %v2785
    %v2787 = vsel %vm155, %v2755, 0.0
    %v2788 = vrot.slane %v2787, 4
    %v2789 = vadd.f32 %v2787, %v2788
    %v2790 = vrot.slane %v2789, 2
    %v2791 = vadd.f32 %v2789, %v2790
    %v2792 = vrot.slane %v2791, 1
    %v2793 = vadd.f32 %v2791, %v2792
    %v2794 = vsel %vm155, %v2756, 0.0
    %v2795 = vrot.slane %v2794, 4
    %v2796 = vadd.f32 %v2794, %v2795
    %v2797 = vrot.slane %v2796, 2
    %v2798 = vadd.f32 %v2796, %v2797
    %v2799 = vrot.slane %v2798, 1
    %v2800 = vadd.f32 %v2798, %v2799
    %v2801 = vsel %vm155, %v2757, 0.0
    %v2802 = vrot.slane %v2801, 4
    %v2803 = vadd.f32 %v2801, %v2802
    %v2804 = vrot.slane %v2803, 2
    %v2805 = vadd.f32 %v2803, %v2804
    %v2806 = vrot.slane %v2805, 1
    %v2807 = vadd.f32 %v2805, %v2806
    %v2808 = vsel %vm155, %v2758, 0.0
    %v2809 = vrot.slane %v2808, 4
    %v2810 = vadd.f32 %v2808, %v2809
    %v2811 = vrot.slane %v2810, 2
    %v2812 = vadd.f32 %v2810, %v2811
    %v2813 = vrot.slane %v2812, 1
    %v2814 = vadd.f32 %v2812, %v2813
    %v2823 = vsel %vm1926, %v2772, %v2765
    %v2824 = vsel %vm1928, %v2779, %v2823
    %v2825 = vsel %vm1930, %v2786, %v2824
    %v2826 = vsel %vm1932, %v2793, %v2825
    %v2827 = vsel %vm1934, %v2800, %v2826
    %v2828 = vsel %vm1936, %v2807, %v2827
    %v2829 = vsel %vm1938, %v2814, %v2828
    %v2831 = vsel %vm2286, %v2829, 0.0
    %2832 = vadd.xlane.f32.xlu0 %v2831
    %v2833 = vpop.xlane.xlu0 %2832
    %2834 = vrot.lane.b32.xlu0 %v2829, 120
    %v2835 = vpop.permute.xlu0 %2834
    %v2837 = vsel %vm2286, %v2835, 0.0
    %2838 = vadd.xlane.f32.xlu0 %v2837
    %v2839 = vpop.xlane.xlu0 %2838
    %v2840 = vmul.f32 %v2649, %v144
    %v2841 = vsub.f32 %v2840, %v2833
    %v2842 = vmul.f32 %v2841, 0.125
    %v2843 = vmul.f32 %v2655, %v144
    %v2844 = vsub.f32 %v2843, %v2839
    %v2845 = vmul.f32 %v2844, 0.125
    %2847 = vset.pattern.permute.xlu0 0
    %2848 = vperm.xlu0 %2847, %v2842
    %v2849 = vpop.permute.xlu0 %2848
    %v2851 = vlaneseq
    %v2852 = vshrl.u32 %v2851, 7
    %v2853 = vsub.s32 0, %v2852
    %v2854 = vrot.slane %v2656, %v2853
    %v2855 = vmul.f32 %v2849, %v2854
    %v2856 = vadd.f32 %v2746, %v2855
    %2858 = vset.pattern.permute.xlu0 0
    %2859 = vperm.xlu0 %2858, %v2845
    %v2860 = vpop.permute.xlu0 %2859
    %v2862 = vlaneseq
    %v2863 = vshrl.u32 %v2862, 7
    %v2864 = vsub.s32 3, %v2863
    %v2865 = vrot.slane %v2656, %v2864
    %v2866 = vmul.f32 %v2860, %v2865
    %v2867 = vadd.f32 %v2856, %v2866
    %2868 = vset.pattern.permute.xlu0 1
    %2869 = vperm.xlu0 %2868, %v144
    %v2870 = vpop.permute.xlu0 %2869
    %v2872 = vmul.f32 %v2639, %v2870
    %v2873 = vmul.f32 %v2640, %v2870
    %v2874 = vmul.f32 %v2641, %v2870
    %v2875 = vmul.f32 %v2642, %v2870
    %v2876 = vmul.f32 %v2643, %v2870
    %v2877 = vmul.f32 %v2644, %v2870
    %v2878 = vmul.f32 %v2645, %v2870
    %v2879 = vmul.f32 %v2646, %v2870
    %v2880 = vsel %vm155, %v2872, 0.0
    %v2881 = vrot.slane %v2880, 4
    %v2882 = vadd.f32 %v2880, %v2881
    %v2883 = vrot.slane %v2882, 2
    %v2884 = vadd.f32 %v2882, %v2883
    %v2885 = vrot.slane %v2884, 1
    %v2886 = vadd.f32 %v2884, %v2885
    %v2887 = vsel %vm155, %v2873, 0.0
    %v2888 = vrot.slane %v2887, 4
    %v2889 = vadd.f32 %v2887, %v2888
    %v2890 = vrot.slane %v2889, 2
    %v2891 = vadd.f32 %v2889, %v2890
    %v2892 = vrot.slane %v2891, 1
    %v2893 = vadd.f32 %v2891, %v2892
    %v2894 = vsel %vm155, %v2874, 0.0
    %v2895 = vrot.slane %v2894, 4
    %v2896 = vadd.f32 %v2894, %v2895
    %v2897 = vrot.slane %v2896, 2
    %v2898 = vadd.f32 %v2896, %v2897
    %v2899 = vrot.slane %v2898, 1
    %v2900 = vadd.f32 %v2898, %v2899
    %v2901 = vsel %vm155, %v2875, 0.0
    %v2902 = vrot.slane %v2901, 4
    %v2903 = vadd.f32 %v2901, %v2902
    %v2904 = vrot.slane %v2903, 2
    %v2905 = vadd.f32 %v2903, %v2904
    %v2906 = vrot.slane %v2905, 1
    %v2907 = vadd.f32 %v2905, %v2906
    %v2908 = vsel %vm155, %v2876, 0.0
    %v2909 = vrot.slane %v2908, 4
    %v2910 = vadd.f32 %v2908, %v2909
    %v2911 = vrot.slane %v2910, 2
    %v2912 = vadd.f32 %v2910, %v2911
    %v2913 = vrot.slane %v2912, 1
    %v2914 = vadd.f32 %v2912, %v2913
    %v2915 = vsel %vm155, %v2877, 0.0
    %v2916 = vrot.slane %v2915, 4
    %v2917 = vadd.f32 %v2915, %v2916
    %v2918 = vrot.slane %v2917, 2
    %v2919 = vadd.f32 %v2917, %v2918
    %v2920 = vrot.slane %v2919, 1
    %v2921 = vadd.f32 %v2919, %v2920
    %v2922 = vsel %vm155, %v2878, 0.0
    %v2923 = vrot.slane %v2922, 4
    %v2924 = vadd.f32 %v2922, %v2923
    %v2925 = vrot.slane %v2924, 2
    %v2926 = vadd.f32 %v2924, %v2925
    %v2927 = vrot.slane %v2926, 1
    %v2928 = vadd.f32 %v2926, %v2927
    %v2929 = vsel %vm155, %v2879, 0.0
    %v2930 = vrot.slane %v2929, 4
    %v2931 = vadd.f32 %v2929, %v2930
    %v2932 = vrot.slane %v2931, 2
    %v2933 = vadd.f32 %v2931, %v2932
    %v2934 = vrot.slane %v2933, 1
    %v2935 = vadd.f32 %v2933, %v2934
    %v2944 = vsel %vm1926, %v2893, %v2886
    %v2945 = vsel %vm1928, %v2900, %v2944
    %v2946 = vsel %vm1930, %v2907, %v2945
    %v2947 = vsel %vm1932, %v2914, %v2946
    %v2948 = vsel %vm1934, %v2921, %v2947
    %v2949 = vsel %vm1936, %v2928, %v2948
    %v2950 = vsel %vm1938, %v2935, %v2949
    %v2952 = vsel %vm2286, %v2950, 0.0
    %2953 = vadd.xlane.f32.xlu0 %v2952
    %v2954 = vpop.xlane.xlu0 %2953
    %2955 = vrot.lane.b32.xlu0 %v2950, 120
    %v2956 = vpop.permute.xlu0 %2955
    %v2958 = vsel %vm2286, %v2956, 0.0
    %2959 = vadd.xlane.f32.xlu0 %v2958
    %v2960 = vpop.xlane.xlu0 %2959
    %v2961 = vsub.f32 %v2840, %v2954
    %v2962 = vmul.f32 %v2961, 0.125
    %v2963 = vsub.f32 %v2843, %v2960
    %v2964 = vmul.f32 %v2963, 0.125
    %2966 = vset.pattern.permute.xlu0 1
    %2967 = vperm.xlu0 %2966, %v2962
    %v2968 = vpop.permute.xlu0 %2967
    %v2970 = vlaneseq
    %v2971 = vshrl.u32 %v2970, 7
    %v2972 = vsub.s32 1, %v2971
    %v2973 = vrot.slane %v2656, %v2972
    %v2974 = vmul.f32 %v2968, %v2973
    %v2975 = vadd.f32 %v2867, %v2974
    %2977 = vset.pattern.permute.xlu0 1
    %2978 = vperm.xlu0 %2977, %v2964
    %v2979 = vpop.permute.xlu0 %2978
    %v2981 = vlaneseq
    %v2982 = vshrl.u32 %v2981, 7
    %v2983 = vsub.s32 4, %v2982
    %v2984 = vrot.slane %v2656, %v2983
    %v2985 = vmul.f32 %v2979, %v2984
    %v2986 = vadd.f32 %v2975, %v2985
    %2987 = vset.pattern.permute.xlu0 2
    %2988 = vperm.xlu0 %2987, %v144
    %v2989 = vpop.permute.xlu0 %2988
    %v2991 = vmul.f32 %v2639, %v2989
    %v2992 = vmul.f32 %v2640, %v2989
    %v2993 = vmul.f32 %v2641, %v2989
    %v2994 = vmul.f32 %v2642, %v2989
    %v2995 = vmul.f32 %v2643, %v2989
    %v2996 = vmul.f32 %v2644, %v2989
    %v2997 = vmul.f32 %v2645, %v2989
    %v2998 = vmul.f32 %v2646, %v2989
    %v2999 = vsel %vm155, %v2991, 0.0
    %v3000 = vrot.slane %v2999, 4
    %v3001 = vadd.f32 %v2999, %v3000
    %v3002 = vrot.slane %v3001, 2
    %v3003 = vadd.f32 %v3001, %v3002
    %v3004 = vrot.slane %v3003, 1
    %v3005 = vadd.f32 %v3003, %v3004
    %v3006 = vsel %vm155, %v2992, 0.0
    %v3007 = vrot.slane %v3006, 4
    %v3008 = vadd.f32 %v3006, %v3007
    %v3009 = vrot.slane %v3008, 2
    %v3010 = vadd.f32 %v3008, %v3009
    %v3011 = vrot.slane %v3010, 1
    %v3012 = vadd.f32 %v3010, %v3011
    %v3013 = vsel %vm155, %v2993, 0.0
    %v3014 = vrot.slane %v3013, 4
    %v3015 = vadd.f32 %v3013, %v3014
    %v3016 = vrot.slane %v3015, 2
    %v3017 = vadd.f32 %v3015, %v3016
    %v3018 = vrot.slane %v3017, 1
    %v3019 = vadd.f32 %v3017, %v3018
    %v3020 = vsel %vm155, %v2994, 0.0
    %v3021 = vrot.slane %v3020, 4
    %v3022 = vadd.f32 %v3020, %v3021
    %v3023 = vrot.slane %v3022, 2
    %v3024 = vadd.f32 %v3022, %v3023
    %v3025 = vrot.slane %v3024, 1
    %v3026 = vadd.f32 %v3024, %v3025
    %v3027 = vsel %vm155, %v2995, 0.0
    %v3028 = vrot.slane %v3027, 4
    %v3029 = vadd.f32 %v3027, %v3028
    %v3030 = vrot.slane %v3029, 2
    %v3031 = vadd.f32 %v3029, %v3030
    %v3032 = vrot.slane %v3031, 1
    %v3033 = vadd.f32 %v3031, %v3032
    %v3034 = vsel %vm155, %v2996, 0.0
    %v3035 = vrot.slane %v3034, 4
    %v3036 = vadd.f32 %v3034, %v3035
    %v3037 = vrot.slane %v3036, 2
    %v3038 = vadd.f32 %v3036, %v3037
    %v3039 = vrot.slane %v3038, 1
    %v3040 = vadd.f32 %v3038, %v3039
    %v3041 = vsel %vm155, %v2997, 0.0
    %v3042 = vrot.slane %v3041, 4
    %v3043 = vadd.f32 %v3041, %v3042
    %v3044 = vrot.slane %v3043, 2
    %v3045 = vadd.f32 %v3043, %v3044
    %v3046 = vrot.slane %v3045, 1
    %v3047 = vadd.f32 %v3045, %v3046
    %v3048 = vsel %vm155, %v2998, 0.0
    %v3049 = vrot.slane %v3048, 4
    %v3050 = vadd.f32 %v3048, %v3049
    %v3051 = vrot.slane %v3050, 2
    %v3052 = vadd.f32 %v3050, %v3051
    %v3053 = vrot.slane %v3052, 1
    %v3054 = vadd.f32 %v3052, %v3053
    %v3063 = vsel %vm1926, %v3012, %v3005
    %v3064 = vsel %vm1928, %v3019, %v3063
    %v3065 = vsel %vm1930, %v3026, %v3064
    %v3066 = vsel %vm1932, %v3033, %v3065
    %v3067 = vsel %vm1934, %v3040, %v3066
    %v3068 = vsel %vm1936, %v3047, %v3067
    %v3069 = vsel %vm1938, %v3054, %v3068
    %v3071 = vsel %vm2286, %v3069, 0.0
    %3072 = vadd.xlane.f32.xlu0 %v3071
    %v3073 = vpop.xlane.xlu0 %3072
    %3074 = vrot.lane.b32.xlu0 %v3069, 120
    %v3075 = vpop.permute.xlu0 %3074
    %v3077 = vsel %vm2286, %v3075, 0.0
    %3078 = vadd.xlane.f32.xlu0 %v3077
    %v3079 = vpop.xlane.xlu0 %3078
    %v3080 = vsub.f32 %v2840, %v3073
    %v3081 = vmul.f32 %v3080, 0.125
    %v3082 = vsub.f32 %v2843, %v3079
    %v3083 = vmul.f32 %v3082, 0.125
    %3085 = vset.pattern.permute.xlu0 2
    %3086 = vperm.xlu0 %3085, %v3081
    %v3087 = vpop.permute.xlu0 %3086
    %v3089 = vlaneseq
    %v3090 = vshrl.u32 %v3089, 7
    %v3091 = vsub.s32 2, %v3090
    %v3092 = vrot.slane %v2656, %v3091
    %v3093 = vmul.f32 %v3087, %v3092
    %v3094 = vadd.f32 %v2986, %v3093
    %3096 = vset.pattern.permute.xlu0 2
    %3097 = vperm.xlu0 %3096, %v3083
    %v3098 = vpop.permute.xlu0 %3097
    %v3100 = vlaneseq
    %v3101 = vshrl.u32 %v3100, 7
    %v3102 = vsub.s32 5, %v3101
    %v3103 = vrot.slane %v2656, %v3102
    %v3104 = vmul.f32 %v3098, %v3103
    %v3105 = vadd.f32 %v3094, %v3104
    %3106 = vst.msk [vmem:[%s69] sm:$0xff] %vm479, %v3105
    // Predicated region
    $region134: #{esa3d_forward.1} parent=1 // pred_check
      _
    $region135: #{esa3d_forward.1} parent=1 // pred_check_branch
      %3108 = sbr.rel (0) target = $region137
    $region136: #{esa3d_forward.1} parent=1 // pred_region
      %s3110 = ssub.s32 128, 128
      %3111 = vsyncadd [#allocation3], %s3110
      %s3113 = sshll.u32 [#allocation2], 4
      %s3114 = int_to_ptr.vmem [resolvable:$true] %s3113
      %3116 = dma.vmem_to_hbm [thread:$0]  %s3114, 128, %s67, [#allocation3]
    $region137: #{esa3d_forward.1} parent=1 // pred_fallthru
      _
    // Predicated region
    $region138: #{esa3d_forward.1} parent=1 // pred_check
      _
    $region139: #{esa3d_forward.1} parent=1 // pred_check_branch
      %3118 = sbr.rel (0) target = $region141
    $region140: #{esa3d_forward.1} parent=1 // pred_region
      _
    $region141: #{esa3d_forward.1} parent=1 // pred_fallthru
      _
    // Predicated region
    $region142: #{esa3d_forward.1} parent=1 // pred_check
      _
    $region143: #{esa3d_forward.1} parent=1 // pred_check_branch
      %3120 = sbr.rel (0) target = $region145
    $region144: #{esa3d_forward.1} parent=1 // pred_region
      %3121 = dma.done [#allocation3], 128
    $region145: #{esa3d_forward.1} parent=1 // pred_fallthru
      _
    // Predicated region
    $region146: #{esa3d_forward.1} parent=1 // pred_check
      _
    $region147: #{esa3d_forward.1} parent=1 // pred_check_branch
      %3123 = sbr.rel (0) target = $region149
    $region148: #{esa3d_forward.1} parent=1 // pred_region
      _
    $region149: #{esa3d_forward.1} parent=1 // pred_fallthru
      _
    %3124 = vsyncpa [#allocation3], 1

</llo_original>
